<compile_context>
chip_gen: v6e
topology: v6e:2x2x1
jax: 0.10.0
libtpu: 0.0.40
codegen_flags: <defaults>
</compile_context>

<pallas_src>
import functools

import jax
import jax.numpy as jnp
from jax.experimental import pallas as pl
from jax.experimental.pallas import tpu as pltpu


# --------------------------------- kernel ---------------------------------

def cnn_kernel(xc_ref, w1_ref, sh1_ref, sh2_ref, shg_ref, f1b_ref, f2b_ref,
               w2_hbm, wg_hbm, f1_hbm, f2_hbm,
               out_ref,
               w2_v, wg_v, f1_v, f2_v, dma_sems, *, bp, win):
    f32, bf16 = jnp.float32, jnp.bfloat16

    # Kick off the big-weight HBM->VMEM DMAs immediately; each one is awaited only right
    # before the GEMM that consumes it, so the transfers hide behind earlier compute.
    cp_w2 = pltpu.make_async_copy(w2_hbm, w2_v, dma_sems.at[0]); cp_w2.start()
    cp_wg = pltpu.make_async_copy(wg_hbm, wg_v, dma_sems.at[1]); cp_wg.start()
    cp_f1 = pltpu.make_async_copy(f1_hbm, f1_v, dma_sems.at[2]); cp_f1.start()
    cp_f2 = pltpu.make_async_copy(f2_hbm, f2_v, dma_sems.at[3]); cp_f2.start()

    def dot(a, b):  # bf16 MXU inputs, f32 accumulation
        return jnp.dot(a.astype(bf16), b, preferred_element_type=f32)

    def shift_prev(a):  # value at timestep t <- value at t-1 (zero block at t=0)
        return jnp.concatenate(
            [jnp.zeros((bp, a.shape[1]), a.dtype), a[:a.shape[0] - bp, :]], axis=0)

    def shift_next(a):  # value at timestep t <- value at t+1 (zero block at t=T-1)
        return jnp.concatenate(
            [a[bp:, :], jnp.zeros((bp, a.shape[1]), a.dtype)], axis=0)

    def pool2(a, n_t):  # MaxPool1d(2,2) over timesteps WITH row compaction
        c = a.shape[1]
        a3 = a.reshape(n_t // 2, 2 * bp, c)
        return jnp.maximum(a3[:, :bp, :], a3[:, bp:, :]).reshape((n_t // 2) * bp, c)

    # ---- per-element conv1 (1 -> C1, k=3, pad=1) + folded BN + ReLU: one K=3E GEMM
    # (3-tap im2col of the raw input prepared on the host, block-diag weights) ----
    h = jnp.maximum(dot(xc_ref[...], w1_ref[...]) + sh1_ref[...], 0.0)   # (W*bp, E*C1)
    h = pool2(h, win)                                                    # (W/2*bp, E*C1)

    # ---- per-element conv2 (C1 -> C2, k=3, pad=1): taps + element branches fused ----
    x2 = jnp.concatenate([shift_prev(h), h, shift_next(h)], axis=1)      # (W/2*bp, 3*E*C1)
    cp_w2.wait()
    h = jnp.maximum(dot(x2, w2_v[...]) + sh2_ref[...], 0.0)              # (W/2*bp, E*C2)
    h = pool2(h, win // 2)                                               # (W/4*bp, E*C2)

    # ---- global conv (E*C2 -> GC, k=3, pad=1): 3 taps fused into one GEMM ----
    x3 = jnp.concatenate([shift_prev(h), h, shift_next(h)], axis=1)      # (W/4*bp, 3*E*C2)
    cp_wg.wait()
    g = jnp.maximum(dot(x3, wg_v[...]) + shg_ref[...], 0.0)              # (W/4*bp, GC)
    g = pool2(g, win // 4)                                               # (W/8*bp, GC)

    # ---- FC head: lane-concat the L4 timestep blocks -> one (bp, L4*GC) slab, 2 GEMMs ----
    l4 = win // 8
    hid_in = jnp.concatenate([g[t * bp:(t + 1) * bp, :] for t in range(l4)], axis=1)
    cp_f1.wait()
    hid = jnp.maximum(dot(hid_in, f1_v[...]) + f1b_ref[...], 0.0)        # (bp, FH)
    # Dropout: identity at inference.
    cp_f2.wait()
    out_ref[...] = dot(hid, f2_v[...]) + f2b_ref[...]                    # (bp, NCP) dense store


# ------------------------------ wrapper ------------------------------

def cnn_forward_pallas(x, kparams, num_classes):
    B, W, E = x.shape
    assert W % 8 == 0, "window size must be divisible by 8 (three MaxPool(2,2) stages)"
    bp = 8 * ((B + 7) // 8)                  # pad batch rows to the sublane tile
    w1, sh1, sh2, shg, f1b, f2b, w2, wg, f1, f2 = kparams
    ncp = f2.shape[1]

    # Host-side input prep: batch-pad, timestep-major slab (row = t*bp + b), and the
    # 3-tap im2col for conv1 so the kernel does a single K=3E GEMM.
    xt = jnp.zeros((W, bp, E), jnp.float32).at[:, :B, :].set(
        jnp.transpose(x, (1, 0, 2)).astype(jnp.float32))
    z = jnp.zeros((1, bp, E), jnp.float32)
    xc = jnp.concatenate(
        [jnp.concatenate([z, xt[:-1]], axis=0),   # x[t-1]  (tap k=0)
         xt,                                      # x[t]    (tap k=1)
         jnp.concatenate([xt[1:], z], axis=0)],   # x[t+1]  (tap k=2)
        axis=2).reshape(W * bp, 3 * E)

    flops = 2 * bp * (W * w1.shape[0] * w1.shape[1]
                      + (W // 2) * w2.shape[0] * w2.shape[1]
                      + (W // 4) * wg.shape[0] * wg.shape[1]
                      + f1.shape[0] * f1.shape[1]
                      + f2.shape[0] * f2.shape[1])
    bytes_accessed = int(xc.size * 4 + bp * ncp * 4
                         + sum(int(a.size) * a.dtype.itemsize for a in kparams))

    vmem = pl.BlockSpec(memory_space=pltpu.MemorySpace.VMEM)
    hbm = pl.BlockSpec(memory_space=pl.ANY)

    out = pl.pallas_call(
        functools.partial(cnn_kernel, bp=bp, win=W),
        out_shape=jax.ShapeDtypeStruct((bp, ncp), jnp.float32),
        in_specs=[vmem] * 7 + [hbm] * 4,
        out_specs=vmem,
        scratch_shapes=[
            pltpu.VMEM(w2.shape, w2.dtype),      # W2  (3*E*C1, E*C2) bf16
            pltpu.VMEM(wg.shape, wg.dtype),      # WG  (3*E*C2, GC)   bf16
            pltpu.VMEM(f1.shape, f1.dtype),      # F1  (L4*GC, FH)    bf16
            pltpu.VMEM(f2.shape, f2.dtype),      # F2  (FH, NCP)      bf16
            pltpu.SemaphoreType.DMA((4,)),
        ],
        compiler_params=pltpu.CompilerParams(vmem_limit_bytes=16 * 1024 * 1024),
        cost_estimate=pl.CostEstimate(flops=int(flops), transcendentals=0,
                                      bytes_accessed=bytes_accessed),
    )(xc, w1, sh1, sh2, shg, f1b, f2b, w2, wg, f1, f2)
    return out[:B, :num_classes]


# -------------------- host-side weight preparation (BN folded, bf16) --------------------

def build_kernel_params(p, eps=1e-5):
    E, C1 = p["c1b"].shape
    C2 = p["c2b"].shape[1]
    GC = p["cgb"].shape[0]
    FH = p["f1b"].shape[0]
    NC = p["f2b"].shape[0]
    L4 = p["f1w"].shape[1] // GC
    NCP = 128  # lane-padded classes
    bf16 = jnp.bfloat16

    s1 = p["g1"] / jnp.sqrt(p["v1"] + eps)                        # (E, C1)
    s2 = p["g2"] / jnp.sqrt(p["v2"] + eps)                        # (E, C2)
    sg = p["gg"] / jnp.sqrt(p["vg"] + eps)                        # (GC,)

    sh1 = (p["be1"] + (p["c1b"] - p["m1"]) * s1).reshape(1, E * C1).astype(jnp.float32)
    sh2 = (p["be2"] + (p["c2b"] - p["m2"]) * s2).reshape(1, E * C2).astype(jnp.float32)
    shg = (p["beg"] + (p["cgb"] - p["mg"]) * sg).reshape(1, GC).astype(jnp.float32)

    # conv1: taps fused along K (row = k*E + e), block-diagonal over elements.  (3E, E*C1)
    W1 = jnp.zeros((3, E, E * C1), jnp.float32)
    for e in range(E):
        blk = (p["c1w"][e, :, 0, :] * s1[e][:, None]).T           # (3, C1)
        W1 = W1.at[:, e, e * C1:(e + 1) * C1].set(blk)
    W1 = W1.reshape(3 * E, E * C1)

    # conv2: taps fused along K, block-diagonal over elements.  (3*E*C1, E*C2)
    W2 = jnp.zeros((3 * E * C1, E * C2), jnp.float32)
    for k in range(3):
        for e in range(E):
            blk = p["c2w"][e, :, :, k].T * s2[e][None, :]         # (C1, C2)
            W2 = W2.at[k * E * C1 + e * C1: k * E * C1 + (e + 1) * C1,
                       e * C2:(e + 1) * C2].set(blk)

    # global conv: taps fused along K.  (3*E*C2, GC)
    W3 = jnp.transpose(p["cgw"], (2, 1, 0)).reshape(3 * E * C2, GC) * sg[None, :]

    # fc1: kernel's FC input columns are (tau*GC + gc) -> F1 row tau*GC+gc = f1w[:, gc*L4+tau]
    F1 = jnp.transpose(p["f1w"].reshape(FH, GC, L4), (2, 1, 0)).reshape(L4 * GC, FH)
    f1b = p["f1b"].reshape(1, FH).astype(jnp.float32)

    # fc2: lane-pad classes to 128 so the final store is one dense (8,128) slab.
    F2 = jnp.zeros((FH, NCP), jnp.float32).at[:, :NC].set(p["f2w"].T)
    f2b = jnp.zeros((1, NCP), jnp.float32).at[0, :NC].set(p["f2b"])

    # Weight matrices in bf16 (halved HBM traffic + native MXU path); shifts/biases f32.
    return [W1.astype(bf16), sh1, sh2, shg, f1b, f2b,
            W2.astype(bf16), W3.astype(bf16), F1.astype(bf16), F2.astype(bf16)]


# ----------------------- pure-JAX reference (eval mode, f32) -----------------------

def _conv1d(x, w, b):
    y = jax.lax.conv_general_dilated(
        x, w, window_strides=(1,), padding=((1, 1),),
        dimension_numbers=("NCH", "OIH", "NCH"),
        precision=jax.lax.Precision.HIGHEST)
    return y + b[None, :, None]


def _bn(x, gamma, beta, mean, var, eps):
    scale = gamma / jnp.sqrt(var + eps)
    return (x - mean[None, :, None]) * scale[None, :, None] + beta[None, :, None]


def _maxpool2(x):
    B, C, L = x.shape
    return jnp.max(x.reshape(B, C, L // 2, 2), axis=-1)


def reference_forward(x, p, eps=1e-5):
    xp = jnp.transpose(x, (0, 2, 1))                       # (B, E, W) as in torch permute
    B, E = xp.shape[0], xp.shape[1]
    feats = []
    for e in range(E):
        h = _conv1d(xp[:, e:e + 1, :], p["c1w"][e], p["c1b"][e])
        h = jnp.maximum(_bn(h, p["g1"][e], p["be1"][e], p["m1"][e], p["v1"][e], eps), 0.0)
        h = _maxpool2(h)
        h = _conv1d(h, p["c2w"][e], p["c2b"][e])
        h = jnp.maximum(_bn(h, p["g2"][e], p["be2"][e], p["m2"][e], p["v2"][e], eps), 0.0)
        h = _maxpool2(h)
        feats.append(h)
    f = jnp.concatenate(feats, axis=1)
    g = _conv1d(f, p["cgw"], p["cgb"])
    g = jnp.maximum(_bn(g, p["gg"], p["beg"], p["mg"], p["vg"], eps), 0.0)
    g = _maxpool2(g)
    flat = g.reshape(B, -1)
    hid = jnp.maximum(
        jnp.dot(flat, p["f1w"].T, precision=jax.lax.Precision.HIGHEST) + p["f1b"], 0.0)
    return jnp.dot(hid, p["f2w"].T, precision=jax.lax.Precision.HIGHEST) + p["f2b"]


# --------------------------------- main ---------------------------------

if __name__ == "__main__":
    # Small shapes consistent with the module: batch=2, window=32, elements=4, classes=8.
    B, W, E, NC = 2, 32, 4, 8
    C1, C2, GC, FH = 64, 128, 32, 512
    L4 = W // 8
    eps = 1e-5

    key = jax.random.PRNGKey(0)
    ks = jax.random.split(key, 24)
    nrm = lambda k, s, sc: (sc * jax.random.normal(k, s)).astype(jnp.float32)

    # PyTorch-native parameter shapes (per-element branches stacked along dim 0).
    p = {
        "c1w": nrm(ks[0], (E, C1, 1, 3), 3 ** -0.5),
        "c1b": nrm(ks[1], (E, C1), 0.1),
        "g1": 1.0 + nrm(ks[2], (E, C1), 0.1),
        "be1": nrm(ks[3], (E, C1), 0.1),
        "m1": nrm(ks[4], (E, C1), 0.1),
        "v1": 1.0 + 0.5 * jax.random.uniform(ks[5], (E, C1), jnp.float32),
        "c2w": nrm(ks[6], (E, C2, C1, 3), (C1 * 3) ** -0.5),
        "c2b": nrm(ks[7], (E, C2), 0.1),
        "g2": 1.0 + nrm(ks[8], (E, C2), 0.1),
        "be2": nrm(ks[9], (E, C2), 0.1),
        "m2": nrm(ks[10], (E, C2), 0.1),
        "v2": 1.0 + 0.5 * jax.random.uniform(ks[11], (E, C2), jnp.float32),
        "cgw": nrm(ks[12], (GC, E * C2, 3), (E * C2 * 3) ** -0.5),
        "cgb": nrm(ks[13], (GC,), 0.1),
        "gg": 1.0 + nrm(ks[14], (GC,), 0.1),
        "beg": nrm(ks[15], (GC,), 0.1),
        "mg": nrm(ks[16], (GC,), 0.1),
        "vg": 1.0 + 0.5 * jax.random.uniform(ks[17], (GC,), jnp.float32),
        "f1w": nrm(ks[18], (FH, GC * L4), (GC * L4) ** -0.5),
        "f1b": nrm(ks[19], (FH,), 0.1),
        "f2w": nrm(ks[20], (NC, FH), FH ** -0.5),
        "f2b": nrm(ks[21], (NC,), 0.1),
    }
    x = jax.random.normal(ks[22], (B, W, E), jnp.float32)   # (batch, window, elements)

    kparams = build_kernel_params(p, eps=eps)

    out = jax.block_until_ready(cnn_forward_pallas(x, kparams, NC))
    ref = jax.block_until_ready(reference_forward(x, p, eps))

    assert out.shape == (B, NC)
    err = float(jnp.max(jnp.abs(out - ref)))
    scale = max(1.0, float(jnp.max(jnp.abs(ref))))
    # bf16 weights/activations vs. f32 HIGHEST-precision reference: gate at 5% of logit scale.
    if err < 5e-2 * scale:
        print("KERNEL_OK")
    else:
        print(f"MISMATCH max_abs_err={err} (logit_scale={scale})")
</pallas_src>

<mosaic_0001>
module attributes {stable_mosaic.version = 11 : i64} {
  func.func @cnn_kernel(%arg0: memref<256x12xf32, #tpu.memory_space<vmem>>, %arg1: memref<12x256xbf16, #tpu.memory_space<vmem>>, %arg2: memref<1x256xf32, #tpu.memory_space<vmem>>, %arg3: memref<1x512xf32, #tpu.memory_space<vmem>>, %arg4: memref<1x32xf32, #tpu.memory_space<vmem>>, %arg5: memref<1x512xf32, #tpu.memory_space<vmem>>, %arg6: memref<1x128xf32, #tpu.memory_space<vmem>>, %arg7: memref<768x512xbf16, #tpu.memory_space<any>>, %arg8: memref<1536x32xbf16, #tpu.memory_space<any>>, %arg9: memref<128x512xbf16, #tpu.memory_space<any>>, %arg10: memref<512x128xbf16, #tpu.memory_space<any>>, %arg11: memref<8x128xf32, #tpu.memory_space<vmem>>, %arg12: memref<768x512xbf16, #tpu.memory_space<vmem>>, %arg13: memref<1536x32xbf16, #tpu.memory_space<vmem>>, %arg14: memref<128x512xbf16, #tpu.memory_space<vmem>>, %arg15: memref<512x128xbf16, #tpu.memory_space<vmem>>, %arg16: memref<4x!tpu.dma_semaphore, #tpu.memory_space<semaphore_mem>>) attributes {dimension_semantics = [], scalar_prefetch = 0 : i64, scratch_operands = 5 : i64, tpu.core_type = #tpu.core_type<tc>} {
    %c0_i32 = arith.constant 0 : i32
    %0 = tpu.memref_slice %arg16[%c0_i32] : memref<4x!tpu.dma_semaphore, #tpu.memory_space<semaphore_mem>> -> memref<1x!tpu.dma_semaphore, #tpu.memory_space<semaphore_mem>>
    %1 = tpu.memref_squeeze %0 : memref<1x!tpu.dma_semaphore, #tpu.memory_space<semaphore_mem>> -> memref<!tpu.dma_semaphore, #tpu.memory_space<semaphore_mem>>
    tpu.enqueue_dma source(%arg7 : memref<768x512xbf16, #tpu.memory_space<any>>) target(%arg12 : memref<768x512xbf16, #tpu.memory_space<vmem>>) target_semaphore(%1 : memref<!tpu.dma_semaphore, #tpu.memory_space<semaphore_mem>>)
    %c1_i32 = arith.constant 1 : i32
    %2 = tpu.memref_slice %arg16[%c1_i32] : memref<4x!tpu.dma_semaphore, #tpu.memory_space<semaphore_mem>> -> memref<1x!tpu.dma_semaphore, #tpu.memory_space<semaphore_mem>>
    %3 = tpu.memref_squeeze %2 : memref<1x!tpu.dma_semaphore, #tpu.memory_space<semaphore_mem>> -> memref<!tpu.dma_semaphore, #tpu.memory_space<semaphore_mem>>
    tpu.enqueue_dma source(%arg8 : memref<1536x32xbf16, #tpu.memory_space<any>>) target(%arg13 : memref<1536x32xbf16, #tpu.memory_space<vmem>>) target_semaphore(%3 : memref<!tpu.dma_semaphore, #tpu.memory_space<semaphore_mem>>)
    %c2_i32 = arith.constant 2 : i32
    %4 = tpu.memref_slice %arg16[%c2_i32] : memref<4x!tpu.dma_semaphore, #tpu.memory_space<semaphore_mem>> -> memref<1x!tpu.dma_semaphore, #tpu.memory_space<semaphore_mem>>
    %5 = tpu.memref_squeeze %4 : memref<1x!tpu.dma_semaphore, #tpu.memory_space<semaphore_mem>> -> memref<!tpu.dma_semaphore, #tpu.memory_space<semaphore_mem>>
    tpu.enqueue_dma source(%arg9 : memref<128x512xbf16, #tpu.memory_space<any>>) target(%arg14 : memref<128x512xbf16, #tpu.memory_space<vmem>>) target_semaphore(%5 : memref<!tpu.dma_semaphore, #tpu.memory_space<semaphore_mem>>)
    %c3_i32 = arith.constant 3 : i32
    %6 = tpu.memref_slice %arg16[%c3_i32] : memref<4x!tpu.dma_semaphore, #tpu.memory_space<semaphore_mem>> -> memref<1x!tpu.dma_semaphore, #tpu.memory_space<semaphore_mem>>
    %7 = tpu.memref_squeeze %6 : memref<1x!tpu.dma_semaphore, #tpu.memory_space<semaphore_mem>> -> memref<!tpu.dma_semaphore, #tpu.memory_space<semaphore_mem>>
    tpu.enqueue_dma source(%arg10 : memref<512x128xbf16, #tpu.memory_space<any>>) target(%arg15 : memref<512x128xbf16, #tpu.memory_space<vmem>>) target_semaphore(%7 : memref<!tpu.dma_semaphore, #tpu.memory_space<semaphore_mem>>)
    %c0 = arith.constant 0 : index
    %c0_0 = arith.constant 0 : index
    %8 = vector.load %arg0[%c0, %c0_0] : memref<256x12xf32, #tpu.memory_space<vmem>>, vector<256x12xf32>
    %c0_1 = arith.constant 0 : index
    %c0_2 = arith.constant 0 : index
    %9 = vector.load %arg1[%c0_1, %c0_2] : memref<12x256xbf16, #tpu.memory_space<vmem>>, vector<12x256xbf16>
    %10 = arith.truncf %8 : vector<256x12xf32> to vector<256x12xbf16>
    %cst = arith.constant dense<0.000000e+00> : vector<256x256xf32>
    %11 = tpu.matmul %10, %9, %cst {dimension_numbers = #tpu.dot_dimension_numbers<[1], [0], [0], [1], [0, 0, 1, 1], [], []>} : vector<256x12xbf16>, vector<12x256xbf16>, vector<256x256xf32> -> vector<256x256xf32>
    %c0_3 = arith.constant 0 : index
    %c0_4 = arith.constant 0 : index
    %12 = vector.load %arg2[%c0_3, %c0_4] : memref<1x256xf32, #tpu.memory_space<vmem>>, vector<1x256xf32>
    %13 = vector.broadcast %12 : vector<1x256xf32> to vector<256x256xf32>
    %14 = arith.addf %11, %13 : vector<256x256xf32>
    %cst_5 = arith.constant 0.000000e+00 : f32
    %15 = vector.broadcast %cst_5 : f32 to vector<256x256xf32>
    %16 = arith.maximumf %14, %15 : vector<256x256xf32>
    %17 = vector.shape_cast %16 : vector<256x256xf32> to vector<16x16x256xf32>
    %18 = vector.extract_strided_slice %17 {offsets = [0, 0, 0], sizes = [16, 8, 256], strides = [1, 1, 1]} : vector<16x16x256xf32> to vector<16x8x256xf32>
    %19 = vector.extract_strided_slice %17 {offsets = [0, 8, 0], sizes = [16, 8, 256], strides = [1, 1, 1]} : vector<16x16x256xf32> to vector<16x8x256xf32>
    %20 = arith.maximumf %18, %19 : vector<16x8x256xf32>
    %21 = vector.shape_cast %20 : vector<16x8x256xf32> to vector<128x256xf32>
    %cst_6 = arith.constant 0.000000e+00 : f32
    %22 = vector.broadcast %cst_6 : f32 to vector<8x256xf32>
    %23 = vector.extract_strided_slice %21 {offsets = [0, 0], sizes = [120, 256], strides = [1, 1]} : vector<128x256xf32> to vector<120x256xf32>
    %24 = tpu.concatenate %22, %23 in 0 : vector<8x256xf32>, vector<120x256xf32> -> vector<128x256xf32>
    %25 = vector.extract_strided_slice %21 {offsets = [8, 0], sizes = [120, 256], strides = [1, 1]} : vector<128x256xf32> to vector<120x256xf32>
    %cst_7 = arith.constant 0.000000e+00 : f32
    %26 = vector.broadcast %cst_7 : f32 to vector<8x256xf32>
    %27 = tpu.concatenate %25, %26 in 0 : vector<120x256xf32>, vector<8x256xf32> -> vector<128x256xf32>
    %28 = tpu.concatenate %24, %21, %27 in 1 : vector<128x256xf32>, vector<128x256xf32>, vector<128x256xf32> -> vector<128x768xf32>
    %c0_i32_8 = arith.constant 0 : i32
    %29 = tpu.memref_slice %arg16[%c0_i32_8] : memref<4x!tpu.dma_semaphore, #tpu.memory_space<semaphore_mem>> -> memref<1x!tpu.dma_semaphore, #tpu.memory_space<semaphore_mem>>
    %30 = tpu.memref_squeeze %29 : memref<1x!tpu.dma_semaphore, #tpu.memory_space<semaphore_mem>> -> memref<!tpu.dma_semaphore, #tpu.memory_space<semaphore_mem>>
    tpu.wait_dma2 semaphore(%30 : memref<!tpu.dma_semaphore, #tpu.memory_space<semaphore_mem>>) src(%arg7 : memref<768x512xbf16, #tpu.memory_space<any>>) dst(%arg12 : memref<768x512xbf16, #tpu.memory_space<vmem>>)
    %c0_9 = arith.constant 0 : index
    %c0_10 = arith.constant 0 : index
    %31 = vector.load %arg12[%c0_9, %c0_10] : memref<768x512xbf16, #tpu.memory_space<vmem>>, vector<768x512xbf16>
    %32 = arith.truncf %28 : vector<128x768xf32> to vector<128x768xbf16>
    %cst_11 = arith.constant dense<0.000000e+00> : vector<128x512xf32>
    %33 = tpu.matmul %32, %31, %cst_11 {dimension_numbers = #tpu.dot_dimension_numbers<[1], [0], [0], [1], [0, 0, 1, 1], [], []>} : vector<128x768xbf16>, vector<768x512xbf16>, vector<128x512xf32> -> vector<128x512xf32>
    %c0_12 = arith.constant 0 : index
    %c0_13 = arith.constant 0 : index
    %34 = vector.load %arg3[%c0_12, %c0_13] : memref<1x512xf32, #tpu.memory_space<vmem>>, vector<1x512xf32>
    %35 = vector.broadcast %34 : vector<1x512xf32> to vector<128x512xf32>
    %36 = arith.addf %33, %35 : vector<128x512xf32>
    %cst_14 = arith.constant 0.000000e+00 : f32
    %37 = vector.broadcast %cst_14 : f32 to vector<128x512xf32>
    %38 = arith.maximumf %36, %37 : vector<128x512xf32>
    %39 = vector.shape_cast %38 : vector<128x512xf32> to vector<8x16x512xf32>
    %40 = vector.extract_strided_slice %39 {offsets = [0, 0, 0], sizes = [8, 8, 512], strides = [1, 1, 1]} : vector<8x16x512xf32> to vector<8x8x512xf32>
    %41 = vector.extract_strided_slice %39 {offsets = [0, 8, 0], sizes = [8, 8, 512], strides = [1, 1, 1]} : vector<8x16x512xf32> to vector<8x8x512xf32>
    %42 = arith.maximumf %40, %41 : vector<8x8x512xf32>
    %43 = vector.shape_cast %42 : vector<8x8x512xf32> to vector<64x512xf32>
    %cst_15 = arith.constant 0.000000e+00 : f32
    %44 = vector.broadcast %cst_15 : f32 to vector<8x512xf32>
    %45 = vector.extract_strided_slice %43 {offsets = [0, 0], sizes = [56, 512], strides = [1, 1]} : vector<64x512xf32> to vector<56x512xf32>
    %46 = tpu.concatenate %44, %45 in 0 : vector<8x512xf32>, vector<56x512xf32> -> vector<64x512xf32>
    %47 = vector.extract_strided_slice %43 {offsets = [8, 0], sizes = [56, 512], strides = [1, 1]} : vector<64x512xf32> to vector<56x512xf32>
    %cst_16 = arith.constant 0.000000e+00 : f32
    %48 = vector.broadcast %cst_16 : f32 to vector<8x512xf32>
    %49 = tpu.concatenate %47, %48 in 0 : vector<56x512xf32>, vector<8x512xf32> -> vector<64x512xf32>
    %50 = tpu.concatenate %46, %43, %49 in 1 : vector<64x512xf32>, vector<64x512xf32>, vector<64x512xf32> -> vector<64x1536xf32>
    %c1_i32_17 = arith.constant 1 : i32
    %51 = tpu.memref_slice %arg16[%c1_i32_17] : memref<4x!tpu.dma_semaphore, #tpu.memory_space<semaphore_mem>> -> memref<1x!tpu.dma_semaphore, #tpu.memory_space<semaphore_mem>>
    %52 = tpu.memref_squeeze %51 : memref<1x!tpu.dma_semaphore, #tpu.memory_space<semaphore_mem>> -> memref<!tpu.dma_semaphore, #tpu.memory_space<semaphore_mem>>
    tpu.wait_dma2 semaphore(%52 : memref<!tpu.dma_semaphore, #tpu.memory_space<semaphore_mem>>) src(%arg8 : memref<1536x32xbf16, #tpu.memory_space<any>>) dst(%arg13 : memref<1536x32xbf16, #tpu.memory_space<vmem>>)
    %c0_18 = arith.constant 0 : index
    %c0_19 = arith.constant 0 : index
    %53 = vector.load %arg13[%c0_18, %c0_19] : memref<1536x32xbf16, #tpu.memory_space<vmem>>, vector<1536x32xbf16>
    %54 = arith.truncf %50 : vector<64x1536xf32> to vector<64x1536xbf16>
    %cst_20 = arith.constant dense<0.000000e+00> : vector<64x32xf32>
    %55 = tpu.matmul %54, %53, %cst_20 {dimension_numbers = #tpu.dot_dimension_numbers<[1], [0], [0], [1], [0, 0, 1, 1], [], []>} : vector<64x1536xbf16>, vector<1536x32xbf16>, vector<64x32xf32> -> vector<64x32xf32>
    %c0_21 = arith.constant 0 : index
    %c0_22 = arith.constant 0 : index
    %56 = vector.load %arg4[%c0_21, %c0_22] : memref<1x32xf32, #tpu.memory_space<vmem>>, vector<1x32xf32>
    %57 = vector.broadcast %56 : vector<1x32xf32> to vector<64x32xf32>
    %58 = arith.addf %55, %57 : vector<64x32xf32>
    %cst_23 = arith.constant 0.000000e+00 : f32
    %59 = vector.broadcast %cst_23 : f32 to vector<64x32xf32>
    %60 = arith.maximumf %58, %59 : vector<64x32xf32>
    %61 = vector.shape_cast %60 : vector<64x32xf32> to vector<4x16x32xf32>
    %62 = vector.extract_strided_slice %61 {offsets = [0, 0, 0], sizes = [4, 8, 32], strides = [1, 1, 1]} : vector<4x16x32xf32> to vector<4x8x32xf32>
    %63 = vector.extract_strided_slice %61 {offsets = [0, 8, 0], sizes = [4, 8, 32], strides = [1, 1, 1]} : vector<4x16x32xf32> to vector<4x8x32xf32>
    %64 = arith.maximumf %62, %63 : vector<4x8x32xf32>
    %65 = vector.shape_cast %64 : vector<4x8x32xf32> to vector<32x32xf32>
    %66 = vector.extract_strided_slice %65 {offsets = [0, 0], sizes = [8, 32], strides = [1, 1]} : vector<32x32xf32> to vector<8x32xf32>
    %67 = vector.extract_strided_slice %65 {offsets = [8, 0], sizes = [8, 32], strides = [1, 1]} : vector<32x32xf32> to vector<8x32xf32>
    %68 = vector.extract_strided_slice %65 {offsets = [16, 0], sizes = [8, 32], strides = [1, 1]} : vector<32x32xf32> to vector<8x32xf32>
    %69 = vector.extract_strided_slice %65 {offsets = [24, 0], sizes = [8, 32], strides = [1, 1]} : vector<32x32xf32> to vector<8x32xf32>
    %70 = tpu.concatenate %66, %67, %68, %69 in 1 : vector<8x32xf32>, vector<8x32xf32>, vector<8x32xf32>, vector<8x32xf32> -> vector<8x128xf32>
    %c2_i32_24 = arith.constant 2 : i32
    %71 = tpu.memref_slice %arg16[%c2_i32_24] : memref<4x!tpu.dma_semaphore, #tpu.memory_space<semaphore_mem>> -> memref<1x!tpu.dma_semaphore, #tpu.memory_space<semaphore_mem>>
    %72 = tpu.memref_squeeze %71 : memref<1x!tpu.dma_semaphore, #tpu.memory_space<semaphore_mem>> -> memref<!tpu.dma_semaphore, #tpu.memory_space<semaphore_mem>>
    tpu.wait_dma2 semaphore(%72 : memref<!tpu.dma_semaphore, #tpu.memory_space<semaphore_mem>>) src(%arg9 : memref<128x512xbf16, #tpu.memory_space<any>>) dst(%arg14 : memref<128x512xbf16, #tpu.memory_space<vmem>>)
    %c0_25 = arith.constant 0 : index
    %c0_26 = arith.constant 0 : index
    %73 = vector.load %arg14[%c0_25, %c0_26] : memref<128x512xbf16, #tpu.memory_space<vmem>>, vector<128x512xbf16>
    %74 = arith.truncf %70 : vector<8x128xf32> to vector<8x128xbf16>
    %cst_27 = arith.constant dense<0.000000e+00> : vector<8x512xf32>
    %75 = tpu.matmul %74, %73, %cst_27 {dimension_numbers = #tpu.dot_dimension_numbers<[1], [0], [0], [1], [0, 0, 1, 1], [], []>} : vector<8x128xbf16>, vector<128x512xbf16>, vector<8x512xf32> -> vector<8x512xf32>
    %c0_28 = arith.constant 0 : index
    %c0_29 = arith.constant 0 : index
    %76 = vector.load %arg5[%c0_28, %c0_29] : memref<1x512xf32, #tpu.memory_space<vmem>>, vector<1x512xf32>
    %77 = vector.broadcast %76 : vector<1x512xf32> to vector<8x512xf32>
    %78 = arith.addf %75, %77 : vector<8x512xf32>
    %cst_30 = arith.constant 0.000000e+00 : f32
    %79 = vector.broadcast %cst_30 : f32 to vector<8x512xf32>
    %80 = arith.maximumf %78, %79 : vector<8x512xf32>
    %c3_i32_31 = arith.constant 3 : i32
    %81 = tpu.memref_slice %arg16[%c3_i32_31] : memref<4x!tpu.dma_semaphore, #tpu.memory_space<semaphore_mem>> -> memref<1x!tpu.dma_semaphore, #tpu.memory_space<semaphore_mem>>
    %82 = tpu.memref_squeeze %81 : memref<1x!tpu.dma_semaphore, #tpu.memory_space<semaphore_mem>> -> memref<!tpu.dma_semaphore, #tpu.memory_space<semaphore_mem>>
    tpu.wait_dma2 semaphore(%82 : memref<!tpu.dma_semaphore, #tpu.memory_space<semaphore_mem>>) src(%arg10 : memref<512x128xbf16, #tpu.memory_space<any>>) dst(%arg15 : memref<512x128xbf16, #tpu.memory_space<vmem>>)
    %c0_32 = arith.constant 0 : index
    %c0_33 = arith.constant 0 : index
    %83 = vector.load %arg15[%c0_32, %c0_33] : memref<512x128xbf16, #tpu.memory_space<vmem>>, vector<512x128xbf16>
    %84 = arith.truncf %80 : vector<8x512xf32> to vector<8x512xbf16>
    %cst_34 = arith.constant dense<0.000000e+00> : vector<8x128xf32>
    %85 = tpu.matmul %84, %83, %cst_34 {dimension_numbers = #tpu.dot_dimension_numbers<[1], [0], [0], [1], [0, 0, 1, 1], [], []>} : vector<8x512xbf16>, vector<512x128xbf16>, vector<8x128xf32> -> vector<8x128xf32>
    %c0_35 = arith.constant 0 : index
    %c0_36 = arith.constant 0 : index
    %86 = vector.load %arg6[%c0_35, %c0_36] : memref<1x128xf32, #tpu.memory_space<vmem>>, vector<1x128xf32>
    %87 = vector.broadcast %86 : vector<1x128xf32> to vector<8x128xf32>
    %88 = arith.addf %85, %87 : vector<8x128xf32>
    %c0_37 = arith.constant 0 : index
    %c0_38 = arith.constant 0 : index
    %89 = vector.load %arg11[%c0_37, %c0_38] : memref<8x128xf32, #tpu.memory_space<vmem>>, vector<8x128xf32>
    tpu.vector_store %arg11[%c0_37, %c0_38], %88 {strides = array<i32>} : memref<8x128xf32, #tpu.memory_space<vmem>>, vector<8x128xf32>,
    return
  }
}

</mosaic_0001>

<llo_original>
// kernel: tpu_custom_call.1
$region0: #{tpu_custom_call.1}
  #allocation0 [shape = 'u32[]', space=smem, size = 0x4, offset = 0x4, fixed_abs, tag = 'smem constant byte address 0x4 - core index']
  #allocation1 [shape = 'u32[144,128]{1,0:T(1,128)}', space=vmem, size = 0x12000, scoped, tag = 'internal scratch']
  #allocation2 [shape = 'bf16[768,512]{1,0:T(8,128)(2,1)}', space=vmem, size = 0xc0000, scoped, tag = 'scratch operand']
  #allocation3 [shape = 'bf16[1536,32]{1,0:T(8,128)(2,1)}', space=vmem, size = 0x60000, scoped, tag = 'scratch operand']
  #allocation4 [shape = 'bf16[128,512]{1,0:T(8,128)(2,1)}', space=vmem, size = 0x20000, scoped, tag = 'scratch operand']
  #allocation5 [shape = 'bf16[512,128]{1,0:T(8,128)(2,1)}', space=vmem, size = 0x20000, scoped, tag = 'scratch operand']
  #allocation6 [shape = 's32[4]{0}', space=sflag, size = 0x10, scoped, tag = 'scratch operand']
  #allocation9 [shape = 's32[]', space=sflag, size = 0x4, offset = 0, fixed_abs, tag = 'sflag constant byte address 0x0 - dummy sync flag']
  #allocation10 [shape = 's32[]', space=sflag, size = 0x4, offset = 0, fixed_abs, tag = 'sflag constant byte address 0x0 - dummy sync flag']
  #allocation11 [shape = 'u32[]', space=smem, size = 0x4, offset = 0x44, fixed_abs, tag = 'smem constant byte address 0x44 - assertion arg 0']
  #allocation12 [shape = 'u32[]', space=smem, size = 0x4, offset = 0x48, fixed_abs, tag = 'smem constant byte address 0x48 - assertion arg 1']
  #allocation13 [shape = 's32[]', space=sflag, size = 0x4, offset = 0, fixed_abs, tag = 'sflag constant byte address 0x0 - dummy sync flag']
  #allocation14 [shape = 's32[]', space=sflag, size = 0x4, offset = 0, fixed_abs, tag = 'sflag constant byte address 0x0 - dummy sync flag']
  #allocation15 [shape = 's32[]', space=sflag, size = 0x4, offset = 0, fixed_abs, tag = 'sflag constant byte address 0x0 - dummy sync flag']
  %s0 = inlined_call_operand.vmem [shape: f32[256,12], index: 0, kind: input, shape index: {}]
  %s1 = inlined_call_operand.vmem [shape: bf16[12,256], index: 1, kind: input, shape index: {}]
  %s2 = inlined_call_operand.vmem [shape: f32[1,256], index: 2, kind: input, shape index: {}]
  %s3 = inlined_call_operand.vmem [shape: f32[1,512], index: 3, kind: input, shape index: {}]
  %s4 = inlined_call_operand.vmem [shape: f32[1,32], index: 4, kind: input, shape index: {}]
  %s5 = inlined_call_operand.vmem [shape: f32[1,512], index: 5, kind: input, shape index: {}]
  %s6 = inlined_call_operand.vmem [shape: f32[1,128], index: 6, kind: input, shape index: {}]
  %s7 = inlined_call_operand.hbm [shape: bf16[768,512], index: 7, kind: input, shape index: {}]
  %s8 = inlined_call_operand.vmem [shape: bf16[1536,32], index: 8, kind: input, shape index: {}]
  %s9 = inlined_call_operand.vmem [shape: bf16[128,512], index: 9, kind: input, shape index: {}]
  %s10 = inlined_call_operand.vmem [shape: bf16[512,128], index: 10, kind: input, shape index: {}]
  %s11 = inlined_call_operand.hbm [shape: f32[8,128], index: 11, kind: output, shape index: {}]
  %s12 = sld [smem:[#allocation0]]
  $region144: #{tpu_custom_call.1} parent=0
    _
  %s14 = ssub.s32 1, %s12
  %s15 = scalar_select 0, %s14, %s12
  $region1: #{tpu_custom_call.1} parent=0
    #allocation7 [shape = 'u8[4096]{0}', space=vmem, size = 0x1000, scoped, tag = 'output window, operand 0, single buffered']
    #allocation8 [shape = 's32[1]{0}', space=sflag, size = 0x4, scoped, tag = 'scoped memory for tpu_custom_call.1']
    %16 = vsyncpa [#allocation8], 0
    // Predicated region
    $region2: #{tpu_custom_call.1} parent=1 // pred_check
      _
    $region3: #{tpu_custom_call.1} parent=1 // pred_check_branch
      %18 = sbr.rel (0) target = $region5
    $region4: #{tpu_custom_call.1} parent=1 // pred_region
      _
    $region5: #{tpu_custom_call.1} parent=1 // pred_fallthru
      _
    // Predicated region
    $region6: #{tpu_custom_call.1} parent=1 // pred_check
      _
    $region7: #{tpu_custom_call.1} parent=1 // pred_check_branch
      %20 = sbr.rel (0) target = $region9
    $region8: #{tpu_custom_call.1} parent=1 // pred_region
      _
    $region9: #{tpu_custom_call.1} parent=1 // pred_fallthru
      _
    // Predicated region
    $region10: #{tpu_custom_call.1} parent=1 // pred_check
      _
    $region11: #{tpu_custom_call.1} parent=1 // pred_check_branch
      %22 = sbr.rel (0) target = $region13
    $region12: #{tpu_custom_call.1} parent=1 // pred_region
      _
    $region13: #{tpu_custom_call.1} parent=1 // pred_fallthru
      _
    // Predicated region
    $region14: #{tpu_custom_call.1} parent=1 // pred_check
      _
    $region15: #{tpu_custom_call.1} parent=1 // pred_check_branch
      %24 = sbr.rel (0) target = $region17
    $region16: #{tpu_custom_call.1} parent=1 // pred_region
      _
    $region17: #{tpu_custom_call.1} parent=1 // pred_fallthru
      _
    // Predicated region
    $region18: #{tpu_custom_call.1} parent=1 // pred_check
      _
    $region19: #{tpu_custom_call.1} parent=1 // pred_check_branch
      %26 = sbr.rel (0) target = $region21
    $region20: #{tpu_custom_call.1} parent=1 // pred_region
      _
    $region21: #{tpu_custom_call.1} parent=1 // pred_fallthru
      _
    // Predicated region
    $region22: #{tpu_custom_call.1} parent=1 // pred_check
      _
    $region23: #{tpu_custom_call.1} parent=1 // pred_check_branch
      %28 = sbr.rel (0) target = $region25
    $region24: #{tpu_custom_call.1} parent=1 // pred_region
      _
    $region25: #{tpu_custom_call.1} parent=1 // pred_fallthru
      _
    // Predicated region
    $region26: #{tpu_custom_call.1} parent=1 // pred_check
      _
    $region27: #{tpu_custom_call.1} parent=1 // pred_check_branch
      %30 = sbr.rel (0) target = $region29
    $region28: #{tpu_custom_call.1} parent=1 // pred_region
      _
    $region29: #{tpu_custom_call.1} parent=1 // pred_fallthru
      _
    // Predicated region
    $region30: #{tpu_custom_call.1} parent=1 // pred_check
      _
    $region31: #{tpu_custom_call.1} parent=1 // pred_check_branch
      %33 = sbr.rel target = $region33
    $region32: #{tpu_custom_call.1} parent=1 // pred_region
      %34 = sst [smem:[#allocation11]] [#allocation10]
      %35 = sst [smem:[#allocation12]] [#allocation9]
    $region33: #{tpu_custom_call.1} parent=1 // pred_fallthru
      _
    %37 = shalt.err (0)
    %s39 = sshll.u32 [#allocation2], 4
    %s40 = int_to_ptr.vmem [resolvable:$true] %s39
    %42 = dma.hbm_to_vmem [thread:$0]  %s7, 24576, %s40, [#allocation6]
    %s43 = scalar_lea.sflag [#allocation6], 1
    %p45 = scmp.lt.u32.totalorder 768, 8
    %p46 = pneg %p45
    // Predicated region
    $region34: #{tpu_custom_call.1} parent=1 // pred_check
      _
    $region35: #{tpu_custom_call.1} parent=1 // pred_check_branch
      %48 = sbr.rel (%p45) target = $region37
    $region36: #{tpu_custom_call.1} parent=1 // pred_region
      %s64 = sand.u32 768, 7
      %p65 = scmp.eq.s32.totalorder %s64, 0
      // Predicated region
      $region49: #{tpu_custom_call.1} parent=36 // pred_check
        %p66 = pneg %p65
      $region50: #{tpu_custom_call.1} parent=36 // pred_check_branch
        %68 = sbr.rel (%p66) target = $region52
      $region51: #{tpu_custom_call.1} parent=36 // pred_region
        loop: start=0, step=1, limit=1
        $region53: #{tpu_custom_call.1} parent=51 // loop_pre_header
          _
        $region54: #{tpu_custom_call.1} parent=51 // loop_header
          %s70 = sphi 0, %s74
          %p71 = scmp.ge.s32.totalorder %s70, 1
          %s75 = sphi %s8, %s8
          %s76 = sphi [#allocation3], [#allocation3]
        $region55: #{tpu_custom_call.1} parent=51 // loop_header_branch
          %73 = sbr.rel (%p71) target = $region59
        $region56: #{tpu_custom_call.1} parent=51 // loop_body
          %v77 = vld [vmem:[%s75] sm:$0xff]
          %78 = vst [vmem:[%s76] sm:$0xff] %v77
          %v79 = vld [vmem:[%s75 + $0x8] sm:$0xff]
          %80 = vst [vmem:[%s76 + $0x8] sm:$0xff] %v79
          %v81 = vld [vmem:[%s75 + $0x10] sm:$0xff]
          %82 = vst [vmem:[%s76 + $0x10] sm:$0xff] %v81
          %v83 = vld [vmem:[%s75 + $0x18] sm:$0xff]
          %84 = vst [vmem:[%s76 + $0x18] sm:$0xff] %v83
          %v85 = vld [vmem:[%s75 + $0x20] sm:$0xff]
          %86 = vst [vmem:[%s76 + $0x20] sm:$0xff] %v85
          %v87 = vld [vmem:[%s75 + $0x28] sm:$0xff]
          %88 = vst [vmem:[%s76 + $0x28] sm:$0xff] %v87
          %v89 = vld [vmem:[%s75 + $0x30] sm:$0xff]
          %90 = vst [vmem:[%s76 + $0x30] sm:$0xff] %v89
          %v91 = vld [vmem:[%s75 + $0x38] sm:$0xff]
          %92 = vst [vmem:[%s76 + $0x38] sm:$0xff] %v91
          %v93 = vld [vmem:[%s75 + $0x40] sm:$0xff]
          %94 = vst [vmem:[%s76 + $0x40] sm:$0xff] %v93
          %v95 = vld [vmem:[%s75 + $0x48] sm:$0xff]
          %96 = vst [vmem:[%s76 + $0x48] sm:$0xff] %v95
          %v97 = vld [vmem:[%s75 + $0x50] sm:$0xff]
          %98 = vst [vmem:[%s76 + $0x50] sm:$0xff] %v97
          %v99 = vld [vmem:[%s75 + $0x58] sm:$0xff]
          %100 = vst [vmem:[%s76 + $0x58] sm:$0xff] %v99
          %v101 = vld [vmem:[%s75 + $0x60] sm:$0xff]
          %102 = vst [vmem:[%s76 + $0x60] sm:$0xff] %v101
          %v103 = vld [vmem:[%s75 + $0x68] sm:$0xff]
          %104 = vst [vmem:[%s76 + $0x68] sm:$0xff] %v103
          %v105 = vld [vmem:[%s75 + $0x70] sm:$0xff]
          %106 = vst [vmem:[%s76 + $0x70] sm:$0xff] %v105
          %v107 = vld [vmem:[%s75 + $0x78] sm:$0xff]
          %108 = vst [vmem:[%s76 + $0x78] sm:$0xff] %v107
          %v109 = vld [vmem:[%s75 + $0x80] sm:$0xff]
          %110 = vst [vmem:[%s76 + $0x80] sm:$0xff] %v109
          %v111 = vld [vmem:[%s75 + $0x88] sm:$0xff]
          %112 = vst [vmem:[%s76 + $0x88] sm:$0xff] %v111
          %v113 = vld [vmem:[%s75 + $0x90] sm:$0xff]
          %114 = vst [vmem:[%s76 + $0x90] sm:$0xff] %v113
          %v115 = vld [vmem:[%s75 + $0x98] sm:$0xff]
          %116 = vst [vmem:[%s76 + $0x98] sm:$0xff] %v115
          %v117 = vld [vmem:[%s75 + $0xa0] sm:$0xff]
          %118 = vst [vmem:[%s76 + $0xa0] sm:$0xff] %v117
          %v119 = vld [vmem:[%s75 + $0xa8] sm:$0xff]
          %120 = vst [vmem:[%s76 + $0xa8] sm:$0xff] %v119
          %v121 = vld [vmem:[%s75 + $0xb0] sm:$0xff]
          %122 = vst [vmem:[%s76 + $0xb0] sm:$0xff] %v121
          %v123 = vld [vmem:[%s75 + $0xb8] sm:$0xff]
          %124 = vst [vmem:[%s76 + $0xb8] sm:$0xff] %v123
          %v125 = vld [vmem:[%s75 + $0xc0] sm:$0xff]
          %126 = vst [vmem:[%s76 + $0xc0] sm:$0xff] %v125
          %v127 = vld [vmem:[%s75 + $0xc8] sm:$0xff]
          %128 = vst [vmem:[%s76 + $0xc8] sm:$0xff] %v127
          %v129 = vld [vmem:[%s75 + $0xd0] sm:$0xff]
          %130 = vst [vmem:[%s76 + $0xd0] sm:$0xff] %v129
          %v131 = vld [vmem:[%s75 + $0xd8] sm:$0xff]
          %132 = vst [vmem:[%s76 + $0xd8] sm:$0xff] %v131
          %v133 = vld [vmem:[%s75 + $0xe0] sm:$0xff]
          %134 = vst [vmem:[%s76 + $0xe0] sm:$0xff] %v133
          %v135 = vld [vmem:[%s75 + $0xe8] sm:$0xff]
          %136 = vst [vmem:[%s76 + $0xe8] sm:$0xff] %v135
          %v137 = vld [vmem:[%s75 + $0xf0] sm:$0xff]
          %138 = vst [vmem:[%s76 + $0xf0] sm:$0xff] %v137
          %v139 = vld [vmem:[%s75 + $0xf8] sm:$0xff]
          %140 = vst [vmem:[%s76 + $0xf8] sm:$0xff] %v139
          %v141 = vld [vmem:[%s75 + $0x100] sm:$0xff]
          %142 = vst [vmem:[%s76 + $0x100] sm:$0xff] %v141
          %v143 = vld [vmem:[%s75 + $0x108] sm:$0xff]
          %144 = vst [vmem:[%s76 + $0x108] sm:$0xff] %v143
          %v145 = vld [vmem:[%s75 + $0x110] sm:$0xff]
          %146 = vst [vmem:[%s76 + $0x110] sm:$0xff] %v145
          %v147 = vld [vmem:[%s75 + $0x118] sm:$0xff]
          %148 = vst [vmem:[%s76 + $0x118] sm:$0xff] %v147
          %v149 = vld [vmem:[%s75 + $0x120] sm:$0xff]
          %150 = vst [vmem:[%s76 + $0x120] sm:$0xff] %v149
          %v151 = vld [vmem:[%s75 + $0x128] sm:$0xff]
          %152 = vst [vmem:[%s76 + $0x128] sm:$0xff] %v151
          %v153 = vld [vmem:[%s75 + $0x130] sm:$0xff]
          %154 = vst [vmem:[%s76 + $0x130] sm:$0xff] %v153
          %v155 = vld [vmem:[%s75 + $0x138] sm:$0xff]
          %156 = vst [vmem:[%s76 + $0x138] sm:$0xff] %v155
          %v157 = vld [vmem:[%s75 + $0x140] sm:$0xff]
          %158 = vst [vmem:[%s76 + $0x140] sm:$0xff] %v157
          %v159 = vld [vmem:[%s75 + $0x148] sm:$0xff]
          %160 = vst [vmem:[%s76 + $0x148] sm:$0xff] %v159
          %v161 = vld [vmem:[%s75 + $0x150] sm:$0xff]
          %162 = vst [vmem:[%s76 + $0x150] sm:$0xff] %v161
          %v163 = vld [vmem:[%s75 + $0x158] sm:$0xff]
          %164 = vst [vmem:[%s76 + $0x158] sm:$0xff] %v163
          %v165 = vld [vmem:[%s75 + $0x160] sm:$0xff]
          %166 = vst [vmem:[%s76 + $0x160] sm:$0xff] %v165
          %v167 = vld [vmem:[%s75 + $0x168] sm:$0xff]
          %168 = vst [vmem:[%s76 + $0x168] sm:$0xff] %v167
          %v169 = vld [vmem:[%s75 + $0x170] sm:$0xff]
          %170 = vst [vmem:[%s76 + $0x170] sm:$0xff] %v169
          %v171 = vld [vmem:[%s75 + $0x178] sm:$0xff]
          %172 = vst [vmem:[%s76 + $0x178] sm:$0xff] %v171
          %v173 = vld [vmem:[%s75 + $0x180] sm:$0xff]
          %174 = vst [vmem:[%s76 + $0x180] sm:$0xff] %v173
          %v175 = vld [vmem:[%s75 + $0x188] sm:$0xff]
          %176 = vst [vmem:[%s76 + $0x188] sm:$0xff] %v175
          %v177 = vld [vmem:[%s75 + $0x190] sm:$0xff]
          %178 = vst [vmem:[%s76 + $0x190] sm:$0xff] %v177
          %v179 = vld [vmem:[%s75 + $0x198] sm:$0xff]
          %180 = vst [vmem:[%s76 + $0x198] sm:$0xff] %v179
          %v181 = vld [vmem:[%s75 + $0x1a0] sm:$0xff]
          %182 = vst [vmem:[%s76 + $0x1a0] sm:$0xff] %v181
          %v183 = vld [vmem:[%s75 + $0x1a8] sm:$0xff]
          %184 = vst [vmem:[%s76 + $0x1a8] sm:$0xff] %v183
          %v185 = vld [vmem:[%s75 + $0x1b0] sm:$0xff]
          %186 = vst [vmem:[%s76 + $0x1b0] sm:$0xff] %v185
          %v187 = vld [vmem:[%s75 + $0x1b8] sm:$0xff]
          %188 = vst [vmem:[%s76 + $0x1b8] sm:$0xff] %v187
          %v189 = vld [vmem:[%s75 + $0x1c0] sm:$0xff]
          %190 = vst [vmem:[%s76 + $0x1c0] sm:$0xff] %v189
          %v191 = vld [vmem:[%s75 + $0x1c8] sm:$0xff]
          %192 = vst [vmem:[%s76 + $0x1c8] sm:$0xff] %v191
          %v193 = vld [vmem:[%s75 + $0x1d0] sm:$0xff]
          %194 = vst [vmem:[%s76 + $0x1d0] sm:$0xff] %v193
          %v195 = vld [vmem:[%s75 + $0x1d8] sm:$0xff]
          %196 = vst [vmem:[%s76 + $0x1d8] sm:$0xff] %v195
          %v197 = vld [vmem:[%s75 + $0x1e0] sm:$0xff]
          %198 = vst [vmem:[%s76 + $0x1e0] sm:$0xff] %v197
          %v199 = vld [vmem:[%s75 + $0x1e8] sm:$0xff]
          %200 = vst [vmem:[%s76 + $0x1e8] sm:$0xff] %v199
          %v201 = vld [vmem:[%s75 + $0x1f0] sm:$0xff]
          %202 = vst [vmem:[%s76 + $0x1f0] sm:$0xff] %v201
          %v203 = vld [vmem:[%s75 + $0x1f8] sm:$0xff]
          %204 = vst [vmem:[%s76 + $0x1f8] sm:$0xff] %v203
          %v205 = vld [vmem:[%s75 + $0x200] sm:$0xff]
          %206 = vst [vmem:[%s76 + $0x200] sm:$0xff] %v205
          %v207 = vld [vmem:[%s75 + $0x208] sm:$0xff]
          %208 = vst [vmem:[%s76 + $0x208] sm:$0xff] %v207
          %v209 = vld [vmem:[%s75 + $0x210] sm:$0xff]
          %210 = vst [vmem:[%s76 + $0x210] sm:$0xff] %v209
          %v211 = vld [vmem:[%s75 + $0x218] sm:$0xff]
          %212 = vst [vmem:[%s76 + $0x218] sm:$0xff] %v211
          %v213 = vld [vmem:[%s75 + $0x220] sm:$0xff]
          %214 = vst [vmem:[%s76 + $0x220] sm:$0xff] %v213
          %v215 = vld [vmem:[%s75 + $0x228] sm:$0xff]
          %216 = vst [vmem:[%s76 + $0x228] sm:$0xff] %v215
          %v217 = vld [vmem:[%s75 + $0x230] sm:$0xff]
          %218 = vst [vmem:[%s76 + $0x230] sm:$0xff] %v217
          %v219 = vld [vmem:[%s75 + $0x238] sm:$0xff]
          %220 = vst [vmem:[%s76 + $0x238] sm:$0xff] %v219
          %v221 = vld [vmem:[%s75 + $0x240] sm:$0xff]
          %222 = vst [vmem:[%s76 + $0x240] sm:$0xff] %v221
          %v223 = vld [vmem:[%s75 + $0x248] sm:$0xff]
          %224 = vst [vmem:[%s76 + $0x248] sm:$0xff] %v223
          %v225 = vld [vmem:[%s75 + $0x250] sm:$0xff]
          %226 = vst [vmem:[%s76 + $0x250] sm:$0xff] %v225
          %v227 = vld [vmem:[%s75 + $0x258] sm:$0xff]
          %228 = vst [vmem:[%s76 + $0x258] sm:$0xff] %v227
          %v229 = vld [vmem:[%s75 + $0x260] sm:$0xff]
          %230 = vst [vmem:[%s76 + $0x260] sm:$0xff] %v229
          %v231 = vld [vmem:[%s75 + $0x268] sm:$0xff]
          %232 = vst [vmem:[%s76 + $0x268] sm:$0xff] %v231
          %v233 = vld [vmem:[%s75 + $0x270] sm:$0xff]
          %234 = vst [vmem:[%s76 + $0x270] sm:$0xff] %v233
          %v235 = vld [vmem:[%s75 + $0x278] sm:$0xff]
          %236 = vst [vmem:[%s76 + $0x278] sm:$0xff] %v235
          %v237 = vld [vmem:[%s75 + $0x280] sm:$0xff]
          %238 = vst [vmem:[%s76 + $0x280] sm:$0xff] %v237
          %v239 = vld [vmem:[%s75 + $0x288] sm:$0xff]
          %240 = vst [vmem:[%s76 + $0x288] sm:$0xff] %v239
          %v241 = vld [vmem:[%s75 + $0x290] sm:$0xff]
          %242 = vst [vmem:[%s76 + $0x290] sm:$0xff] %v241
          %v243 = vld [vmem:[%s75 + $0x298] sm:$0xff]
          %244 = vst [vmem:[%s76 + $0x298] sm:$0xff] %v243
          %v245 = vld [vmem:[%s75 + $0x2a0] sm:$0xff]
          %246 = vst [vmem:[%s76 + $0x2a0] sm:$0xff] %v245
          %v247 = vld [vmem:[%s75 + $0x2a8] sm:$0xff]
          %248 = vst [vmem:[%s76 + $0x2a8] sm:$0xff] %v247
          %v249 = vld [vmem:[%s75 + $0x2b0] sm:$0xff]
          %250 = vst [vmem:[%s76 + $0x2b0] sm:$0xff] %v249
          %v251 = vld [vmem:[%s75 + $0x2b8] sm:$0xff]
          %252 = vst [vmem:[%s76 + $0x2b8] sm:$0xff] %v251
          %v253 = vld [vmem:[%s75 + $0x2c0] sm:$0xff]
          %254 = vst [vmem:[%s76 + $0x2c0] sm:$0xff] %v253
          %v255 = vld [vmem:[%s75 + $0x2c8] sm:$0xff]
          %256 = vst [vmem:[%s76 + $0x2c8] sm:$0xff] %v255
          %v257 = vld [vmem:[%s75 + $0x2d0] sm:$0xff]
          %258 = vst [vmem:[%s76 + $0x2d0] sm:$0xff] %v257
          %v259 = vld [vmem:[%s75 + $0x2d8] sm:$0xff]
          %260 = vst [vmem:[%s76 + $0x2d8] sm:$0xff] %v259
          %v261 = vld [vmem:[%s75 + $0x2e0] sm:$0xff]
          %262 = vst [vmem:[%s76 + $0x2e0] sm:$0xff] %v261
          %v263 = vld [vmem:[%s75 + $0x2e8] sm:$0xff]
          %264 = vst [vmem:[%s76 + $0x2e8] sm:$0xff] %v263
          %v265 = vld [vmem:[%s75 + $0x2f0] sm:$0xff]
          %266 = vst [vmem:[%s76 + $0x2f0] sm:$0xff] %v265
          %v267 = vld [vmem:[%s75 + $0x2f8] sm:$0xff]
          %268 = vst [vmem:[%s76 + $0x2f8] sm:$0xff] %v267
        $region57: #{tpu_custom_call.1} parent=51 // loop_footer
          %s74 = sadd.s32 1, %s70
        $region58: #{tpu_custom_call.1} parent=51 // loop_footer_branch
          %69 = sbr.rel target = $region54
        $region59: #{tpu_custom_call.1} parent=51 // loop_exit
          _
      $region52: #{tpu_custom_call.1} parent=36 // pred_fallthru
        _
      %p269 = pneg %p65
      // Predicated region
      $region60: #{tpu_custom_call.1} parent=36 // pred_check
        _
      $region61: #{tpu_custom_call.1} parent=36 // pred_check_branch
        %271 = sbr.rel (%p65) target = $region63
      $region62: #{tpu_custom_call.1} parent=36 // pred_region
        %s272 = sand.u32 768, 7
      $region63: #{tpu_custom_call.1} parent=36 // pred_fallthru
        _
    $region37: #{tpu_custom_call.1} parent=1 // pred_fallthru
      _
    // Predicated region
    $region38: #{tpu_custom_call.1} parent=1 // pred_check
      %p49 = pneg %p45
    $region39: #{tpu_custom_call.1} parent=1 // pred_check_branch
      %51 = sbr.rel (%p49) target = $region41
    $region40: #{tpu_custom_call.1} parent=1 // pred_region
      %s52 = sshll.u32 1, 768
      %s53 = ssub.s32 %s52, 1
      loop: start=0, step=1, limit=1
      $region42: #{tpu_custom_call.1} parent=40 // loop_pre_header
        _
      $region43: #{tpu_custom_call.1} parent=40 // loop_header
        %s55 = sphi 0, %s59
        %p56 = scmp.ge.s32.totalorder %s55, 1
        %s60 = sphi %s8, %s8
        %s61 = sphi [#allocation3], [#allocation3]
      $region44: #{tpu_custom_call.1} parent=40 // loop_header_branch
        %58 = sbr.rel (%p56) target = $region48
      $region45: #{tpu_custom_call.1} parent=40 // loop_body
        %v62 = vld [vmem:[%s60] sm:%s53]
        %63 = vst [vmem:[%s61] sm:%s53] %v62
      $region46: #{tpu_custom_call.1} parent=40 // loop_footer
        %s59 = sadd.s32 1, %s55
      $region47: #{tpu_custom_call.1} parent=40 // loop_footer_branch
        %54 = sbr.rel target = $region43
      $region48: #{tpu_custom_call.1} parent=40 // loop_exit
        _
    $region41: #{tpu_custom_call.1} parent=1 // pred_fallthru
      _
    // Predicated region
    $region64: #{tpu_custom_call.1} parent=1 // pred_check
      _
    $region65: #{tpu_custom_call.1} parent=1 // pred_check_branch
      %275 = sbr.rel (0) target = $region67
    $region66: #{tpu_custom_call.1} parent=1 // pred_region
      %276 = vsyncadd %s43, 12288
    $region67: #{tpu_custom_call.1} parent=1 // pred_fallthru
      _
    %s277 = scalar_lea.sflag [#allocation6], 2
    %p279 = scmp.lt.u32.totalorder 256, 8
    %p280 = pneg %p279
    // Predicated region
    $region68: #{tpu_custom_call.1} parent=1 // pred_check
      _
    $region69: #{tpu_custom_call.1} parent=1 // pred_check_branch
      %282 = sbr.rel (%p279) target = $region71
    $region70: #{tpu_custom_call.1} parent=1 // pred_region
      %s298 = sand.u32 256, 7
      %p299 = scmp.eq.s32.totalorder %s298, 0
      // Predicated region
      $region83: #{tpu_custom_call.1} parent=70 // pred_check
        %p300 = pneg %p299
      $region84: #{tpu_custom_call.1} parent=70 // pred_check_branch
        %302 = sbr.rel (%p300) target = $region86
      $region85: #{tpu_custom_call.1} parent=70 // pred_region
        loop: start=0, step=1, limit=1
        $region87: #{tpu_custom_call.1} parent=85 // loop_pre_header
          _
        $region88: #{tpu_custom_call.1} parent=85 // loop_header
          %s304 = sphi 0, %s308
          %p305 = scmp.ge.s32.totalorder %s304, 1
          %s309 = sphi %s9, %s9
          %s310 = sphi [#allocation4], [#allocation4]
        $region89: #{tpu_custom_call.1} parent=85 // loop_header_branch
          %307 = sbr.rel (%p305) target = $region93
        $region90: #{tpu_custom_call.1} parent=85 // loop_body
          %v311 = vld [vmem:[%s309] sm:$0xff]
          %312 = vst [vmem:[%s310] sm:$0xff] %v311
          %v313 = vld [vmem:[%s309 + $0x8] sm:$0xff]
          %314 = vst [vmem:[%s310 + $0x8] sm:$0xff] %v313
          %v315 = vld [vmem:[%s309 + $0x10] sm:$0xff]
          %316 = vst [vmem:[%s310 + $0x10] sm:$0xff] %v315
          %v317 = vld [vmem:[%s309 + $0x18] sm:$0xff]
          %318 = vst [vmem:[%s310 + $0x18] sm:$0xff] %v317
          %v319 = vld [vmem:[%s309 + $0x20] sm:$0xff]
          %320 = vst [vmem:[%s310 + $0x20] sm:$0xff] %v319
          %v321 = vld [vmem:[%s309 + $0x28] sm:$0xff]
          %322 = vst [vmem:[%s310 + $0x28] sm:$0xff] %v321
          %v323 = vld [vmem:[%s309 + $0x30] sm:$0xff]
          %324 = vst [vmem:[%s310 + $0x30] sm:$0xff] %v323
          %v325 = vld [vmem:[%s309 + $0x38] sm:$0xff]
          %326 = vst [vmem:[%s310 + $0x38] sm:$0xff] %v325
          %v327 = vld [vmem:[%s309 + $0x40] sm:$0xff]
          %328 = vst [vmem:[%s310 + $0x40] sm:$0xff] %v327
          %v329 = vld [vmem:[%s309 + $0x48] sm:$0xff]
          %330 = vst [vmem:[%s310 + $0x48] sm:$0xff] %v329
          %v331 = vld [vmem:[%s309 + $0x50] sm:$0xff]
          %332 = vst [vmem:[%s310 + $0x50] sm:$0xff] %v331
          %v333 = vld [vmem:[%s309 + $0x58] sm:$0xff]
          %334 = vst [vmem:[%s310 + $0x58] sm:$0xff] %v333
          %v335 = vld [vmem:[%s309 + $0x60] sm:$0xff]
          %336 = vst [vmem:[%s310 + $0x60] sm:$0xff] %v335
          %v337 = vld [vmem:[%s309 + $0x68] sm:$0xff]
          %338 = vst [vmem:[%s310 + $0x68] sm:$0xff] %v337
          %v339 = vld [vmem:[%s309 + $0x70] sm:$0xff]
          %340 = vst [vmem:[%s310 + $0x70] sm:$0xff] %v339
          %v341 = vld [vmem:[%s309 + $0x78] sm:$0xff]
          %342 = vst [vmem:[%s310 + $0x78] sm:$0xff] %v341
          %v343 = vld [vmem:[%s309 + $0x80] sm:$0xff]
          %344 = vst [vmem:[%s310 + $0x80] sm:$0xff] %v343
          %v345 = vld [vmem:[%s309 + $0x88] sm:$0xff]
          %346 = vst [vmem:[%s310 + $0x88] sm:$0xff] %v345
          %v347 = vld [vmem:[%s309 + $0x90] sm:$0xff]
          %348 = vst [vmem:[%s310 + $0x90] sm:$0xff] %v347
          %v349 = vld [vmem:[%s309 + $0x98] sm:$0xff]
          %350 = vst [vmem:[%s310 + $0x98] sm:$0xff] %v349
          %v351 = vld [vmem:[%s309 + $0xa0] sm:$0xff]
          %352 = vst [vmem:[%s310 + $0xa0] sm:$0xff] %v351
          %v353 = vld [vmem:[%s309 + $0xa8] sm:$0xff]
          %354 = vst [vmem:[%s310 + $0xa8] sm:$0xff] %v353
          %v355 = vld [vmem:[%s309 + $0xb0] sm:$0xff]
          %356 = vst [vmem:[%s310 + $0xb0] sm:$0xff] %v355
          %v357 = vld [vmem:[%s309 + $0xb8] sm:$0xff]
          %358 = vst [vmem:[%s310 + $0xb8] sm:$0xff] %v357
          %v359 = vld [vmem:[%s309 + $0xc0] sm:$0xff]
          %360 = vst [vmem:[%s310 + $0xc0] sm:$0xff] %v359
          %v361 = vld [vmem:[%s309 + $0xc8] sm:$0xff]
          %362 = vst [vmem:[%s310 + $0xc8] sm:$0xff] %v361
          %v363 = vld [vmem:[%s309 + $0xd0] sm:$0xff]
          %364 = vst [vmem:[%s310 + $0xd0] sm:$0xff] %v363
          %v365 = vld [vmem:[%s309 + $0xd8] sm:$0xff]
          %366 = vst [vmem:[%s310 + $0xd8] sm:$0xff] %v365
          %v367 = vld [vmem:[%s309 + $0xe0] sm:$0xff]
          %368 = vst [vmem:[%s310 + $0xe0] sm:$0xff] %v367
          %v369 = vld [vmem:[%s309 + $0xe8] sm:$0xff]
          %370 = vst [vmem:[%s310 + $0xe8] sm:$0xff] %v369
          %v371 = vld [vmem:[%s309 + $0xf0] sm:$0xff]
          %372 = vst [vmem:[%s310 + $0xf0] sm:$0xff] %v371
          %v373 = vld [vmem:[%s309 + $0xf8] sm:$0xff]
          %374 = vst [vmem:[%s310 + $0xf8] sm:$0xff] %v373
        $region91: #{tpu_custom_call.1} parent=85 // loop_footer
          %s308 = sadd.s32 1, %s304
        $region92: #{tpu_custom_call.1} parent=85 // loop_footer_branch
          %303 = sbr.rel target = $region88
        $region93: #{tpu_custom_call.1} parent=85 // loop_exit
          _
      $region86: #{tpu_custom_call.1} parent=70 // pred_fallthru
        _
      %p375 = pneg %p299
      // Predicated region
      $region94: #{tpu_custom_call.1} parent=70 // pred_check
        _
      $region95: #{tpu_custom_call.1} parent=70 // pred_check_branch
        %377 = sbr.rel (%p299) target = $region97
      $region96: #{tpu_custom_call.1} parent=70 // pred_region
        %s378 = sand.u32 256, 7
      $region97: #{tpu_custom_call.1} parent=70 // pred_fallthru
        _
    $region71: #{tpu_custom_call.1} parent=1 // pred_fallthru
      _
    // Predicated region
    $region72: #{tpu_custom_call.1} parent=1 // pred_check
      %p283 = pneg %p279
    $region73: #{tpu_custom_call.1} parent=1 // pred_check_branch
      %285 = sbr.rel (%p283) target = $region75
    $region74: #{tpu_custom_call.1} parent=1 // pred_region
      %s286 = sshll.u32 1, 256
      %s287 = ssub.s32 %s286, 1
      loop: start=0, step=1, limit=1
      $region76: #{tpu_custom_call.1} parent=74 // loop_pre_header
        _
      $region77: #{tpu_custom_call.1} parent=74 // loop_header
        %s289 = sphi 0, %s293
        %p290 = scmp.ge.s32.totalorder %s289, 1
        %s294 = sphi %s9, %s9
        %s295 = sphi [#allocation4], [#allocation4]
      $region78: #{tpu_custom_call.1} parent=74 // loop_header_branch
        %292 = sbr.rel (%p290) target = $region82
      $region79: #{tpu_custom_call.1} parent=74 // loop_body
        %v296 = vld [vmem:[%s294] sm:%s287]
        %297 = vst [vmem:[%s295] sm:%s287] %v296
      $region80: #{tpu_custom_call.1} parent=74 // loop_footer
        %s293 = sadd.s32 1, %s289
      $region81: #{tpu_custom_call.1} parent=74 // loop_footer_branch
        %288 = sbr.rel target = $region77
      $region82: #{tpu_custom_call.1} parent=74 // loop_exit
        _
    $region75: #{tpu_custom_call.1} parent=1 // pred_fallthru
      _
    // Predicated region
    $region98: #{tpu_custom_call.1} parent=1 // pred_check
      _
    $region99: #{tpu_custom_call.1} parent=1 // pred_check_branch
      %381 = sbr.rel (0) target = $region101
    $region100: #{tpu_custom_call.1} parent=1 // pred_region
      %382 = vsyncadd %s277, 4096
    $region101: #{tpu_custom_call.1} parent=1 // pred_fallthru
      _
    %s383 = scalar_lea.sflag [#allocation6], 3
    %p385 = scmp.lt.u32.totalorder 256, 8
    %p386 = pneg %p385
    // Predicated region
    $region102: #{tpu_custom_call.1} parent=1 // pred_check
      _
    $region103: #{tpu_custom_call.1} parent=1 // pred_check_branch
      %388 = sbr.rel (%p385) target = $region105
    $region104: #{tpu_custom_call.1} parent=1 // pred_region
      %s404 = sand.u32 256, 7
      %p405 = scmp.eq.s32.totalorder %s404, 0
      // Predicated region
      $region117: #{tpu_custom_call.1} parent=104 // pred_check
        %p406 = pneg %p405
      $region118: #{tpu_custom_call.1} parent=104 // pred_check_branch
        %408 = sbr.rel (%p406) target = $region120
      $region119: #{tpu_custom_call.1} parent=104 // pred_region
        loop: start=0, step=1, limit=1
        $region121: #{tpu_custom_call.1} parent=119 // loop_pre_header
          _
        $region122: #{tpu_custom_call.1} parent=119 // loop_header
          %s410 = sphi 0, %s414
          %p411 = scmp.ge.s32.totalorder %s410, 1
          %s415 = sphi %s10, %s10
          %s416 = sphi [#allocation5], [#allocation5]
        $region123: #{tpu_custom_call.1} parent=119 // loop_header_branch
          %413 = sbr.rel (%p411) target = $region127
        $region124: #{tpu_custom_call.1} parent=119 // loop_body
          %v417 = vld [vmem:[%s415] sm:$0xff]
          %418 = vst [vmem:[%s416] sm:$0xff] %v417
          %v419 = vld [vmem:[%s415 + $0x8] sm:$0xff]
          %420 = vst [vmem:[%s416 + $0x8] sm:$0xff] %v419
          %v421 = vld [vmem:[%s415 + $0x10] sm:$0xff]
          %422 = vst [vmem:[%s416 + $0x10] sm:$0xff] %v421
          %v423 = vld [vmem:[%s415 + $0x18] sm:$0xff]
          %424 = vst [vmem:[%s416 + $0x18] sm:$0xff] %v423
          %v425 = vld [vmem:[%s415 + $0x20] sm:$0xff]
          %426 = vst [vmem:[%s416 + $0x20] sm:$0xff] %v425
          %v427 = vld [vmem:[%s415 + $0x28] sm:$0xff]
          %428 = vst [vmem:[%s416 + $0x28] sm:$0xff] %v427
          %v429 = vld [vmem:[%s415 + $0x30] sm:$0xff]
          %430 = vst [vmem:[%s416 + $0x30] sm:$0xff] %v429
          %v431 = vld [vmem:[%s415 + $0x38] sm:$0xff]
          %432 = vst [vmem:[%s416 + $0x38] sm:$0xff] %v431
          %v433 = vld [vmem:[%s415 + $0x40] sm:$0xff]
          %434 = vst [vmem:[%s416 + $0x40] sm:$0xff] %v433
          %v435 = vld [vmem:[%s415 + $0x48] sm:$0xff]
          %436 = vst [vmem:[%s416 + $0x48] sm:$0xff] %v435
          %v437 = vld [vmem:[%s415 + $0x50] sm:$0xff]
          %438 = vst [vmem:[%s416 + $0x50] sm:$0xff] %v437
          %v439 = vld [vmem:[%s415 + $0x58] sm:$0xff]
          %440 = vst [vmem:[%s416 + $0x58] sm:$0xff] %v439
          %v441 = vld [vmem:[%s415 + $0x60] sm:$0xff]
          %442 = vst [vmem:[%s416 + $0x60] sm:$0xff] %v441
          %v443 = vld [vmem:[%s415 + $0x68] sm:$0xff]
          %444 = vst [vmem:[%s416 + $0x68] sm:$0xff] %v443
          %v445 = vld [vmem:[%s415 + $0x70] sm:$0xff]
          %446 = vst [vmem:[%s416 + $0x70] sm:$0xff] %v445
          %v447 = vld [vmem:[%s415 + $0x78] sm:$0xff]
          %448 = vst [vmem:[%s416 + $0x78] sm:$0xff] %v447
          %v449 = vld [vmem:[%s415 + $0x80] sm:$0xff]
          %450 = vst [vmem:[%s416 + $0x80] sm:$0xff] %v449
          %v451 = vld [vmem:[%s415 + $0x88] sm:$0xff]
          %452 = vst [vmem:[%s416 + $0x88] sm:$0xff] %v451
          %v453 = vld [vmem:[%s415 + $0x90] sm:$0xff]
          %454 = vst [vmem:[%s416 + $0x90] sm:$0xff] %v453
          %v455 = vld [vmem:[%s415 + $0x98] sm:$0xff]
          %456 = vst [vmem:[%s416 + $0x98] sm:$0xff] %v455
          %v457 = vld [vmem:[%s415 + $0xa0] sm:$0xff]
          %458 = vst [vmem:[%s416 + $0xa0] sm:$0xff] %v457
          %v459 = vld [vmem:[%s415 + $0xa8] sm:$0xff]
          %460 = vst [vmem:[%s416 + $0xa8] sm:$0xff] %v459
          %v461 = vld [vmem:[%s415 + $0xb0] sm:$0xff]
          %462 = vst [vmem:[%s416 + $0xb0] sm:$0xff] %v461
          %v463 = vld [vmem:[%s415 + $0xb8] sm:$0xff]
          %464 = vst [vmem:[%s416 + $0xb8] sm:$0xff] %v463
          %v465 = vld [vmem:[%s415 + $0xc0] sm:$0xff]
          %466 = vst [vmem:[%s416 + $0xc0] sm:$0xff] %v465
          %v467 = vld [vmem:[%s415 + $0xc8] sm:$0xff]
          %468 = vst [vmem:[%s416 + $0xc8] sm:$0xff] %v467
          %v469 = vld [vmem:[%s415 + $0xd0] sm:$0xff]
          %470 = vst [vmem:[%s416 + $0xd0] sm:$0xff] %v469
          %v471 = vld [vmem:[%s415 + $0xd8] sm:$0xff]
          %472 = vst [vmem:[%s416 + $0xd8] sm:$0xff] %v471
          %v473 = vld [vmem:[%s415 + $0xe0] sm:$0xff]
          %474 = vst [vmem:[%s416 + $0xe0] sm:$0xff] %v473
          %v475 = vld [vmem:[%s415 + $0xe8] sm:$0xff]
          %476 = vst [vmem:[%s416 + $0xe8] sm:$0xff] %v475
          %v477 = vld [vmem:[%s415 + $0xf0] sm:$0xff]
          %478 = vst [vmem:[%s416 + $0xf0] sm:$0xff] %v477
          %v479 = vld [vmem:[%s415 + $0xf8] sm:$0xff]
          %480 = vst [vmem:[%s416 + $0xf8] sm:$0xff] %v479
        $region125: #{tpu_custom_call.1} parent=119 // loop_footer
          %s414 = sadd.s32 1, %s410
        $region126: #{tpu_custom_call.1} parent=119 // loop_footer_branch
          %409 = sbr.rel target = $region122
        $region127: #{tpu_custom_call.1} parent=119 // loop_exit
          _
      $region120: #{tpu_custom_call.1} parent=104 // pred_fallthru
        _
      %p481 = pneg %p405
      // Predicated region
      $region128: #{tpu_custom_call.1} parent=104 // pred_check
        _
      $region129: #{tpu_custom_call.1} parent=104 // pred_check_branch
        %483 = sbr.rel (%p405) target = $region131
      $region130: #{tpu_custom_call.1} parent=104 // pred_region
        %s484 = sand.u32 256, 7
      $region131: #{tpu_custom_call.1} parent=104 // pred_fallthru
        _
    $region105: #{tpu_custom_call.1} parent=1 // pred_fallthru
      _
    // Predicated region
    $region106: #{tpu_custom_call.1} parent=1 // pred_check
      %p389 = pneg %p385
    $region107: #{tpu_custom_call.1} parent=1 // pred_check_branch
      %391 = sbr.rel (%p389) target = $region109
    $region108: #{tpu_custom_call.1} parent=1 // pred_region
      %s392 = sshll.u32 1, 256
      %s393 = ssub.s32 %s392, 1
      loop: start=0, step=1, limit=1
      $region110: #{tpu_custom_call.1} parent=108 // loop_pre_header
        _
      $region111: #{tpu_custom_call.1} parent=108 // loop_header
        %s395 = sphi 0, %s399
        %p396 = scmp.ge.s32.totalorder %s395, 1
        %s400 = sphi %s10, %s10
        %s401 = sphi [#allocation5], [#allocation5]
      $region112: #{tpu_custom_call.1} parent=108 // loop_header_branch
        %398 = sbr.rel (%p396) target = $region116
      $region113: #{tpu_custom_call.1} parent=108 // loop_body
        %v402 = vld [vmem:[%s400] sm:%s393]
        %403 = vst [vmem:[%s401] sm:%s393] %v402
      $region114: #{tpu_custom_call.1} parent=108 // loop_footer
        %s399 = sadd.s32 1, %s395
      $region115: #{tpu_custom_call.1} parent=108 // loop_footer_branch
        %394 = sbr.rel target = $region111
      $region116: #{tpu_custom_call.1} parent=108 // loop_exit
        _
    $region109: #{tpu_custom_call.1} parent=1 // pred_fallthru
      _
    // Predicated region
    $region132: #{tpu_custom_call.1} parent=1 // pred_check
      _
    $region133: #{tpu_custom_call.1} parent=1 // pred_check_branch
      %487 = sbr.rel (0) target = $region135
    $region134: #{tpu_custom_call.1} parent=1 // pred_region
      %488 = vsyncadd %s383, 4096
    $region135: #{tpu_custom_call.1} parent=1 // pred_fallthru
      _
    %v489 = vld [vmem:[%s0] sm:$0xff]
    %v490 = vld [vmem:[%s0 + $0x8] sm:$0xff]
    %v491 = vld [vmem:[%s0 + $0x10] sm:$0xff]
    %v492 = vld [vmem:[%s0 + $0x18] sm:$0xff]
    %v493 = vld [vmem:[%s0 + $0x20] sm:$0xff]
    %v494 = vld [vmem:[%s0 + $0x28] sm:$0xff]
    %v495 = vld [vmem:[%s0 + $0x30] sm:$0xff]
    %v496 = vld [vmem:[%s0 + $0x38] sm:$0xff]
    %v497 = vld [vmem:[%s0 + $0x40] sm:$0xff]
    %v498 = vld [vmem:[%s0 + $0x48] sm:$0xff]
    %v499 = vld [vmem:[%s0 + $0x50] sm:$0xff]
    %v500 = vld [vmem:[%s0 + $0x58] sm:$0xff]
    %v501 = vld [vmem:[%s0 + $0x60] sm:$0xff]
    %v502 = vld [vmem:[%s0 + $0x68] sm:$0xff]
    %v503 = vld [vmem:[%s0 + $0x70] sm:$0xff]
    %v504 = vld [vmem:[%s0 + $0x78] sm:$0xff]
    %v505 = vld [vmem:[%s0 + $0x80] sm:$0xff]
    %v506 = vld [vmem:[%s0 + $0x88] sm:$0xff]
    %v507 = vld [vmem:[%s0 + $0x90] sm:$0xff]
    %v508 = vld [vmem:[%s0 + $0x98] sm:$0xff]
    %v509 = vld [vmem:[%s0 + $0xa0] sm:$0xff]
    %v510 = vld [vmem:[%s0 + $0xa8] sm:$0xff]
    %v511 = vld [vmem:[%s0 + $0xb0] sm:$0xff]
    %v512 = vld [vmem:[%s0 + $0xb8] sm:$0xff]
    %v513 = vld [vmem:[%s0 + $0xc0] sm:$0xff]
    %v514 = vld [vmem:[%s0 + $0xc8] sm:$0xff]
    %v515 = vld [vmem:[%s0 + $0xd0] sm:$0xff]
    %v516 = vld [vmem:[%s0 + $0xd8] sm:$0xff]
    %v517 = vld [vmem:[%s0 + $0xe0] sm:$0xff]
    %v518 = vld [vmem:[%s0 + $0xe8] sm:$0xff]
    %v519 = vld [vmem:[%s0 + $0xf0] sm:$0xff]
    %v520 = vld [vmem:[%s0 + $0xf8] sm:$0xff]
    %v521 = vld [vmem:[%s1] sm:$0xff]
    %v522 = vld [vmem:[%s1 + $0x8] sm:$0x33]
    %v523 = vpack.c.bf16 %v490, %v489
    %v524 = vpack.c.bf16 %v492, %v491
    %v525 = vpack.c.bf16 %v494, %v493
    %v526 = vpack.c.bf16 %v496, %v495
    %v527 = vpack.c.bf16 %v498, %v497
    %v528 = vpack.c.bf16 %v500, %v499
    %v529 = vpack.c.bf16 %v502, %v501
    %v530 = vpack.c.bf16 %v504, %v503
    %v531 = vpack.c.bf16 %v506, %v505
    %v532 = vpack.c.bf16 %v508, %v507
    %v533 = vpack.c.bf16 %v510, %v509
    %v534 = vpack.c.bf16 %v512, %v511
    %v535 = vpack.c.bf16 %v514, %v513
    %v536 = vpack.c.bf16 %v516, %v515
    %v537 = vpack.c.bf16 %v518, %v517
    %v538 = vpack.c.bf16 %v520, %v519
    %v539 = vld [vmem:[%s2] sm:$0x3]
    %v541 = vlaneseq
    %v542 = vshrl.u32 %v541, 7
    %v543 = vsub.s32 0, %v542
    %v544 = vrot.slane %v539, %v543
    %v545 = vlaneseq
    %v546 = vshrl.u32 %v545, 7
    %v547 = vsub.s32 1, %v546
    %v548 = vrot.slane %v539, %v547
    %v553 = vunpack.c.l.b16 %v521
    %v554 = vunpack.c.h.b16 %v521
    %v555 = vunpack.c.l.b16 %v522
    %v556 = vunpack.c.h.b16 %v522
    %v557 = vpack.c.b16 %v555, %v553
    %v558 = vpack.c.b16 %v556, %v554
    %vm559 = vcmask 97280
    %v561 = vsel %vm559, %v523, 0
    %v564 = vsel %vm559, %v524, 0
    %v567 = vsel %vm559, %v525, 0
    %v570 = vsel %vm559, %v526, 0
    %v573 = vsel %vm559, %v527, 0
    %v576 = vsel %vm559, %v528, 0
    %v579 = vsel %vm559, %v529, 0
    %v582 = vsel %vm559, %v530, 0
    %v585 = vsel %vm559, %v531, 0
    %v588 = vsel %vm559, %v532, 0
    %v591 = vsel %vm559, %v533, 0
    %v594 = vsel %vm559, %v534, 0
    %v597 = vsel %vm559, %v535, 0
    %v600 = vsel %vm559, %v536, 0
    %v603 = vsel %vm559, %v537, 0
    %v606 = vsel %vm559, %v538, 0
    %vm608 = vcmask 1045504
    %v610 = vsel %vm608, %v557, 0
    %v613 = vsel %vm608, %v558, 0
    %615 = vmatprep.subr.bf16.mxu0 0
    %616 = vmatpush1.bf16.msra.mxu0 0
    %617 = vmatprep.subr.bf16.mxu0 0
    %618 = vmatpush1.bf16.msra.mxu0 0
    %619 = vmatprep.subr.bf16.mxu0 0
    %620 = vmatpush1.bf16.msra.mxu0 0
    %621 = vmatprep.subr.bf16.mxu0 0
    %622 = vmatpush1.bf16.msra.mxu0 0
    %623 = vmatprep.subr.bf16.mxu0 0
    %624 = vmatpush1.bf16.msra.mxu0 0
    %625 = vmatprep.subr.bf16.mxu0 0
    %626 = vmatpush1.bf16.msra.mxu0 0
    %627 = vmatprep.subr.bf16.mxu0 0
    %628 = vmatpush1.bf16.msra.mxu0 0
    %629 = vmatprep.subr.bf16.mxu0 %v613
    %630 = vmatpush1.bf16.msra.mxu0 %v610
    %631 = vmatprep.subr.bf16.mxu0 0
    %632 = vmatpush2.bf16.msra.mxu0 0
    %633 = vmatprep.subr.bf16.mxu0 0
    %634 = vmatpush2.bf16.msra.mxu0 0
    %635 = vmatprep.subr.bf16.mxu0 0
    %636 = vmatpush2.bf16.msra.mxu0 0
    %637 = vmatprep.subr.bf16.mxu0 0
    %638 = vmatpush2.bf16.msra.mxu0 0
    %639 = vmatprep.subr.bf16.mxu0 0
    %640 = vmatpush2.bf16.msra.mxu0 0
    %641 = vmatprep.subr.bf16.mxu0 0
    %642 = vmatpush2.bf16.msra.mxu0 0
    %643 = vmatprep.subr.bf16.mxu0 0
    %644 = vmatpush2.bf16.msra.mxu0 0
    %645 = vmatprep.subr.bf16.mxu0 0
    %646 = vmatpush2.bf16.msra.mxu0 0
    %647 = vmatprep.mubr.bf16.mxu0 0
    %648 = vmatmul.mubr.bf16.gmra.mxu0 %v561
    %v649 = vpop.f32.mrf.mxu0
    %v650 = vadd.f32 %v544, %v649
    %v651 = vpop.f32.mrf.mxu0
    %v652 = vadd.f32 %v548, %v651
    %v653 = vpop.f32.mrf.mxu0
    %v654 = vadd.f32 %v544, %v653
    %v655 = vpop.f32.mrf.mxu0
    %v656 = vadd.f32 %v548, %v655
    %657 = vmatprep.mubr.bf16.mxu0 0
    %658 = vmatmul.mubr.bf16.gmra.mxu0 %v564
    %v659 = vpop.f32.mrf.mxu0
    %v660 = vadd.f32 %v544, %v659
    %v661 = vpop.f32.mrf.mxu0
    %v662 = vadd.f32 %v548, %v661
    %v663 = vpop.f32.mrf.mxu0
    %v664 = vadd.f32 %v544, %v663
    %v665 = vpop.f32.mrf.mxu0
    %v666 = vadd.f32 %v548, %v665
    %667 = vmatprep.mubr.bf16.mxu0 0
    %668 = vmatmul.mubr.bf16.gmra.mxu0 %v567
    %v669 = vpop.f32.mrf.mxu0
    %v670 = vadd.f32 %v544, %v669
    %v671 = vpop.f32.mrf.mxu0
    %v672 = vadd.f32 %v548, %v671
    %v673 = vpop.f32.mrf.mxu0
    %v674 = vadd.f32 %v544, %v673
    %v675 = vpop.f32.mrf.mxu0
    %v676 = vadd.f32 %v548, %v675
    %677 = vmatprep.mubr.bf16.mxu0 0
    %678 = vmatmul.mubr.bf16.gmra.mxu0 %v570
    %v679 = vpop.f32.mrf.mxu0
    %v680 = vadd.f32 %v544, %v679
    %v681 = vpop.f32.mrf.mxu0
    %v682 = vadd.f32 %v548, %v681
    %v683 = vpop.f32.mrf.mxu0
    %v684 = vadd.f32 %v544, %v683
    %v685 = vpop.f32.mrf.mxu0
    %v686 = vadd.f32 %v548, %v685
    %687 = vmatprep.mubr.bf16.mxu0 0
    %688 = vmatmul.mubr.bf16.gmra.mxu0 %v573
    %v689 = vpop.f32.mrf.mxu0
    %v690 = vadd.f32 %v544, %v689
    %v691 = vpop.f32.mrf.mxu0
    %v692 = vadd.f32 %v548, %v691
    %v693 = vpop.f32.mrf.mxu0
    %v694 = vadd.f32 %v544, %v693
    %v695 = vpop.f32.mrf.mxu0
    %v696 = vadd.f32 %v548, %v695
    %697 = vmatprep.mubr.bf16.mxu0 0
    %698 = vmatmul.mubr.bf16.gmra.mxu0 %v576
    %v699 = vpop.f32.mrf.mxu0
    %v700 = vadd.f32 %v544, %v699
    %v701 = vpop.f32.mrf.mxu0
    %v702 = vadd.f32 %v548, %v701
    %v703 = vpop.f32.mrf.mxu0
    %v704 = vadd.f32 %v544, %v703
    %v705 = vpop.f32.mrf.mxu0
    %v706 = vadd.f32 %v548, %v705
    %707 = vmatprep.mubr.bf16.mxu0 0
    %708 = vmatmul.mubr.bf16.gmra.mxu0 %v579
    %v709 = vpop.f32.mrf.mxu0
    %v710 = vadd.f32 %v544, %v709
    %v711 = vpop.f32.mrf.mxu0
    %v712 = vadd.f32 %v548, %v711
    %v713 = vpop.f32.mrf.mxu0
    %v714 = vadd.f32 %v544, %v713
    %v715 = vpop.f32.mrf.mxu0
    %v716 = vadd.f32 %v548, %v715
    %717 = vmatprep.mubr.bf16.mxu0 0
    %718 = vmatmul.mubr.bf16.gmra.mxu0 %v582
    %v719 = vpop.f32.mrf.mxu0
    %v720 = vadd.f32 %v544, %v719
    %v721 = vpop.f32.mrf.mxu0
    %v722 = vadd.f32 %v548, %v721
    %v723 = vpop.f32.mrf.mxu0
    %v724 = vadd.f32 %v544, %v723
    %v725 = vpop.f32.mrf.mxu0
    %v726 = vadd.f32 %v548, %v725
    %727 = vmatprep.mubr.bf16.mxu0 0
    %728 = vmatmul.mubr.bf16.gmra.mxu0 %v585
    %v729 = vpop.f32.mrf.mxu0
    %v730 = vadd.f32 %v544, %v729
    %v731 = vpop.f32.mrf.mxu0
    %v732 = vadd.f32 %v548, %v731
    %v733 = vpop.f32.mrf.mxu0
    %v734 = vadd.f32 %v544, %v733
    %v735 = vpop.f32.mrf.mxu0
    %v736 = vadd.f32 %v548, %v735
    %737 = vmatprep.mubr.bf16.mxu0 0
    %738 = vmatmul.mubr.bf16.gmra.mxu0 %v588
    %v739 = vpop.f32.mrf.mxu0
    %v740 = vadd.f32 %v544, %v739
    %v741 = vpop.f32.mrf.mxu0
    %v742 = vadd.f32 %v548, %v741
    %v743 = vpop.f32.mrf.mxu0
    %v744 = vadd.f32 %v544, %v743
    %v745 = vpop.f32.mrf.mxu0
    %v746 = vadd.f32 %v548, %v745
    %747 = vmatprep.mubr.bf16.mxu0 0
    %748 = vmatmul.mubr.bf16.gmra.mxu0 %v591
    %v749 = vpop.f32.mrf.mxu0
    %v750 = vadd.f32 %v544, %v749
    %v751 = vpop.f32.mrf.mxu0
    %v752 = vadd.f32 %v548, %v751
    %v753 = vpop.f32.mrf.mxu0
    %v754 = vadd.f32 %v544, %v753
    %v755 = vpop.f32.mrf.mxu0
    %v756 = vadd.f32 %v548, %v755
    %757 = vmatprep.mubr.bf16.mxu0 0
    %758 = vmatmul.mubr.bf16.gmra.mxu0 %v594
    %v759 = vpop.f32.mrf.mxu0
    %v760 = vadd.f32 %v544, %v759
    %v761 = vpop.f32.mrf.mxu0
    %v762 = vadd.f32 %v548, %v761
    %v763 = vpop.f32.mrf.mxu0
    %v764 = vadd.f32 %v544, %v763
    %v765 = vpop.f32.mrf.mxu0
    %v766 = vadd.f32 %v548, %v765
    %767 = vmatprep.mubr.bf16.mxu0 0
    %768 = vmatmul.mubr.bf16.gmra.mxu0 %v597
    %v769 = vpop.f32.mrf.mxu0
    %v770 = vadd.f32 %v544, %v769
    %v771 = vpop.f32.mrf.mxu0
    %v772 = vadd.f32 %v548, %v771
    %v773 = vpop.f32.mrf.mxu0
    %v774 = vadd.f32 %v544, %v773
    %v775 = vpop.f32.mrf.mxu0
    %v776 = vadd.f32 %v548, %v775
    %777 = vmatprep.mubr.bf16.mxu0 0
    %778 = vmatmul.mubr.bf16.gmra.mxu0 %v600
    %v779 = vpop.f32.mrf.mxu0
    %v780 = vadd.f32 %v544, %v779
    %v781 = vpop.f32.mrf.mxu0
    %v782 = vadd.f32 %v548, %v781
    %v783 = vpop.f32.mrf.mxu0
    %v784 = vadd.f32 %v544, %v783
    %v785 = vpop.f32.mrf.mxu0
    %v786 = vadd.f32 %v548, %v785
    %787 = vmatprep.mubr.bf16.mxu0 0
    %788 = vmatmul.mubr.bf16.gmra.mxu0 %v603
    %v789 = vpop.f32.mrf.mxu0
    %v790 = vadd.f32 %v544, %v789
    %v791 = vpop.f32.mrf.mxu0
    %v792 = vadd.f32 %v548, %v791
    %v793 = vpop.f32.mrf.mxu0
    %v794 = vadd.f32 %v544, %v793
    %v795 = vpop.f32.mrf.mxu0
    %v796 = vadd.f32 %v548, %v795
    %797 = vmatprep.mubr.bf16.mxu0 0
    %798 = vmatmul.mubr.bf16.gmra.mxu0 %v606
    %v799 = vpop.f32.mrf.mxu0
    %v800 = vadd.f32 %v544, %v799
    %v801 = vpop.f32.mrf.mxu0
    %v802 = vadd.f32 %v548, %v801
    %v803 = vpop.f32.mrf.mxu0
    %v804 = vadd.f32 %v544, %v803
    %v805 = vpop.f32.mrf.mxu0
    %v806 = vadd.f32 %v548, %v805
    %807 = vdwg.mxu0
    %v808 = vmax.f32 %v650, 0.0
    %v809 = vmax.f32 %v652, 0.0
    %v810 = vmax.f32 %v654, 0.0
    %v811 = vmax.f32 %v656, 0.0
    %v812 = vmax.f32 %v660, 0.0
    %v813 = vmax.f32 %v662, 0.0
    %v814 = vmax.f32 %v664, 0.0
    %v815 = vmax.f32 %v666, 0.0
    %v816 = vmax.f32 %v670, 0.0
    %v817 = vmax.f32 %v672, 0.0
    %v818 = vmax.f32 %v674, 0.0
    %v819 = vmax.f32 %v676, 0.0
    %v820 = vmax.f32 %v680, 0.0
    %v821 = vmax.f32 %v682, 0.0
    %v822 = vmax.f32 %v684, 0.0
    %v823 = vmax.f32 %v686, 0.0
    %v824 = vmax.f32 %v690, 0.0
    %v825 = vmax.f32 %v692, 0.0
    %v826 = vmax.f32 %v694, 0.0
    %v827 = vmax.f32 %v696, 0.0
    %v828 = vmax.f32 %v700, 0.0
    %v829 = vmax.f32 %v702, 0.0
    %v830 = vmax.f32 %v704, 0.0
    %v831 = vmax.f32 %v706, 0.0
    %v832 = vmax.f32 %v710, 0.0
    %v833 = vmax.f32 %v712, 0.0
    %v834 = vmax.f32 %v714, 0.0
    %v835 = vmax.f32 %v716, 0.0
    %v836 = vmax.f32 %v720, 0.0
    %v837 = vmax.f32 %v722, 0.0
    %v838 = vmax.f32 %v724, 0.0
    %v839 = vmax.f32 %v726, 0.0
    %v840 = vmax.f32 %v730, 0.0
    %v841 = vmax.f32 %v732, 0.0
    %v842 = vmax.f32 %v734, 0.0
    %v843 = vmax.f32 %v736, 0.0
    %v844 = vmax.f32 %v740, 0.0
    %v845 = vmax.f32 %v742, 0.0
    %v846 = vmax.f32 %v744, 0.0
    %v847 = vmax.f32 %v746, 0.0
    %v848 = vmax.f32 %v750, 0.0
    %v849 = vmax.f32 %v752, 0.0
    %v850 = vmax.f32 %v754, 0.0
    %v851 = vmax.f32 %v756, 0.0
    %v852 = vmax.f32 %v760, 0.0
    %v853 = vmax.f32 %v762, 0.0
    %v854 = vmax.f32 %v764, 0.0
    %v855 = vmax.f32 %v766, 0.0
    %v856 = vmax.f32 %v770, 0.0
    %v857 = vmax.f32 %v772, 0.0
    %v858 = vmax.f32 %v774, 0.0
    %v859 = vmax.f32 %v776, 0.0
    %v860 = vmax.f32 %v780, 0.0
    %v861 = vmax.f32 %v782, 0.0
    %v862 = vmax.f32 %v784, 0.0
    %v863 = vmax.f32 %v786, 0.0
    %v864 = vmax.f32 %v790, 0.0
    %v865 = vmax.f32 %v792, 0.0
    %v866 = vmax.f32 %v794, 0.0
    %v867 = vmax.f32 %v796, 0.0
    %v868 = vmax.f32 %v800, 0.0
    %v869 = vmax.f32 %v802, 0.0
    %v870 = vmax.f32 %v804, 0.0
    %v871 = vmax.f32 %v806, 0.0
    %v872 = vmax.f32 %v808, %v810
    %v873 = vmax.f32 %v809, %v811
    %v874 = vmax.f32 %v812, %v814
    %v875 = vmax.f32 %v813, %v815
    %v876 = vmax.f32 %v816, %v818
    %v877 = vmax.f32 %v817, %v819
    %v878 = vmax.f32 %v820, %v822
    %v879 = vmax.f32 %v821, %v823
    %v880 = vmax.f32 %v824, %v826
    %v881 = vmax.f32 %v825, %v827
    %v882 = vmax.f32 %v828, %v830
    %v883 = vmax.f32 %v829, %v831
    %v884 = vmax.f32 %v832, %v834
    %v885 = vmax.f32 %v833, %v835
    %v886 = vmax.f32 %v836, %v838
    %v887 = vmax.f32 %v837, %v839
    %v888 = vmax.f32 %v840, %v842
    %v889 = vmax.f32 %v841, %v843
    %v890 = vmax.f32 %v844, %v846
    %v891 = vmax.f32 %v845, %v847
    %v892 = vmax.f32 %v848, %v850
    %v893 = vmax.f32 %v849, %v851
    %v894 = vmax.f32 %v852, %v854
    %v895 = vmax.f32 %v853, %v855
    %v896 = vmax.f32 %v856, %v858
    %v897 = vmax.f32 %v857, %v859
    %v898 = vmax.f32 %v860, %v862
    %v899 = vmax.f32 %v861, %v863
    %v900 = vmax.f32 %v864, %v866
    %v901 = vmax.f32 %v865, %v867
    %v902 = vmax.f32 %v868, %v870
    %v903 = vmax.f32 %v869, %v871
    %s904 = smul.u32 4, 96
    %s905 = smul.u32 %s904, 4
    %s906 = sshll.u32 %s905, 4
    %907 = dma.done [#allocation6], %s906
    %v908 = vld [vmem:[#allocation2] sm:$0xff]
    %v909 = vld [vmem:[#allocation2 + $0x8] sm:$0xff]
    %v910 = vld [vmem:[#allocation2 + $0x10] sm:$0xff]
    %v911 = vld [vmem:[#allocation2 + $0x18] sm:$0xff]
    %v912 = vld [vmem:[#allocation2 + $0x20] sm:$0xff]
    %v913 = vld [vmem:[#allocation2 + $0x28] sm:$0xff]
    %v914 = vld [vmem:[#allocation2 + $0x30] sm:$0xff]
    %v915 = vld [vmem:[#allocation2 + $0x38] sm:$0xff]
    %v916 = vld [vmem:[#allocation2 + $0x40] sm:$0xff]
    %v917 = vld [vmem:[#allocation2 + $0x48] sm:$0xff]
    %v918 = vld [vmem:[#allocation2 + $0x50] sm:$0xff]
    %v919 = vld [vmem:[#allocation2 + $0x58] sm:$0xff]
    %v920 = vld [vmem:[#allocation2 + $0x60] sm:$0xff]
    %v921 = vld [vmem:[#allocation2 + $0x68] sm:$0xff]
    %v922 = vld [vmem:[#allocation2 + $0x70] sm:$0xff]
    %v923 = vld [vmem:[#allocation2 + $0x78] sm:$0xff]
    %v924 = vld [vmem:[#allocation2 + $0x80] sm:$0xff]
    %v925 = vld [vmem:[#allocation2 + $0x88] sm:$0xff]
    %v926 = vld [vmem:[#allocation2 + $0x90] sm:$0xff]
    %v927 = vld [vmem:[#allocation2 + $0x98] sm:$0xff]
    %v928 = vld [vmem:[#allocation2 + $0xa0] sm:$0xff]
    %v929 = vld [vmem:[#allocation2 + $0xa8] sm:$0xff]
    %v930 = vld [vmem:[#allocation2 + $0xb0] sm:$0xff]
    %v931 = vld [vmem:[#allocation2 + $0xb8] sm:$0xff]
    %v932 = vld [vmem:[#allocation2 + $0xc0] sm:$0xff]
    %v933 = vld [vmem:[#allocation2 + $0xc8] sm:$0xff]
    %v934 = vld [vmem:[#allocation2 + $0xd0] sm:$0xff]
    %v935 = vld [vmem:[#allocation2 + $0xd8] sm:$0xff]
    %v936 = vld [vmem:[#allocation2 + $0xe0] sm:$0xff]
    %v937 = vld [vmem:[#allocation2 + $0xe8] sm:$0xff]
    %v938 = vld [vmem:[#allocation2 + $0xf0] sm:$0xff]
    %v939 = vld [vmem:[#allocation2 + $0xf8] sm:$0xff]
    %v940 = vld [vmem:[#allocation2 + $0x100] sm:$0xff]
    %v941 = vld [vmem:[#allocation2 + $0x108] sm:$0xff]
    %v942 = vld [vmem:[#allocation2 + $0x110] sm:$0xff]
    %v943 = vld [vmem:[#allocation2 + $0x118] sm:$0xff]
    %v944 = vld [vmem:[#allocation2 + $0x120] sm:$0xff]
    %v945 = vld [vmem:[#allocation2 + $0x128] sm:$0xff]
    %v946 = vld [vmem:[#allocation2 + $0x130] sm:$0xff]
    %v947 = vld [vmem:[#allocation2 + $0x138] sm:$0xff]
    %v948 = vld [vmem:[#allocation2 + $0x140] sm:$0xff]
    %v949 = vld [vmem:[#allocation2 + $0x148] sm:$0xff]
    %v950 = vld [vmem:[#allocation2 + $0x150] sm:$0xff]
    %v951 = vld [vmem:[#allocation2 + $0x158] sm:$0xff]
    %v952 = vld [vmem:[#allocation2 + $0x160] sm:$0xff]
    %v953 = vld [vmem:[#allocation2 + $0x168] sm:$0xff]
    %v954 = vld [vmem:[#allocation2 + $0x170] sm:$0xff]
    %v955 = vld [vmem:[#allocation2 + $0x178] sm:$0xff]
    %v956 = vld [vmem:[#allocation2 + $0x180] sm:$0xff]
    %v957 = vld [vmem:[#allocation2 + $0x188] sm:$0xff]
    %v958 = vld [vmem:[#allocation2 + $0x190] sm:$0xff]
    %v959 = vld [vmem:[#allocation2 + $0x198] sm:$0xff]
    %v960 = vld [vmem:[#allocation2 + $0x1a0] sm:$0xff]
    %v961 = vld [vmem:[#allocation2 + $0x1a8] sm:$0xff]
    %v962 = vld [vmem:[#allocation2 + $0x1b0] sm:$0xff]
    %v963 = vld [vmem:[#allocation2 + $0x1b8] sm:$0xff]
    %v964 = vld [vmem:[#allocation2 + $0x1c0] sm:$0xff]
    %v965 = vld [vmem:[#allocation2 + $0x1c8] sm:$0xff]
    %v966 = vld [vmem:[#allocation2 + $0x1d0] sm:$0xff]
    %v967 = vld [vmem:[#allocation2 + $0x1d8] sm:$0xff]
    %v968 = vld [vmem:[#allocation2 + $0x1e0] sm:$0xff]
    %v969 = vld [vmem:[#allocation2 + $0x1e8] sm:$0xff]
    %v970 = vld [vmem:[#allocation2 + $0x1f0] sm:$0xff]
    %v971 = vld [vmem:[#allocation2 + $0x1f8] sm:$0xff]
    %v972 = vld [vmem:[#allocation2 + $0x200] sm:$0xff]
    %v973 = vld [vmem:[#allocation2 + $0x208] sm:$0xff]
    %v974 = vld [vmem:[#allocation2 + $0x210] sm:$0xff]
    %v975 = vld [vmem:[#allocation2 + $0x218] sm:$0xff]
    %v976 = vld [vmem:[#allocation2 + $0x220] sm:$0xff]
    %v977 = vld [vmem:[#allocation2 + $0x228] sm:$0xff]
    %v978 = vld [vmem:[#allocation2 + $0x230] sm:$0xff]
    %v979 = vld [vmem:[#allocation2 + $0x238] sm:$0xff]
    %v980 = vld [vmem:[#allocation2 + $0x240] sm:$0xff]
    %v981 = vld [vmem:[#allocation2 + $0x248] sm:$0xff]
    %v982 = vld [vmem:[#allocation2 + $0x250] sm:$0xff]
    %v983 = vld [vmem:[#allocation2 + $0x258] sm:$0xff]
    %v984 = vld [vmem:[#allocation2 + $0x260] sm:$0xff]
    %v985 = vld [vmem:[#allocation2 + $0x268] sm:$0xff]
    %v986 = vld [vmem:[#allocation2 + $0x270] sm:$0xff]
    %v987 = vld [vmem:[#allocation2 + $0x278] sm:$0xff]
    %v988 = vld [vmem:[#allocation2 + $0x280] sm:$0xff]
    %v989 = vld [vmem:[#allocation2 + $0x288] sm:$0xff]
    %v990 = vld [vmem:[#allocation2 + $0x290] sm:$0xff]
    %v991 = vld [vmem:[#allocation2 + $0x298] sm:$0xff]
    %v992 = vld [vmem:[#allocation2 + $0x2a0] sm:$0xff]
    %v993 = vld [vmem:[#allocation2 + $0x2a8] sm:$0xff]
    %v994 = vld [vmem:[#allocation2 + $0x2b0] sm:$0xff]
    %v995 = vld [vmem:[#allocation2 + $0x2b8] sm:$0xff]
    %v996 = vld [vmem:[#allocation2 + $0x2c0] sm:$0xff]
    %v997 = vld [vmem:[#allocation2 + $0x2c8] sm:$0xff]
    %v998 = vld [vmem:[#allocation2 + $0x2d0] sm:$0xff]
    %v999 = vld [vmem:[#allocation2 + $0x2d8] sm:$0xff]
    %v1000 = vld [vmem:[#allocation2 + $0x2e0] sm:$0xff]
    %v1001 = vld [vmem:[#allocation2 + $0x2e8] sm:$0xff]
    %v1002 = vld [vmem:[#allocation2 + $0x2f0] sm:$0xff]
    %v1003 = vld [vmem:[#allocation2 + $0x2f8] sm:$0xff]
    %v1004 = vld [vmem:[#allocation2 + $0x300] sm:$0xff]
    %v1005 = vld [vmem:[#allocation2 + $0x308] sm:$0xff]
    %v1006 = vld [vmem:[#allocation2 + $0x310] sm:$0xff]
    %v1007 = vld [vmem:[#allocation2 + $0x318] sm:$0xff]
    %v1008 = vld [vmem:[#allocation2 + $0x320] sm:$0xff]
    %v1009 = vld [vmem:[#allocation2 + $0x328] sm:$0xff]
    %v1010 = vld [vmem:[#allocation2 + $0x330] sm:$0xff]
    %v1011 = vld [vmem:[#allocation2 + $0x338] sm:$0xff]
    %v1012 = vld [vmem:[#allocation2 + $0x340] sm:$0xff]
    %v1013 = vld [vmem:[#allocation2 + $0x348] sm:$0xff]
    %v1014 = vld [vmem:[#allocation2 + $0x350] sm:$0xff]
    %v1015 = vld [vmem:[#allocation2 + $0x358] sm:$0xff]
    %v1016 = vld [vmem:[#allocation2 + $0x360] sm:$0xff]
    %v1017 = vld [vmem:[#allocation2 + $0x368] sm:$0xff]
    %v1018 = vld [vmem:[#allocation2 + $0x370] sm:$0xff]
    %v1019 = vld [vmem:[#allocation2 + $0x378] sm:$0xff]
    %v1020 = vld [vmem:[#allocation2 + $0x380] sm:$0xff]
    %v1021 = vld [vmem:[#allocation2 + $0x388] sm:$0xff]
    %v1022 = vld [vmem:[#allocation2 + $0x390] sm:$0xff]
    %v1023 = vld [vmem:[#allocation2 + $0x398] sm:$0xff]
    %v1024 = vld [vmem:[#allocation2 + $0x3a0] sm:$0xff]
    %v1025 = vld [vmem:[#allocation2 + $0x3a8] sm:$0xff]
    %v1026 = vld [vmem:[#allocation2 + $0x3b0] sm:$0xff]
    %v1027 = vld [vmem:[#allocation2 + $0x3b8] sm:$0xff]
    %v1028 = vld [vmem:[#allocation2 + $0x3c0] sm:$0xff]
    %v1029 = vld [vmem:[#allocation2 + $0x3c8] sm:$0xff]
    %v1030 = vld [vmem:[#allocation2 + $0x3d0] sm:$0xff]
    %v1031 = vld [vmem:[#allocation2 + $0x3d8] sm:$0xff]
    %v1032 = vld [vmem:[#allocation2 + $0x3e0] sm:$0xff]
    %v1033 = vld [vmem:[#allocation2 + $0x3e8] sm:$0xff]
    %v1034 = vld [vmem:[#allocation2 + $0x3f0] sm:$0xff]
    %v1035 = vld [vmem:[#allocation2 + $0x3f8] sm:$0xff]
    %v1036 = vld [vmem:[#allocation2 + $0x400] sm:$0xff]
    %v1037 = vld [vmem:[#allocation2 + $0x408] sm:$0xff]
    %v1038 = vld [vmem:[#allocation2 + $0x410] sm:$0xff]
    %v1039 = vld [vmem:[#allocation2 + $0x418] sm:$0xff]
    %v1040 = vld [vmem:[#allocation2 + $0x420] sm:$0xff]
    %v1041 = vld [vmem:[#allocation2 + $0x428] sm:$0xff]
    %v1042 = vld [vmem:[#allocation2 + $0x430] sm:$0xff]
    %v1043 = vld [vmem:[#allocation2 + $0x438] sm:$0xff]
    %v1044 = vld [vmem:[#allocation2 + $0x440] sm:$0xff]
    %v1045 = vld [vmem:[#allocation2 + $0x448] sm:$0xff]
    %v1046 = vld [vmem:[#allocation2 + $0x450] sm:$0xff]
    %v1047 = vld [vmem:[#allocation2 + $0x458] sm:$0xff]
    %v1048 = vld [vmem:[#allocation2 + $0x460] sm:$0xff]
    %v1049 = vld [vmem:[#allocation2 + $0x468] sm:$0xff]
    %v1050 = vld [vmem:[#allocation2 + $0x470] sm:$0xff]
    %v1051 = vld [vmem:[#allocation2 + $0x478] sm:$0xff]
    %v1052 = vld [vmem:[#allocation2 + $0x480] sm:$0xff]
    %v1053 = vld [vmem:[#allocation2 + $0x488] sm:$0xff]
    %v1054 = vld [vmem:[#allocation2 + $0x490] sm:$0xff]
    %v1055 = vld [vmem:[#allocation2 + $0x498] sm:$0xff]
    %v1056 = vld [vmem:[#allocation2 + $0x4a0] sm:$0xff]
    %v1057 = vld [vmem:[#allocation2 + $0x4a8] sm:$0xff]
    %v1058 = vld [vmem:[#allocation2 + $0x4b0] sm:$0xff]
    %v1059 = vld [vmem:[#allocation2 + $0x4b8] sm:$0xff]
    %v1060 = vld [vmem:[#allocation2 + $0x4c0] sm:$0xff]
    %v1061 = vld [vmem:[#allocation2 + $0x4c8] sm:$0xff]
    %v1062 = vld [vmem:[#allocation2 + $0x4d0] sm:$0xff]
    %v1063 = vld [vmem:[#allocation2 + $0x4d8] sm:$0xff]
    %v1064 = vld [vmem:[#allocation2 + $0x4e0] sm:$0xff]
    %v1065 = vld [vmem:[#allocation2 + $0x4e8] sm:$0xff]
    %v1066 = vld [vmem:[#allocation2 + $0x4f0] sm:$0xff]
    %v1067 = vld [vmem:[#allocation2 + $0x4f8] sm:$0xff]
    %v1068 = vld [vmem:[#allocation2 + $0x500] sm:$0xff]
    %v1069 = vld [vmem:[#allocation2 + $0x508] sm:$0xff]
    %v1070 = vld [vmem:[#allocation2 + $0x510] sm:$0xff]
    %v1071 = vld [vmem:[#allocation2 + $0x518] sm:$0xff]
    %v1072 = vld [vmem:[#allocation2 + $0x520] sm:$0xff]
    %v1073 = vld [vmem:[#allocation2 + $0x528] sm:$0xff]
    %v1074 = vld [vmem:[#allocation2 + $0x530] sm:$0xff]
    %v1075 = vld [vmem:[#allocation2 + $0x538] sm:$0xff]
    %v1076 = vld [vmem:[#allocation2 + $0x540] sm:$0xff]
    %v1077 = vld [vmem:[#allocation2 + $0x548] sm:$0xff]
    %v1078 = vld [vmem:[#allocation2 + $0x550] sm:$0xff]
    %v1079 = vld [vmem:[#allocation2 + $0x558] sm:$0xff]
    %v1080 = vld [vmem:[#allocation2 + $0x560] sm:$0xff]
    %v1081 = vld [vmem:[#allocation2 + $0x568] sm:$0xff]
    %v1082 = vld [vmem:[#allocation2 + $0x570] sm:$0xff]
    %v1083 = vld [vmem:[#allocation2 + $0x578] sm:$0xff]
    %v1084 = vld [vmem:[#allocation2 + $0x580] sm:$0xff]
    %v1085 = vld [vmem:[#allocation2 + $0x588] sm:$0xff]
    %v1086 = vld [vmem:[#allocation2 + $0x590] sm:$0xff]
    %v1087 = vld [vmem:[#allocation2 + $0x598] sm:$0xff]
    %v1088 = vld [vmem:[#allocation2 + $0x5a0] sm:$0xff]
    %v1089 = vld [vmem:[#allocation2 + $0x5a8] sm:$0xff]
    %v1090 = vld [vmem:[#allocation2 + $0x5b0] sm:$0xff]
    %v1091 = vld [vmem:[#allocation2 + $0x5b8] sm:$0xff]
    %v1092 = vld [vmem:[#allocation2 + $0x5c0] sm:$0xff]
    %v1093 = vld [vmem:[#allocation2 + $0x5c8] sm:$0xff]
    %v1094 = vld [vmem:[#allocation2 + $0x5d0] sm:$0xff]
    %v1095 = vld [vmem:[#allocation2 + $0x5d8] sm:$0xff]
    %v1096 = vld [vmem:[#allocation2 + $0x5e0] sm:$0xff]
    %v1097 = vld [vmem:[#allocation2 + $0x5e8] sm:$0xff]
    %v1098 = vld [vmem:[#allocation2 + $0x5f0] sm:$0xff]
    %v1099 = vld [vmem:[#allocation2 + $0x5f8] sm:$0xff]
    %v1100 = vpack.c.bf16 %v872, 0.0
    %v1101 = vpack.c.bf16 %v873, 0.0
    %v1102 = vpack.c.bf16 %v874, %v872
    %v1103 = vpack.c.bf16 %v875, %v873
    %v1104 = vpack.c.bf16 %v876, %v874
    %v1105 = vpack.c.bf16 %v877, %v875
    %v1106 = vpack.c.bf16 %v878, %v876
    %v1107 = vpack.c.bf16 %v879, %v877
    %v1108 = vpack.c.bf16 %v880, %v878
    %v1109 = vpack.c.bf16 %v881, %v879
    %v1110 = vpack.c.bf16 %v882, %v880
    %v1111 = vpack.c.bf16 %v883, %v881
    %v1112 = vpack.c.bf16 %v884, %v882
    %v1113 = vpack.c.bf16 %v885, %v883
    %v1114 = vpack.c.bf16 %v886, %v884
    %v1115 = vpack.c.bf16 %v887, %v885
    %v1116 = vpack.c.bf16 %v888, %v886
    %v1117 = vpack.c.bf16 %v889, %v887
    %v1118 = vpack.c.bf16 %v890, %v888
    %v1119 = vpack.c.bf16 %v891, %v889
    %v1120 = vpack.c.bf16 %v892, %v890
    %v1121 = vpack.c.bf16 %v893, %v891
    %v1122 = vpack.c.bf16 %v894, %v892
    %v1123 = vpack.c.bf16 %v895, %v893
    %v1124 = vpack.c.bf16 %v896, %v894
    %v1125 = vpack.c.bf16 %v897, %v895
    %v1126 = vpack.c.bf16 %v898, %v896
    %v1127 = vpack.c.bf16 %v899, %v897
    %v1128 = vpack.c.bf16 %v900, %v898
    %v1129 = vpack.c.bf16 %v901, %v899
    %v1130 = vpack.c.bf16 %v902, %v900
    %v1131 = vpack.c.bf16 %v903, %v901
    %v1132 = vpack.c.bf16 0.0, %v902
    %v1133 = vpack.c.bf16 0.0, %v903
    %v1134 = vld [vmem:[%s3] sm:$0xf]
    %v1136 = vlaneseq
    %v1137 = vshrl.u32 %v1136, 7
    %v1138 = vsub.s32 0, %v1137
    %v1139 = vrot.slane %v1134, %v1138
    %v1140 = vlaneseq
    %v1141 = vshrl.u32 %v1140, 7
    %v1142 = vsub.s32 1, %v1141
    %v1143 = vrot.slane %v1134, %v1142
    %v1144 = vlaneseq
    %v1145 = vshrl.u32 %v1144, 7
    %v1146 = vsub.s32 2, %v1145
    %v1147 = vrot.slane %v1134, %v1146
    %v1148 = vlaneseq
    %v1149 = vshrl.u32 %v1148, 7
    %v1150 = vsub.s32 3, %v1149
    %v1151 = vrot.slane %v1134, %v1150
    %v1348 = vunpack.c.l.b16 %v908
    %v1349 = vunpack.c.h.b16 %v908
    %v1350 = vunpack.c.l.b16 %v909
    %v1351 = vunpack.c.h.b16 %v909
    %v1352 = vunpack.c.l.b16 %v910
    %v1353 = vunpack.c.h.b16 %v910
    %v1354 = vunpack.c.l.b16 %v911
    %v1355 = vunpack.c.h.b16 %v911
    %v1356 = vunpack.c.l.b16 %v912
    %v1357 = vunpack.c.h.b16 %v912
    %v1358 = vunpack.c.l.b16 %v913
    %v1359 = vunpack.c.h.b16 %v913
    %v1360 = vunpack.c.l.b16 %v914
    %v1361 = vunpack.c.h.b16 %v914
    %v1362 = vunpack.c.l.b16 %v915
    %v1363 = vunpack.c.h.b16 %v915
    %v1364 = vunpack.c.l.b16 %v916
    %v1365 = vunpack.c.h.b16 %v916
    %v1366 = vunpack.c.l.b16 %v917
    %v1367 = vunpack.c.h.b16 %v917
    %v1368 = vunpack.c.l.b16 %v918
    %v1369 = vunpack.c.h.b16 %v918
    %v1370 = vunpack.c.l.b16 %v919
    %v1371 = vunpack.c.h.b16 %v919
    %v1372 = vunpack.c.l.b16 %v920
    %v1373 = vunpack.c.h.b16 %v920
    %v1374 = vunpack.c.l.b16 %v921
    %v1375 = vunpack.c.h.b16 %v921
    %v1376 = vunpack.c.l.b16 %v922
    %v1377 = vunpack.c.h.b16 %v922
    %v1378 = vunpack.c.l.b16 %v923
    %v1379 = vunpack.c.h.b16 %v923
    %v1380 = vunpack.c.l.b16 %v924
    %v1381 = vunpack.c.h.b16 %v924
    %v1382 = vunpack.c.l.b16 %v925
    %v1383 = vunpack.c.h.b16 %v925
    %v1384 = vunpack.c.l.b16 %v926
    %v1385 = vunpack.c.h.b16 %v926
    %v1386 = vunpack.c.l.b16 %v927
    %v1387 = vunpack.c.h.b16 %v927
    %v1388 = vunpack.c.l.b16 %v928
    %v1389 = vunpack.c.h.b16 %v928
    %v1390 = vunpack.c.l.b16 %v929
    %v1391 = vunpack.c.h.b16 %v929
    %v1392 = vunpack.c.l.b16 %v930
    %v1393 = vunpack.c.h.b16 %v930
    %v1394 = vunpack.c.l.b16 %v931
    %v1395 = vunpack.c.h.b16 %v931
    %v1396 = vunpack.c.l.b16 %v932
    %v1397 = vunpack.c.h.b16 %v932
    %v1398 = vunpack.c.l.b16 %v933
    %v1399 = vunpack.c.h.b16 %v933
    %v1400 = vunpack.c.l.b16 %v934
    %v1401 = vunpack.c.h.b16 %v934
    %v1402 = vunpack.c.l.b16 %v935
    %v1403 = vunpack.c.h.b16 %v935
    %v1404 = vunpack.c.l.b16 %v936
    %v1405 = vunpack.c.h.b16 %v936
    %v1406 = vunpack.c.l.b16 %v937
    %v1407 = vunpack.c.h.b16 %v937
    %v1408 = vunpack.c.l.b16 %v938
    %v1409 = vunpack.c.h.b16 %v938
    %v1410 = vunpack.c.l.b16 %v939
    %v1411 = vunpack.c.h.b16 %v939
    %v1412 = vunpack.c.l.b16 %v940
    %v1413 = vunpack.c.h.b16 %v940
    %v1414 = vunpack.c.l.b16 %v941
    %v1415 = vunpack.c.h.b16 %v941
    %v1416 = vunpack.c.l.b16 %v942
    %v1417 = vunpack.c.h.b16 %v942
    %v1418 = vunpack.c.l.b16 %v943
    %v1419 = vunpack.c.h.b16 %v943
    %v1420 = vunpack.c.l.b16 %v944
    %v1421 = vunpack.c.h.b16 %v944
    %v1422 = vunpack.c.l.b16 %v945
    %v1423 = vunpack.c.h.b16 %v945
    %v1424 = vunpack.c.l.b16 %v946
    %v1425 = vunpack.c.h.b16 %v946
    %v1426 = vunpack.c.l.b16 %v947
    %v1427 = vunpack.c.h.b16 %v947
    %v1428 = vunpack.c.l.b16 %v948
    %v1429 = vunpack.c.h.b16 %v948
    %v1430 = vunpack.c.l.b16 %v949
    %v1431 = vunpack.c.h.b16 %v949
    %v1432 = vunpack.c.l.b16 %v950
    %v1433 = vunpack.c.h.b16 %v950
    %v1434 = vunpack.c.l.b16 %v951
    %v1435 = vunpack.c.h.b16 %v951
    %v1436 = vunpack.c.l.b16 %v952
    %v1437 = vunpack.c.h.b16 %v952
    %v1438 = vunpack.c.l.b16 %v953
    %v1439 = vunpack.c.h.b16 %v953
    %v1440 = vunpack.c.l.b16 %v954
    %v1441 = vunpack.c.h.b16 %v954
    %v1442 = vunpack.c.l.b16 %v955
    %v1443 = vunpack.c.h.b16 %v955
    %v1444 = vunpack.c.l.b16 %v956
    %v1445 = vunpack.c.h.b16 %v956
    %v1446 = vunpack.c.l.b16 %v957
    %v1447 = vunpack.c.h.b16 %v957
    %v1448 = vunpack.c.l.b16 %v958
    %v1449 = vunpack.c.h.b16 %v958
    %v1450 = vunpack.c.l.b16 %v959
    %v1451 = vunpack.c.h.b16 %v959
    %v1452 = vunpack.c.l.b16 %v960
    %v1453 = vunpack.c.h.b16 %v960
    %v1454 = vunpack.c.l.b16 %v961
    %v1455 = vunpack.c.h.b16 %v961
    %v1456 = vunpack.c.l.b16 %v962
    %v1457 = vunpack.c.h.b16 %v962
    %v1458 = vunpack.c.l.b16 %v963
    %v1459 = vunpack.c.h.b16 %v963
    %v1460 = vunpack.c.l.b16 %v964
    %v1461 = vunpack.c.h.b16 %v964
    %v1462 = vunpack.c.l.b16 %v965
    %v1463 = vunpack.c.h.b16 %v965
    %v1464 = vunpack.c.l.b16 %v966
    %v1465 = vunpack.c.h.b16 %v966
    %v1466 = vunpack.c.l.b16 %v967
    %v1467 = vunpack.c.h.b16 %v967
    %v1468 = vunpack.c.l.b16 %v968
    %v1469 = vunpack.c.h.b16 %v968
    %v1470 = vunpack.c.l.b16 %v969
    %v1471 = vunpack.c.h.b16 %v969
    %v1472 = vunpack.c.l.b16 %v970
    %v1473 = vunpack.c.h.b16 %v970
    %v1474 = vunpack.c.l.b16 %v971
    %v1475 = vunpack.c.h.b16 %v971
    %v1476 = vunpack.c.l.b16 %v972
    %v1477 = vunpack.c.h.b16 %v972
    %v1478 = vunpack.c.l.b16 %v973
    %v1479 = vunpack.c.h.b16 %v973
    %v1480 = vunpack.c.l.b16 %v974
    %v1481 = vunpack.c.h.b16 %v974
    %v1482 = vunpack.c.l.b16 %v975
    %v1483 = vunpack.c.h.b16 %v975
    %v1484 = vunpack.c.l.b16 %v976
    %v1485 = vunpack.c.h.b16 %v976
    %v1486 = vunpack.c.l.b16 %v977
    %v1487 = vunpack.c.h.b16 %v977
    %v1488 = vunpack.c.l.b16 %v978
    %v1489 = vunpack.c.h.b16 %v978
    %v1490 = vunpack.c.l.b16 %v979
    %v1491 = vunpack.c.h.b16 %v979
    %v1492 = vunpack.c.l.b16 %v980
    %v1493 = vunpack.c.h.b16 %v980
    %v1494 = vunpack.c.l.b16 %v981
    %v1495 = vunpack.c.h.b16 %v981
    %v1496 = vunpack.c.l.b16 %v982
    %v1497 = vunpack.c.h.b16 %v982
    %v1498 = vunpack.c.l.b16 %v983
    %v1499 = vunpack.c.h.b16 %v983
    %v1500 = vunpack.c.l.b16 %v984
    %v1501 = vunpack.c.h.b16 %v984
    %v1502 = vunpack.c.l.b16 %v985
    %v1503 = vunpack.c.h.b16 %v985
    %v1504 = vunpack.c.l.b16 %v986
    %v1505 = vunpack.c.h.b16 %v986
    %v1506 = vunpack.c.l.b16 %v987
    %v1507 = vunpack.c.h.b16 %v987
    %v1508 = vunpack.c.l.b16 %v988
    %v1509 = vunpack.c.h.b16 %v988
    %v1510 = vunpack.c.l.b16 %v989
    %v1511 = vunpack.c.h.b16 %v989
    %v1512 = vunpack.c.l.b16 %v990
    %v1513 = vunpack.c.h.b16 %v990
    %v1514 = vunpack.c.l.b16 %v991
    %v1515 = vunpack.c.h.b16 %v991
    %v1516 = vunpack.c.l.b16 %v992
    %v1517 = vunpack.c.h.b16 %v992
    %v1518 = vunpack.c.l.b16 %v993
    %v1519 = vunpack.c.h.b16 %v993
    %v1520 = vunpack.c.l.b16 %v994
    %v1521 = vunpack.c.h.b16 %v994
    %v1522 = vunpack.c.l.b16 %v995
    %v1523 = vunpack.c.h.b16 %v995
    %v1524 = vunpack.c.l.b16 %v996
    %v1525 = vunpack.c.h.b16 %v996
    %v1526 = vunpack.c.l.b16 %v997
    %v1527 = vunpack.c.h.b16 %v997
    %v1528 = vunpack.c.l.b16 %v998
    %v1529 = vunpack.c.h.b16 %v998
    %v1530 = vunpack.c.l.b16 %v999
    %v1531 = vunpack.c.h.b16 %v999
    %v1532 = vunpack.c.l.b16 %v1000
    %v1533 = vunpack.c.h.b16 %v1000
    %v1534 = vunpack.c.l.b16 %v1001
    %v1535 = vunpack.c.h.b16 %v1001
    %v1536 = vunpack.c.l.b16 %v1002
    %v1537 = vunpack.c.h.b16 %v1002
    %v1538 = vunpack.c.l.b16 %v1003
    %v1539 = vunpack.c.h.b16 %v1003
    %v1540 = vunpack.c.l.b16 %v1004
    %v1541 = vunpack.c.h.b16 %v1004
    %v1542 = vunpack.c.l.b16 %v1005
    %v1543 = vunpack.c.h.b16 %v1005
    %v1544 = vunpack.c.l.b16 %v1006
    %v1545 = vunpack.c.h.b16 %v1006
    %v1546 = vunpack.c.l.b16 %v1007
    %v1547 = vunpack.c.h.b16 %v1007
    %v1548 = vunpack.c.l.b16 %v1008
    %v1549 = vunpack.c.h.b16 %v1008
    %v1550 = vunpack.c.l.b16 %v1009
    %v1551 = vunpack.c.h.b16 %v1009
    %v1552 = vunpack.c.l.b16 %v1010
    %v1553 = vunpack.c.h.b16 %v1010
    %v1554 = vunpack.c.l.b16 %v1011
    %v1555 = vunpack.c.h.b16 %v1011
    %v1556 = vunpack.c.l.b16 %v1012
    %v1557 = vunpack.c.h.b16 %v1012
    %v1558 = vunpack.c.l.b16 %v1013
    %v1559 = vunpack.c.h.b16 %v1013
    %v1560 = vunpack.c.l.b16 %v1014
    %v1561 = vunpack.c.h.b16 %v1014
    %v1562 = vunpack.c.l.b16 %v1015
    %v1563 = vunpack.c.h.b16 %v1015
    %v1564 = vunpack.c.l.b16 %v1016
    %v1565 = vunpack.c.h.b16 %v1016
    %v1566 = vunpack.c.l.b16 %v1017
    %v1567 = vunpack.c.h.b16 %v1017
    %v1568 = vunpack.c.l.b16 %v1018
    %v1569 = vunpack.c.h.b16 %v1018
    %v1570 = vunpack.c.l.b16 %v1019
    %v1571 = vunpack.c.h.b16 %v1019
    %v1572 = vunpack.c.l.b16 %v1020
    %v1573 = vunpack.c.h.b16 %v1020
    %v1574 = vunpack.c.l.b16 %v1021
    %v1575 = vunpack.c.h.b16 %v1021
    %v1576 = vunpack.c.l.b16 %v1022
    %v1577 = vunpack.c.h.b16 %v1022
    %v1578 = vunpack.c.l.b16 %v1023
    %v1579 = vunpack.c.h.b16 %v1023
    %v1580 = vunpack.c.l.b16 %v1024
    %v1581 = vunpack.c.h.b16 %v1024
    %v1582 = vunpack.c.l.b16 %v1025
    %v1583 = vunpack.c.h.b16 %v1025
    %v1584 = vunpack.c.l.b16 %v1026
    %v1585 = vunpack.c.h.b16 %v1026
    %v1586 = vunpack.c.l.b16 %v1027
    %v1587 = vunpack.c.h.b16 %v1027
    %v1588 = vunpack.c.l.b16 %v1028
    %v1589 = vunpack.c.h.b16 %v1028
    %v1590 = vunpack.c.l.b16 %v1029
    %v1591 = vunpack.c.h.b16 %v1029
    %v1592 = vunpack.c.l.b16 %v1030
    %v1593 = vunpack.c.h.b16 %v1030
    %v1594 = vunpack.c.l.b16 %v1031
    %v1595 = vunpack.c.h.b16 %v1031
    %v1596 = vunpack.c.l.b16 %v1032
    %v1597 = vunpack.c.h.b16 %v1032
    %v1598 = vunpack.c.l.b16 %v1033
    %v1599 = vunpack.c.h.b16 %v1033
    %v1600 = vunpack.c.l.b16 %v1034
    %v1601 = vunpack.c.h.b16 %v1034
    %v1602 = vunpack.c.l.b16 %v1035
    %v1603 = vunpack.c.h.b16 %v1035
    %v1604 = vunpack.c.l.b16 %v1036
    %v1605 = vunpack.c.h.b16 %v1036
    %v1606 = vunpack.c.l.b16 %v1037
    %v1607 = vunpack.c.h.b16 %v1037
    %v1608 = vunpack.c.l.b16 %v1038
    %v1609 = vunpack.c.h.b16 %v1038
    %v1610 = vunpack.c.l.b16 %v1039
    %v1611 = vunpack.c.h.b16 %v1039
    %v1612 = vunpack.c.l.b16 %v1040
    %v1613 = vunpack.c.h.b16 %v1040
    %v1614 = vunpack.c.l.b16 %v1041
    %v1615 = vunpack.c.h.b16 %v1041
    %v1616 = vunpack.c.l.b16 %v1042
    %v1617 = vunpack.c.h.b16 %v1042
    %v1618 = vunpack.c.l.b16 %v1043
    %v1619 = vunpack.c.h.b16 %v1043
    %v1620 = vunpack.c.l.b16 %v1044
    %v1621 = vunpack.c.h.b16 %v1044
    %v1622 = vunpack.c.l.b16 %v1045
    %v1623 = vunpack.c.h.b16 %v1045
    %v1624 = vunpack.c.l.b16 %v1046
    %v1625 = vunpack.c.h.b16 %v1046
    %v1626 = vunpack.c.l.b16 %v1047
    %v1627 = vunpack.c.h.b16 %v1047
    %v1628 = vunpack.c.l.b16 %v1048
    %v1629 = vunpack.c.h.b16 %v1048
    %v1630 = vunpack.c.l.b16 %v1049
    %v1631 = vunpack.c.h.b16 %v1049
    %v1632 = vunpack.c.l.b16 %v1050
    %v1633 = vunpack.c.h.b16 %v1050
    %v1634 = vunpack.c.l.b16 %v1051
    %v1635 = vunpack.c.h.b16 %v1051
    %v1636 = vunpack.c.l.b16 %v1052
    %v1637 = vunpack.c.h.b16 %v1052
    %v1638 = vunpack.c.l.b16 %v1053
    %v1639 = vunpack.c.h.b16 %v1053
    %v1640 = vunpack.c.l.b16 %v1054
    %v1641 = vunpack.c.h.b16 %v1054
    %v1642 = vunpack.c.l.b16 %v1055
    %v1643 = vunpack.c.h.b16 %v1055
    %v1644 = vunpack.c.l.b16 %v1056
    %v1645 = vunpack.c.h.b16 %v1056
    %v1646 = vunpack.c.l.b16 %v1057
    %v1647 = vunpack.c.h.b16 %v1057
    %v1648 = vunpack.c.l.b16 %v1058
    %v1649 = vunpack.c.h.b16 %v1058
    %v1650 = vunpack.c.l.b16 %v1059
    %v1651 = vunpack.c.h.b16 %v1059
    %v1652 = vunpack.c.l.b16 %v1060
    %v1653 = vunpack.c.h.b16 %v1060
    %v1654 = vunpack.c.l.b16 %v1061
    %v1655 = vunpack.c.h.b16 %v1061
    %v1656 = vunpack.c.l.b16 %v1062
    %v1657 = vunpack.c.h.b16 %v1062
    %v1658 = vunpack.c.l.b16 %v1063
    %v1659 = vunpack.c.h.b16 %v1063
    %v1660 = vunpack.c.l.b16 %v1064
    %v1661 = vunpack.c.h.b16 %v1064
    %v1662 = vunpack.c.l.b16 %v1065
    %v1663 = vunpack.c.h.b16 %v1065
    %v1664 = vunpack.c.l.b16 %v1066
    %v1665 = vunpack.c.h.b16 %v1066
    %v1666 = vunpack.c.l.b16 %v1067
    %v1667 = vunpack.c.h.b16 %v1067
    %v1668 = vunpack.c.l.b16 %v1068
    %v1669 = vunpack.c.h.b16 %v1068
    %v1670 = vunpack.c.l.b16 %v1069
    %v1671 = vunpack.c.h.b16 %v1069
    %v1672 = vunpack.c.l.b16 %v1070
    %v1673 = vunpack.c.h.b16 %v1070
    %v1674 = vunpack.c.l.b16 %v1071
    %v1675 = vunpack.c.h.b16 %v1071
    %v1676 = vunpack.c.l.b16 %v1072
    %v1677 = vunpack.c.h.b16 %v1072
    %v1678 = vunpack.c.l.b16 %v1073
    %v1679 = vunpack.c.h.b16 %v1073
    %v1680 = vunpack.c.l.b16 %v1074
    %v1681 = vunpack.c.h.b16 %v1074
    %v1682 = vunpack.c.l.b16 %v1075
    %v1683 = vunpack.c.h.b16 %v1075
    %v1684 = vunpack.c.l.b16 %v1076
    %v1685 = vunpack.c.h.b16 %v1076
    %v1686 = vunpack.c.l.b16 %v1077
    %v1687 = vunpack.c.h.b16 %v1077
    %v1688 = vunpack.c.l.b16 %v1078
    %v1689 = vunpack.c.h.b16 %v1078
    %v1690 = vunpack.c.l.b16 %v1079
    %v1691 = vunpack.c.h.b16 %v1079
    %v1692 = vunpack.c.l.b16 %v1080
    %v1693 = vunpack.c.h.b16 %v1080
    %v1694 = vunpack.c.l.b16 %v1081
    %v1695 = vunpack.c.h.b16 %v1081
    %v1696 = vunpack.c.l.b16 %v1082
    %v1697 = vunpack.c.h.b16 %v1082
    %v1698 = vunpack.c.l.b16 %v1083
    %v1699 = vunpack.c.h.b16 %v1083
    %v1700 = vunpack.c.l.b16 %v1084
    %v1701 = vunpack.c.h.b16 %v1084
    %v1702 = vunpack.c.l.b16 %v1085
    %v1703 = vunpack.c.h.b16 %v1085
    %v1704 = vunpack.c.l.b16 %v1086
    %v1705 = vunpack.c.h.b16 %v1086
    %v1706 = vunpack.c.l.b16 %v1087
    %v1707 = vunpack.c.h.b16 %v1087
    %v1708 = vunpack.c.l.b16 %v1088
    %v1709 = vunpack.c.h.b16 %v1088
    %v1710 = vunpack.c.l.b16 %v1089
    %v1711 = vunpack.c.h.b16 %v1089
    %v1712 = vunpack.c.l.b16 %v1090
    %v1713 = vunpack.c.h.b16 %v1090
    %v1714 = vunpack.c.l.b16 %v1091
    %v1715 = vunpack.c.h.b16 %v1091
    %v1716 = vunpack.c.l.b16 %v1092
    %v1717 = vunpack.c.h.b16 %v1092
    %v1718 = vunpack.c.l.b16 %v1093
    %v1719 = vunpack.c.h.b16 %v1093
    %v1720 = vunpack.c.l.b16 %v1094
    %v1721 = vunpack.c.h.b16 %v1094
    %v1722 = vunpack.c.l.b16 %v1095
    %v1723 = vunpack.c.h.b16 %v1095
    %v1724 = vunpack.c.l.b16 %v1096
    %v1725 = vunpack.c.h.b16 %v1096
    %v1726 = vunpack.c.l.b16 %v1097
    %v1727 = vunpack.c.h.b16 %v1097
    %v1728 = vunpack.c.l.b16 %v1098
    %v1729 = vunpack.c.h.b16 %v1098
    %v1730 = vunpack.c.l.b16 %v1099
    %v1731 = vunpack.c.h.b16 %v1099
    %v1732 = vpack.c.b16 %v1352, %v1348
    %v1733 = vpack.c.b16 %v1353, %v1349
    %v1734 = vpack.c.b16 %v1354, %v1350
    %v1735 = vpack.c.b16 %v1355, %v1351
    %v1736 = vpack.c.b16 %v1360, %v1356
    %v1737 = vpack.c.b16 %v1361, %v1357
    %v1738 = vpack.c.b16 %v1362, %v1358
    %v1739 = vpack.c.b16 %v1363, %v1359
    %v1740 = vpack.c.b16 %v1368, %v1364
    %v1741 = vpack.c.b16 %v1369, %v1365
    %v1742 = vpack.c.b16 %v1370, %v1366
    %v1743 = vpack.c.b16 %v1371, %v1367
    %v1744 = vpack.c.b16 %v1376, %v1372
    %v1745 = vpack.c.b16 %v1377, %v1373
    %v1746 = vpack.c.b16 %v1378, %v1374
    %v1747 = vpack.c.b16 %v1379, %v1375
    %v1748 = vpack.c.b16 %v1384, %v1380
    %v1749 = vpack.c.b16 %v1385, %v1381
    %v1750 = vpack.c.b16 %v1386, %v1382
    %v1751 = vpack.c.b16 %v1387, %v1383
    %v1752 = vpack.c.b16 %v1392, %v1388
    %v1753 = vpack.c.b16 %v1393, %v1389
    %v1754 = vpack.c.b16 %v1394, %v1390
    %v1755 = vpack.c.b16 %v1395, %v1391
    %v1756 = vpack.c.b16 %v1400, %v1396
    %v1757 = vpack.c.b16 %v1401, %v1397
    %v1758 = vpack.c.b16 %v1402, %v1398
    %v1759 = vpack.c.b16 %v1403, %v1399
    %v1760 = vpack.c.b16 %v1408, %v1404
    %v1761 = vpack.c.b16 %v1409, %v1405
    %v1762 = vpack.c.b16 %v1410, %v1406
    %v1763 = vpack.c.b16 %v1411, %v1407
    %v1764 = vpack.c.b16 %v1416, %v1412
    %v1765 = vpack.c.b16 %v1417, %v1413
    %v1766 = vpack.c.b16 %v1418, %v1414
    %v1767 = vpack.c.b16 %v1419, %v1415
    %v1768 = vpack.c.b16 %v1424, %v1420
    %v1769 = vpack.c.b16 %v1425, %v1421
    %v1770 = vpack.c.b16 %v1426, %v1422
    %v1771 = vpack.c.b16 %v1427, %v1423
    %v1772 = vpack.c.b16 %v1432, %v1428
    %v1773 = vpack.c.b16 %v1433, %v1429
    %v1774 = vpack.c.b16 %v1434, %v1430
    %v1775 = vpack.c.b16 %v1435, %v1431
    %v1776 = vpack.c.b16 %v1440, %v1436
    %v1777 = vpack.c.b16 %v1441, %v1437
    %v1778 = vpack.c.b16 %v1442, %v1438
    %v1779 = vpack.c.b16 %v1443, %v1439
    %v1780 = vpack.c.b16 %v1448, %v1444
    %v1781 = vpack.c.b16 %v1449, %v1445
    %v1782 = vpack.c.b16 %v1450, %v1446
    %v1783 = vpack.c.b16 %v1451, %v1447
    %v1784 = vpack.c.b16 %v1456, %v1452
    %v1785 = vpack.c.b16 %v1457, %v1453
    %v1786 = vpack.c.b16 %v1458, %v1454
    %v1787 = vpack.c.b16 %v1459, %v1455
    %v1788 = vpack.c.b16 %v1464, %v1460
    %v1789 = vpack.c.b16 %v1465, %v1461
    %v1790 = vpack.c.b16 %v1466, %v1462
    %v1791 = vpack.c.b16 %v1467, %v1463
    %v1792 = vpack.c.b16 %v1472, %v1468
    %v1793 = vpack.c.b16 %v1473, %v1469
    %v1794 = vpack.c.b16 %v1474, %v1470
    %v1795 = vpack.c.b16 %v1475, %v1471
    %v1796 = vpack.c.b16 %v1480, %v1476
    %v1797 = vpack.c.b16 %v1481, %v1477
    %v1798 = vpack.c.b16 %v1482, %v1478
    %v1799 = vpack.c.b16 %v1483, %v1479
    %v1800 = vpack.c.b16 %v1488, %v1484
    %v1801 = vpack.c.b16 %v1489, %v1485
    %v1802 = vpack.c.b16 %v1490, %v1486
    %v1803 = vpack.c.b16 %v1491, %v1487
    %v1804 = vpack.c.b16 %v1496, %v1492
    %v1805 = vpack.c.b16 %v1497, %v1493
    %v1806 = vpack.c.b16 %v1498, %v1494
    %v1807 = vpack.c.b16 %v1499, %v1495
    %v1808 = vpack.c.b16 %v1504, %v1500
    %v1809 = vpack.c.b16 %v1505, %v1501
    %v1810 = vpack.c.b16 %v1506, %v1502
    %v1811 = vpack.c.b16 %v1507, %v1503
    %v1812 = vpack.c.b16 %v1512, %v1508
    %v1813 = vpack.c.b16 %v1513, %v1509
    %v1814 = vpack.c.b16 %v1514, %v1510
    %v1815 = vpack.c.b16 %v1515, %v1511
    %v1816 = vpack.c.b16 %v1520, %v1516
    %v1817 = vpack.c.b16 %v1521, %v1517
    %v1818 = vpack.c.b16 %v1522, %v1518
    %v1819 = vpack.c.b16 %v1523, %v1519
    %v1820 = vpack.c.b16 %v1528, %v1524
    %v1821 = vpack.c.b16 %v1529, %v1525
    %v1822 = vpack.c.b16 %v1530, %v1526
    %v1823 = vpack.c.b16 %v1531, %v1527
    %v1824 = vpack.c.b16 %v1536, %v1532
    %v1825 = vpack.c.b16 %v1537, %v1533
    %v1826 = vpack.c.b16 %v1538, %v1534
    %v1827 = vpack.c.b16 %v1539, %v1535
    %v1828 = vpack.c.b16 %v1544, %v1540
    %v1829 = vpack.c.b16 %v1545, %v1541
    %v1830 = vpack.c.b16 %v1546, %v1542
    %v1831 = vpack.c.b16 %v1547, %v1543
    %v1832 = vpack.c.b16 %v1552, %v1548
    %v1833 = vpack.c.b16 %v1553, %v1549
    %v1834 = vpack.c.b16 %v1554, %v1550
    %v1835 = vpack.c.b16 %v1555, %v1551
    %v1836 = vpack.c.b16 %v1560, %v1556
    %v1837 = vpack.c.b16 %v1561, %v1557
    %v1838 = vpack.c.b16 %v1562, %v1558
    %v1839 = vpack.c.b16 %v1563, %v1559
    %v1840 = vpack.c.b16 %v1568, %v1564
    %v1841 = vpack.c.b16 %v1569, %v1565
    %v1842 = vpack.c.b16 %v1570, %v1566
    %v1843 = vpack.c.b16 %v1571, %v1567
    %v1844 = vpack.c.b16 %v1576, %v1572
    %v1845 = vpack.c.b16 %v1577, %v1573
    %v1846 = vpack.c.b16 %v1578, %v1574
    %v1847 = vpack.c.b16 %v1579, %v1575
    %v1848 = vpack.c.b16 %v1584, %v1580
    %v1849 = vpack.c.b16 %v1585, %v1581
    %v1850 = vpack.c.b16 %v1586, %v1582
    %v1851 = vpack.c.b16 %v1587, %v1583
    %v1852 = vpack.c.b16 %v1592, %v1588
    %v1853 = vpack.c.b16 %v1593, %v1589
    %v1854 = vpack.c.b16 %v1594, %v1590
    %v1855 = vpack.c.b16 %v1595, %v1591
    %v1856 = vpack.c.b16 %v1600, %v1596
    %v1857 = vpack.c.b16 %v1601, %v1597
    %v1858 = vpack.c.b16 %v1602, %v1598
    %v1859 = vpack.c.b16 %v1603, %v1599
    %v1860 = vpack.c.b16 %v1608, %v1604
    %v1861 = vpack.c.b16 %v1609, %v1605
    %v1862 = vpack.c.b16 %v1610, %v1606
    %v1863 = vpack.c.b16 %v1611, %v1607
    %v1864 = vpack.c.b16 %v1616, %v1612
    %v1865 = vpack.c.b16 %v1617, %v1613
    %v1866 = vpack.c.b16 %v1618, %v1614
    %v1867 = vpack.c.b16 %v1619, %v1615
    %v1868 = vpack.c.b16 %v1624, %v1620
    %v1869 = vpack.c.b16 %v1625, %v1621
    %v1870 = vpack.c.b16 %v1626, %v1622
    %v1871 = vpack.c.b16 %v1627, %v1623
    %v1872 = vpack.c.b16 %v1632, %v1628
    %v1873 = vpack.c.b16 %v1633, %v1629
    %v1874 = vpack.c.b16 %v1634, %v1630
    %v1875 = vpack.c.b16 %v1635, %v1631
    %v1876 = vpack.c.b16 %v1640, %v1636
    %v1877 = vpack.c.b16 %v1641, %v1637
    %v1878 = vpack.c.b16 %v1642, %v1638
    %v1879 = vpack.c.b16 %v1643, %v1639
    %v1880 = vpack.c.b16 %v1648, %v1644
    %v1881 = vpack.c.b16 %v1649, %v1645
    %v1882 = vpack.c.b16 %v1650, %v1646
    %v1883 = vpack.c.b16 %v1651, %v1647
    %v1884 = vpack.c.b16 %v1656, %v1652
    %v1885 = vpack.c.b16 %v1657, %v1653
    %v1886 = vpack.c.b16 %v1658, %v1654
    %v1887 = vpack.c.b16 %v1659, %v1655
    %v1888 = vpack.c.b16 %v1664, %v1660
    %v1889 = vpack.c.b16 %v1665, %v1661
    %v1890 = vpack.c.b16 %v1666, %v1662
    %v1891 = vpack.c.b16 %v1667, %v1663
    %v1892 = vpack.c.b16 %v1672, %v1668
    %v1893 = vpack.c.b16 %v1673, %v1669
    %v1894 = vpack.c.b16 %v1674, %v1670
    %v1895 = vpack.c.b16 %v1675, %v1671
    %v1896 = vpack.c.b16 %v1680, %v1676
    %v1897 = vpack.c.b16 %v1681, %v1677
    %v1898 = vpack.c.b16 %v1682, %v1678
    %v1899 = vpack.c.b16 %v1683, %v1679
    %v1900 = vpack.c.b16 %v1688, %v1684
    %v1901 = vpack.c.b16 %v1689, %v1685
    %v1902 = vpack.c.b16 %v1690, %v1686
    %v1903 = vpack.c.b16 %v1691, %v1687
    %v1904 = vpack.c.b16 %v1696, %v1692
    %v1905 = vpack.c.b16 %v1697, %v1693
    %v1906 = vpack.c.b16 %v1698, %v1694
    %v1907 = vpack.c.b16 %v1699, %v1695
    %v1908 = vpack.c.b16 %v1704, %v1700
    %v1909 = vpack.c.b16 %v1705, %v1701
    %v1910 = vpack.c.b16 %v1706, %v1702
    %v1911 = vpack.c.b16 %v1707, %v1703
    %v1912 = vpack.c.b16 %v1712, %v1708
    %v1913 = vpack.c.b16 %v1713, %v1709
    %v1914 = vpack.c.b16 %v1714, %v1710
    %v1915 = vpack.c.b16 %v1715, %v1711
    %v1916 = vpack.c.b16 %v1720, %v1716
    %v1917 = vpack.c.b16 %v1721, %v1717
    %v1918 = vpack.c.b16 %v1722, %v1718
    %v1919 = vpack.c.b16 %v1723, %v1719
    %v1920 = vpack.c.b16 %v1728, %v1724
    %v1921 = vpack.c.b16 %v1729, %v1725
    %v1922 = vpack.c.b16 %v1730, %v1726
    %v1923 = vpack.c.b16 %v1731, %v1727
    %2116 = vmatprep.subr.bf16.mxu0 %v1761
    %2117 = vmatpush1.bf16.msra.mxu0 %v1760
    %2118 = vmatprep.subr.bf16.mxu0 %v1757
    %2119 = vmatpush1.bf16.msra.mxu0 %v1756
    %2120 = vmatprep.subr.bf16.mxu0 %v1753
    %2121 = vmatpush1.bf16.msra.mxu0 %v1752
    %2122 = vmatprep.subr.bf16.mxu0 %v1749
    %2123 = vmatpush1.bf16.msra.mxu0 %v1748
    %2124 = vmatprep.subr.bf16.mxu0 %v1745
    %2125 = vmatpush1.bf16.msra.mxu0 %v1744
    %2126 = vmatprep.subr.bf16.mxu0 %v1741
    %2127 = vmatpush1.bf16.msra.mxu0 %v1740
    %2128 = vmatprep.subr.bf16.mxu0 %v1737
    %2129 = vmatpush1.bf16.msra.mxu0 %v1736
    %2130 = vmatprep.subr.bf16.mxu0 %v1733
    %2131 = vmatpush1.bf16.msra.mxu0 %v1732
    %2132 = vmatprep.subr.bf16.mxu0 %v1793
    %2133 = vmatpush2.bf16.msra.mxu0 %v1792
    %2134 = vmatprep.subr.bf16.mxu0 %v1789
    %2135 = vmatpush2.bf16.msra.mxu0 %v1788
    %2136 = vmatprep.subr.bf16.mxu0 %v1785
    %2137 = vmatpush2.bf16.msra.mxu0 %v1784
    %2138 = vmatprep.subr.bf16.mxu0 %v1781
    %2139 = vmatpush2.bf16.msra.mxu0 %v1780
    %2140 = vmatprep.subr.bf16.mxu0 %v1777
    %2141 = vmatpush2.bf16.msra.mxu0 %v1776
    %2142 = vmatprep.subr.bf16.mxu0 %v1773
    %2143 = vmatpush2.bf16.msra.mxu0 %v1772
    %2144 = vmatprep.subr.bf16.mxu0 %v1769
    %2145 = vmatpush2.bf16.msra.mxu0 %v1768
    %2146 = vmatprep.subr.bf16.mxu0 %v1765
    %2147 = vmatpush2.bf16.msra.mxu0 %v1764
    %2148 = vmatprep.mubr.bf16.mxu0 %v1101
    %2149 = vmatmul.mubr.bf16.gmra.mxu0 %v1100
    %v2150 = vpop.f32.mrf.mxu0
    %v2151 = vadd.f32 %v1139, %v2150
    %v2152 = vpop.f32.mrf.mxu0
    %v2153 = vadd.f32 %v1143, %v2152
    %v2154 = vpop.f32.mrf.mxu0
    %v2155 = vadd.f32 %v1139, %v2154
    %v2156 = vpop.f32.mrf.mxu0
    %v2157 = vadd.f32 %v1143, %v2156
    %2158 = vmatprep.mubr.bf16.mxu0 %v1105
    %2159 = vmatmul.mubr.bf16.gmra.mxu0 %v1104
    %v2160 = vpop.f32.mrf.mxu0
    %v2161 = vadd.f32 %v1139, %v2160
    %v2162 = vpop.f32.mrf.mxu0
    %v2163 = vadd.f32 %v1143, %v2162
    %v2164 = vpop.f32.mrf.mxu0
    %v2165 = vadd.f32 %v1139, %v2164
    %v2166 = vpop.f32.mrf.mxu0
    %v2167 = vadd.f32 %v1143, %v2166
    %2168 = vmatprep.mubr.bf16.mxu0 %v1109
    %2169 = vmatmul.mubr.bf16.gmra.mxu0 %v1108
    %v2170 = vpop.f32.mrf.mxu0
    %v2171 = vadd.f32 %v1139, %v2170
    %v2172 = vpop.f32.mrf.mxu0
    %v2173 = vadd.f32 %v1143, %v2172
    %v2174 = vpop.f32.mrf.mxu0
    %v2175 = vadd.f32 %v1139, %v2174
    %v2176 = vpop.f32.mrf.mxu0
    %v2177 = vadd.f32 %v1143, %v2176
    %2178 = vmatprep.mubr.bf16.mxu0 %v1113
    %2179 = vmatmul.mubr.bf16.gmra.mxu0 %v1112
    %v2180 = vpop.f32.mrf.mxu0
    %v2181 = vadd.f32 %v1139, %v2180
    %v2182 = vpop.f32.mrf.mxu0
    %v2183 = vadd.f32 %v1143, %v2182
    %v2184 = vpop.f32.mrf.mxu0
    %v2185 = vadd.f32 %v1139, %v2184
    %v2186 = vpop.f32.mrf.mxu0
    %v2187 = vadd.f32 %v1143, %v2186
    %2188 = vmatprep.mubr.bf16.mxu0 %v1117
    %2189 = vmatmul.mubr.bf16.gmra.mxu0 %v1116
    %v2190 = vpop.f32.mrf.mxu0
    %v2191 = vadd.f32 %v1139, %v2190
    %v2192 = vpop.f32.mrf.mxu0
    %v2193 = vadd.f32 %v1143, %v2192
    %v2194 = vpop.f32.mrf.mxu0
    %v2195 = vadd.f32 %v1139, %v2194
    %v2196 = vpop.f32.mrf.mxu0
    %v2197 = vadd.f32 %v1143, %v2196
    %2198 = vmatprep.mubr.bf16.mxu0 %v1121
    %2199 = vmatmul.mubr.bf16.gmra.mxu0 %v1120
    %v2200 = vpop.f32.mrf.mxu0
    %v2201 = vadd.f32 %v1139, %v2200
    %v2202 = vpop.f32.mrf.mxu0
    %v2203 = vadd.f32 %v1143, %v2202
    %v2204 = vpop.f32.mrf.mxu0
    %v2205 = vadd.f32 %v1139, %v2204
    %v2206 = vpop.f32.mrf.mxu0
    %v2207 = vadd.f32 %v1143, %v2206
    %2208 = vmatprep.mubr.bf16.mxu0 %v1125
    %2209 = vmatmul.mubr.bf16.gmra.mxu0 %v1124
    %v2210 = vpop.f32.mrf.mxu0
    %v2211 = vadd.f32 %v1139, %v2210
    %v2212 = vpop.f32.mrf.mxu0
    %v2213 = vadd.f32 %v1143, %v2212
    %v2214 = vpop.f32.mrf.mxu0
    %v2215 = vadd.f32 %v1139, %v2214
    %v2216 = vpop.f32.mrf.mxu0
    %v2217 = vadd.f32 %v1143, %v2216
    %2218 = vmatprep.mubr.bf16.mxu0 %v1129
    %2219 = vmatmul.mubr.bf16.gmra.mxu0 %v1128
    %v2220 = vpop.f32.mrf.mxu0
    %v2221 = vadd.f32 %v1139, %v2220
    %v2222 = vpop.f32.mrf.mxu0
    %v2223 = vadd.f32 %v1143, %v2222
    %v2224 = vpop.f32.mrf.mxu0
    %v2225 = vadd.f32 %v1139, %v2224
    %v2226 = vpop.f32.mrf.mxu0
    %v2227 = vadd.f32 %v1143, %v2226
    %2228 = vdwg.mxu0
    %2229 = vmatprep.subr.bf16.mxu0 %v1825
    %2230 = vmatpush1.bf16.msra.mxu0 %v1824
    %2231 = vmatprep.subr.bf16.mxu0 %v1821
    %2232 = vmatpush1.bf16.msra.mxu0 %v1820
    %2233 = vmatprep.subr.bf16.mxu0 %v1817
    %2234 = vmatpush1.bf16.msra.mxu0 %v1816
    %2235 = vmatprep.subr.bf16.mxu0 %v1813
    %2236 = vmatpush1.bf16.msra.mxu0 %v1812
    %2237 = vmatprep.subr.bf16.mxu0 %v1809
    %2238 = vmatpush1.bf16.msra.mxu0 %v1808
    %2239 = vmatprep.subr.bf16.mxu0 %v1805
    %2240 = vmatpush1.bf16.msra.mxu0 %v1804
    %2241 = vmatprep.subr.bf16.mxu0 %v1801
    %2242 = vmatpush1.bf16.msra.mxu0 %v1800
    %2243 = vmatprep.subr.bf16.mxu0 %v1797
    %2244 = vmatpush1.bf16.msra.mxu0 %v1796
    %2245 = vmatprep.subr.bf16.mxu0 %v1857
    %2246 = vmatpush2.bf16.msra.mxu0 %v1856
    %2247 = vmatprep.subr.bf16.mxu0 %v1853
    %2248 = vmatpush2.bf16.msra.mxu0 %v1852
    %2249 = vmatprep.subr.bf16.mxu0 %v1849
    %2250 = vmatpush2.bf16.msra.mxu0 %v1848
    %2251 = vmatprep.subr.bf16.mxu0 %v1845
    %2252 = vmatpush2.bf16.msra.mxu0 %v1844
    %2253 = vmatprep.subr.bf16.mxu0 %v1841
    %2254 = vmatpush2.bf16.msra.mxu0 %v1840
    %2255 = vmatprep.subr.bf16.mxu0 %v1837
    %2256 = vmatpush2.bf16.msra.mxu0 %v1836
    %2257 = vmatprep.subr.bf16.mxu0 %v1833
    %2258 = vmatpush2.bf16.msra.mxu0 %v1832
    %2259 = vmatprep.subr.bf16.mxu0 %v1829
    %2260 = vmatpush2.bf16.msra.mxu0 %v1828
    %2261 = vmatprep.mubr.bf16.mxu0 %v1103
    %2262 = vmatmul.mubr.bf16.gmra.mxu0 %v1102
    %v2263 = vpop.f32.mrf.mxu0
    %v2264 = vadd.f32 %v2151, %v2263
    %v2265 = vpop.f32.mrf.mxu0
    %v2266 = vadd.f32 %v2153, %v2265
    %v2267 = vpop.f32.mrf.mxu0
    %v2268 = vadd.f32 %v2155, %v2267
    %v2269 = vpop.f32.mrf.mxu0
    %v2270 = vadd.f32 %v2157, %v2269
    %2271 = vmatprep.mubr.bf16.mxu0 %v1107
    %2272 = vmatmul.mubr.bf16.gmra.mxu0 %v1106
    %v2273 = vpop.f32.mrf.mxu0
    %v2274 = vadd.f32 %v2161, %v2273
    %v2275 = vpop.f32.mrf.mxu0
    %v2276 = vadd.f32 %v2163, %v2275
    %v2277 = vpop.f32.mrf.mxu0
    %v2278 = vadd.f32 %v2165, %v2277
    %v2279 = vpop.f32.mrf.mxu0
    %v2280 = vadd.f32 %v2167, %v2279
    %2281 = vmatprep.mubr.bf16.mxu0 %v1111
    %2282 = vmatmul.mubr.bf16.gmra.mxu0 %v1110
    %v2283 = vpop.f32.mrf.mxu0
    %v2284 = vadd.f32 %v2171, %v2283
    %v2285 = vpop.f32.mrf.mxu0
    %v2286 = vadd.f32 %v2173, %v2285
    %v2287 = vpop.f32.mrf.mxu0
    %v2288 = vadd.f32 %v2175, %v2287
    %v2289 = vpop.f32.mrf.mxu0
    %v2290 = vadd.f32 %v2177, %v2289
    %2291 = vmatprep.mubr.bf16.mxu0 %v1115
    %2292 = vmatmul.mubr.bf16.gmra.mxu0 %v1114
    %v2293 = vpop.f32.mrf.mxu0
    %v2294 = vadd.f32 %v2181, %v2293
    %v2295 = vpop.f32.mrf.mxu0
    %v2296 = vadd.f32 %v2183, %v2295
    %v2297 = vpop.f32.mrf.mxu0
    %v2298 = vadd.f32 %v2185, %v2297
    %v2299 = vpop.f32.mrf.mxu0
    %v2300 = vadd.f32 %v2187, %v2299
    %2301 = vmatprep.mubr.bf16.mxu0 %v1119
    %2302 = vmatmul.mubr.bf16.gmra.mxu0 %v1118
    %v2303 = vpop.f32.mrf.mxu0
    %v2304 = vadd.f32 %v2191, %v2303
    %v2305 = vpop.f32.mrf.mxu0
    %v2306 = vadd.f32 %v2193, %v2305
    %v2307 = vpop.f32.mrf.mxu0
    %v2308 = vadd.f32 %v2195, %v2307
    %v2309 = vpop.f32.mrf.mxu0
    %v2310 = vadd.f32 %v2197, %v2309
    %2311 = vmatprep.mubr.bf16.mxu0 %v1123
    %2312 = vmatmul.mubr.bf16.gmra.mxu0 %v1122
    %v2313 = vpop.f32.mrf.mxu0
    %v2314 = vadd.f32 %v2201, %v2313
    %v2315 = vpop.f32.mrf.mxu0
    %v2316 = vadd.f32 %v2203, %v2315
    %v2317 = vpop.f32.mrf.mxu0
    %v2318 = vadd.f32 %v2205, %v2317
    %v2319 = vpop.f32.mrf.mxu0
    %v2320 = vadd.f32 %v2207, %v2319
    %2321 = vmatprep.mubr.bf16.mxu0 %v1127
    %2322 = vmatmul.mubr.bf16.gmra.mxu0 %v1126
    %v2323 = vpop.f32.mrf.mxu0
    %v2324 = vadd.f32 %v2211, %v2323
    %v2325 = vpop.f32.mrf.mxu0
    %v2326 = vadd.f32 %v2213, %v2325
    %v2327 = vpop.f32.mrf.mxu0
    %v2328 = vadd.f32 %v2215, %v2327
    %v2329 = vpop.f32.mrf.mxu0
    %v2330 = vadd.f32 %v2217, %v2329
    %2331 = vmatprep.mubr.bf16.mxu0 %v1131
    %2332 = vmatmul.mubr.bf16.gmra.mxu0 %v1130
    %v2333 = vpop.f32.mrf.mxu0
    %v2334 = vadd.f32 %v2221, %v2333
    %v2335 = vpop.f32.mrf.mxu0
    %v2336 = vadd.f32 %v2223, %v2335
    %v2337 = vpop.f32.mrf.mxu0
    %v2338 = vadd.f32 %v2225, %v2337
    %v2339 = vpop.f32.mrf.mxu0
    %v2340 = vadd.f32 %v2227, %v2339
    %2341 = vdwg.mxu0
    %2342 = vmatprep.subr.bf16.mxu0 %v1889
    %2343 = vmatpush1.bf16.msra.mxu0 %v1888
    %2344 = vmatprep.subr.bf16.mxu0 %v1885
    %2345 = vmatpush1.bf16.msra.mxu0 %v1884
    %2346 = vmatprep.subr.bf16.mxu0 %v1881
    %2347 = vmatpush1.bf16.msra.mxu0 %v1880
    %2348 = vmatprep.subr.bf16.mxu0 %v1877
    %2349 = vmatpush1.bf16.msra.mxu0 %v1876
    %2350 = vmatprep.subr.bf16.mxu0 %v1873
    %2351 = vmatpush1.bf16.msra.mxu0 %v1872
    %2352 = vmatprep.subr.bf16.mxu0 %v1869
    %2353 = vmatpush1.bf16.msra.mxu0 %v1868
    %2354 = vmatprep.subr.bf16.mxu0 %v1865
    %2355 = vmatpush1.bf16.msra.mxu0 %v1864
    %2356 = vmatprep.subr.bf16.mxu0 %v1861
    %2357 = vmatpush1.bf16.msra.mxu0 %v1860
    %2358 = vmatprep.subr.bf16.mxu0 %v1921
    %2359 = vmatpush2.bf16.msra.mxu0 %v1920
    %2360 = vmatprep.subr.bf16.mxu0 %v1917
    %2361 = vmatpush2.bf16.msra.mxu0 %v1916
    %2362 = vmatprep.subr.bf16.mxu0 %v1913
    %2363 = vmatpush2.bf16.msra.mxu0 %v1912
    %2364 = vmatprep.subr.bf16.mxu0 %v1909
    %2365 = vmatpush2.bf16.msra.mxu0 %v1908
    %2366 = vmatprep.subr.bf16.mxu0 %v1905
    %2367 = vmatpush2.bf16.msra.mxu0 %v1904
    %2368 = vmatprep.subr.bf16.mxu0 %v1901
    %2369 = vmatpush2.bf16.msra.mxu0 %v1900
    %2370 = vmatprep.subr.bf16.mxu0 %v1897
    %2371 = vmatpush2.bf16.msra.mxu0 %v1896
    %2372 = vmatprep.subr.bf16.mxu0 %v1893
    %2373 = vmatpush2.bf16.msra.mxu0 %v1892
    %2374 = vmatprep.mubr.bf16.mxu0 %v1105
    %2375 = vmatmul.mubr.bf16.gmra.mxu0 %v1104
    %v2376 = vpop.f32.mrf.mxu0
    %v2377 = vadd.f32 %v2264, %v2376
    %v2378 = vpop.f32.mrf.mxu0
    %v2379 = vadd.f32 %v2266, %v2378
    %v2380 = vpop.f32.mrf.mxu0
    %v2381 = vadd.f32 %v2268, %v2380
    %v2382 = vpop.f32.mrf.mxu0
    %v2383 = vadd.f32 %v2270, %v2382
    %2384 = vmatprep.mubr.bf16.mxu0 %v1109
    %2385 = vmatmul.mubr.bf16.gmra.mxu0 %v1108
    %v2386 = vpop.f32.mrf.mxu0
    %v2387 = vadd.f32 %v2274, %v2386
    %v2388 = vpop.f32.mrf.mxu0
    %v2389 = vadd.f32 %v2276, %v2388
    %v2390 = vpop.f32.mrf.mxu0
    %v2391 = vadd.f32 %v2278, %v2390
    %v2392 = vpop.f32.mrf.mxu0
    %v2393 = vadd.f32 %v2280, %v2392
    %2394 = vmatprep.mubr.bf16.mxu0 %v1113
    %2395 = vmatmul.mubr.bf16.gmra.mxu0 %v1112
    %v2396 = vpop.f32.mrf.mxu0
    %v2397 = vadd.f32 %v2284, %v2396
    %v2398 = vpop.f32.mrf.mxu0
    %v2399 = vadd.f32 %v2286, %v2398
    %v2400 = vpop.f32.mrf.mxu0
    %v2401 = vadd.f32 %v2288, %v2400
    %v2402 = vpop.f32.mrf.mxu0
    %v2403 = vadd.f32 %v2290, %v2402
    %2404 = vmatprep.mubr.bf16.mxu0 %v1117
    %2405 = vmatmul.mubr.bf16.gmra.mxu0 %v1116
    %v2406 = vpop.f32.mrf.mxu0
    %v2407 = vadd.f32 %v2294, %v2406
    %v2408 = vpop.f32.mrf.mxu0
    %v2409 = vadd.f32 %v2296, %v2408
    %v2410 = vpop.f32.mrf.mxu0
    %v2411 = vadd.f32 %v2298, %v2410
    %v2412 = vpop.f32.mrf.mxu0
    %v2413 = vadd.f32 %v2300, %v2412
    %2414 = vmatprep.mubr.bf16.mxu0 %v1121
    %2415 = vmatmul.mubr.bf16.gmra.mxu0 %v1120
    %v2416 = vpop.f32.mrf.mxu0
    %v2417 = vadd.f32 %v2304, %v2416
    %v2418 = vpop.f32.mrf.mxu0
    %v2419 = vadd.f32 %v2306, %v2418
    %v2420 = vpop.f32.mrf.mxu0
    %v2421 = vadd.f32 %v2308, %v2420
    %v2422 = vpop.f32.mrf.mxu0
    %v2423 = vadd.f32 %v2310, %v2422
    %2424 = vmatprep.mubr.bf16.mxu0 %v1125
    %2425 = vmatmul.mubr.bf16.gmra.mxu0 %v1124
    %v2426 = vpop.f32.mrf.mxu0
    %v2427 = vadd.f32 %v2314, %v2426
    %v2428 = vpop.f32.mrf.mxu0
    %v2429 = vadd.f32 %v2316, %v2428
    %v2430 = vpop.f32.mrf.mxu0
    %v2431 = vadd.f32 %v2318, %v2430
    %v2432 = vpop.f32.mrf.mxu0
    %v2433 = vadd.f32 %v2320, %v2432
    %2434 = vmatprep.mubr.bf16.mxu0 %v1129
    %2435 = vmatmul.mubr.bf16.gmra.mxu0 %v1128
    %v2436 = vpop.f32.mrf.mxu0
    %v2437 = vadd.f32 %v2324, %v2436
    %v2438 = vpop.f32.mrf.mxu0
    %v2439 = vadd.f32 %v2326, %v2438
    %v2440 = vpop.f32.mrf.mxu0
    %v2441 = vadd.f32 %v2328, %v2440
    %v2442 = vpop.f32.mrf.mxu0
    %v2443 = vadd.f32 %v2330, %v2442
    %2444 = vmatprep.mubr.bf16.mxu0 %v1133
    %2445 = vmatmul.mubr.bf16.gmra.mxu0 %v1132
    %v2446 = vpop.f32.mrf.mxu0
    %v2447 = vadd.f32 %v2334, %v2446
    %v2448 = vpop.f32.mrf.mxu0
    %v2449 = vadd.f32 %v2336, %v2448
    %v2450 = vpop.f32.mrf.mxu0
    %v2451 = vadd.f32 %v2338, %v2450
    %v2452 = vpop.f32.mrf.mxu0
    %v2453 = vadd.f32 %v2340, %v2452
    %2454 = vdwg.mxu0
    %2455 = vmatprep.subr.bf16.mxu0 %v1763
    %2456 = vmatpush1.bf16.msra.mxu0 %v1762
    %2457 = vmatprep.subr.bf16.mxu0 %v1759
    %2458 = vmatpush1.bf16.msra.mxu0 %v1758
    %2459 = vmatprep.subr.bf16.mxu0 %v1755
    %2460 = vmatpush1.bf16.msra.mxu0 %v1754
    %2461 = vmatprep.subr.bf16.mxu0 %v1751
    %2462 = vmatpush1.bf16.msra.mxu0 %v1750
    %2463 = vmatprep.subr.bf16.mxu0 %v1747
    %2464 = vmatpush1.bf16.msra.mxu0 %v1746
    %2465 = vmatprep.subr.bf16.mxu0 %v1743
    %2466 = vmatpush1.bf16.msra.mxu0 %v1742
    %2467 = vmatprep.subr.bf16.mxu0 %v1739
    %2468 = vmatpush1.bf16.msra.mxu0 %v1738
    %2469 = vmatprep.subr.bf16.mxu0 %v1735
    %2470 = vmatpush1.bf16.msra.mxu0 %v1734
    %2471 = vmatprep.subr.bf16.mxu0 %v1795
    %2472 = vmatpush2.bf16.msra.mxu0 %v1794
    %2473 = vmatprep.subr.bf16.mxu0 %v1791
    %2474 = vmatpush2.bf16.msra.mxu0 %v1790
    %2475 = vmatprep.subr.bf16.mxu0 %v1787
    %2476 = vmatpush2.bf16.msra.mxu0 %v1786
    %2477 = vmatprep.subr.bf16.mxu0 %v1783
    %2478 = vmatpush2.bf16.msra.mxu0 %v1782
    %2479 = vmatprep.subr.bf16.mxu0 %v1779
    %2480 = vmatpush2.bf16.msra.mxu0 %v1778
    %2481 = vmatprep.subr.bf16.mxu0 %v1775
    %2482 = vmatpush2.bf16.msra.mxu0 %v1774
    %2483 = vmatprep.subr.bf16.mxu0 %v1771
    %2484 = vmatpush2.bf16.msra.mxu0 %v1770
    %2485 = vmatprep.subr.bf16.mxu0 %v1767
    %2486 = vmatpush2.bf16.msra.mxu0 %v1766
    %2487 = vmatprep.mubr.bf16.mxu0 %v1101
    %2488 = vmatmul.mubr.bf16.gmra.mxu0 %v1100
    %v2489 = vpop.f32.mrf.mxu0
    %v2490 = vadd.f32 %v1147, %v2489
    %v2491 = vpop.f32.mrf.mxu0
    %v2492 = vadd.f32 %v1151, %v2491
    %v2493 = vpop.f32.mrf.mxu0
    %v2494 = vadd.f32 %v1147, %v2493
    %v2495 = vpop.f32.mrf.mxu0
    %v2496 = vadd.f32 %v1151, %v2495
    %2497 = vmatprep.mubr.bf16.mxu0 %v1105
    %2498 = vmatmul.mubr.bf16.gmra.mxu0 %v1104
    %v2499 = vpop.f32.mrf.mxu0
    %v2500 = vadd.f32 %v1147, %v2499
    %v2501 = vpop.f32.mrf.mxu0
    %v2502 = vadd.f32 %v1151, %v2501
    %v2503 = vpop.f32.mrf.mxu0
    %v2504 = vadd.f32 %v1147, %v2503
    %v2505 = vpop.f32.mrf.mxu0
    %v2506 = vadd.f32 %v1151, %v2505
    %2507 = vmatprep.mubr.bf16.mxu0 %v1109
    %2508 = vmatmul.mubr.bf16.gmra.mxu0 %v1108
    %v2509 = vpop.f32.mrf.mxu0
    %v2510 = vadd.f32 %v1147, %v2509
    %v2511 = vpop.f32.mrf.mxu0
    %v2512 = vadd.f32 %v1151, %v2511
    %v2513 = vpop.f32.mrf.mxu0
    %v2514 = vadd.f32 %v1147, %v2513
    %v2515 = vpop.f32.mrf.mxu0
    %v2516 = vadd.f32 %v1151, %v2515
    %2517 = vmatprep.mubr.bf16.mxu0 %v1113
    %2518 = vmatmul.mubr.bf16.gmra.mxu0 %v1112
    %v2519 = vpop.f32.mrf.mxu0
    %v2520 = vadd.f32 %v1147, %v2519
    %v2521 = vpop.f32.mrf.mxu0
    %v2522 = vadd.f32 %v1151, %v2521
    %v2523 = vpop.f32.mrf.mxu0
    %v2524 = vadd.f32 %v1147, %v2523
    %v2525 = vpop.f32.mrf.mxu0
    %v2526 = vadd.f32 %v1151, %v2525
    %2527 = vmatprep.mubr.bf16.mxu0 %v1117
    %2528 = vmatmul.mubr.bf16.gmra.mxu0 %v1116
    %v2529 = vpop.f32.mrf.mxu0
    %v2530 = vadd.f32 %v1147, %v2529
    %v2531 = vpop.f32.mrf.mxu0
    %v2532 = vadd.f32 %v1151, %v2531
    %v2533 = vpop.f32.mrf.mxu0
    %v2534 = vadd.f32 %v1147, %v2533
    %v2535 = vpop.f32.mrf.mxu0
    %v2536 = vadd.f32 %v1151, %v2535
    %2537 = vmatprep.mubr.bf16.mxu0 %v1121
    %2538 = vmatmul.mubr.bf16.gmra.mxu0 %v1120
    %v2539 = vpop.f32.mrf.mxu0
    %v2540 = vadd.f32 %v1147, %v2539
    %v2541 = vpop.f32.mrf.mxu0
    %v2542 = vadd.f32 %v1151, %v2541
    %v2543 = vpop.f32.mrf.mxu0
    %v2544 = vadd.f32 %v1147, %v2543
    %v2545 = vpop.f32.mrf.mxu0
    %v2546 = vadd.f32 %v1151, %v2545
    %2547 = vmatprep.mubr.bf16.mxu0 %v1125
    %2548 = vmatmul.mubr.bf16.gmra.mxu0 %v1124
    %v2549 = vpop.f32.mrf.mxu0
    %v2550 = vadd.f32 %v1147, %v2549
    %v2551 = vpop.f32.mrf.mxu0
    %v2552 = vadd.f32 %v1151, %v2551
    %v2553 = vpop.f32.mrf.mxu0
    %v2554 = vadd.f32 %v1147, %v2553
    %v2555 = vpop.f32.mrf.mxu0
    %v2556 = vadd.f32 %v1151, %v2555
    %2557 = vmatprep.mubr.bf16.mxu0 %v1129
    %2558 = vmatmul.mubr.bf16.gmra.mxu0 %v1128
    %v2559 = vpop.f32.mrf.mxu0
    %v2560 = vadd.f32 %v1147, %v2559
    %v2561 = vpop.f32.mrf.mxu0
    %v2562 = vadd.f32 %v1151, %v2561
    %v2563 = vpop.f32.mrf.mxu0
    %v2564 = vadd.f32 %v1147, %v2563
    %v2565 = vpop.f32.mrf.mxu0
    %v2566 = vadd.f32 %v1151, %v2565
    %2567 = vdwg.mxu0
    %2568 = vmatprep.subr.bf16.mxu0 %v1827
    %2569 = vmatpush1.bf16.msra.mxu0 %v1826
    %2570 = vmatprep.subr.bf16.mxu0 %v1823
    %2571 = vmatpush1.bf16.msra.mxu0 %v1822
    %2572 = vmatprep.subr.bf16.mxu0 %v1819
    %2573 = vmatpush1.bf16.msra.mxu0 %v1818
    %2574 = vmatprep.subr.bf16.mxu0 %v1815
    %2575 = vmatpush1.bf16.msra.mxu0 %v1814
    %2576 = vmatprep.subr.bf16.mxu0 %v1811
    %2577 = vmatpush1.bf16.msra.mxu0 %v1810
    %2578 = vmatprep.subr.bf16.mxu0 %v1807
    %2579 = vmatpush1.bf16.msra.mxu0 %v1806
    %2580 = vmatprep.subr.bf16.mxu0 %v1803
    %2581 = vmatpush1.bf16.msra.mxu0 %v1802
    %2582 = vmatprep.subr.bf16.mxu0 %v1799
    %2583 = vmatpush1.bf16.msra.mxu0 %v1798
    %2584 = vmatprep.subr.bf16.mxu0 %v1859
    %2585 = vmatpush2.bf16.msra.mxu0 %v1858
    %2586 = vmatprep.subr.bf16.mxu0 %v1855
    %2587 = vmatpush2.bf16.msra.mxu0 %v1854
    %2588 = vmatprep.subr.bf16.mxu0 %v1851
    %2589 = vmatpush2.bf16.msra.mxu0 %v1850
    %2590 = vmatprep.subr.bf16.mxu0 %v1847
    %2591 = vmatpush2.bf16.msra.mxu0 %v1846
    %2592 = vmatprep.subr.bf16.mxu0 %v1843
    %2593 = vmatpush2.bf16.msra.mxu0 %v1842
    %2594 = vmatprep.subr.bf16.mxu0 %v1839
    %2595 = vmatpush2.bf16.msra.mxu0 %v1838
    %2596 = vmatprep.subr.bf16.mxu0 %v1835
    %2597 = vmatpush2.bf16.msra.mxu0 %v1834
    %2598 = vmatprep.subr.bf16.mxu0 %v1831
    %2599 = vmatpush2.bf16.msra.mxu0 %v1830
    %2600 = vmatprep.mubr.bf16.mxu0 %v1103
    %2601 = vmatmul.mubr.bf16.gmra.mxu0 %v1102
    %v2602 = vpop.f32.mrf.mxu0
    %v2603 = vadd.f32 %v2490, %v2602
    %v2604 = vpop.f32.mrf.mxu0
    %v2605 = vadd.f32 %v2492, %v2604
    %v2606 = vpop.f32.mrf.mxu0
    %v2607 = vadd.f32 %v2494, %v2606
    %v2608 = vpop.f32.mrf.mxu0
    %v2609 = vadd.f32 %v2496, %v2608
    %2610 = vmatprep.mubr.bf16.mxu0 %v1107
    %2611 = vmatmul.mubr.bf16.gmra.mxu0 %v1106
    %v2612 = vpop.f32.mrf.mxu0
    %v2613 = vadd.f32 %v2500, %v2612
    %v2614 = vpop.f32.mrf.mxu0
    %v2615 = vadd.f32 %v2502, %v2614
    %v2616 = vpop.f32.mrf.mxu0
    %v2617 = vadd.f32 %v2504, %v2616
    %v2618 = vpop.f32.mrf.mxu0
    %v2619 = vadd.f32 %v2506, %v2618
    %2620 = vmatprep.mubr.bf16.mxu0 %v1111
    %2621 = vmatmul.mubr.bf16.gmra.mxu0 %v1110
    %v2622 = vpop.f32.mrf.mxu0
    %v2623 = vadd.f32 %v2510, %v2622
    %v2624 = vpop.f32.mrf.mxu0
    %v2625 = vadd.f32 %v2512, %v2624
    %v2626 = vpop.f32.mrf.mxu0
    %v2627 = vadd.f32 %v2514, %v2626
    %v2628 = vpop.f32.mrf.mxu0
    %v2629 = vadd.f32 %v2516, %v2628
    %2630 = vmatprep.mubr.bf16.mxu0 %v1115
    %2631 = vmatmul.mubr.bf16.gmra.mxu0 %v1114
    %v2632 = vpop.f32.mrf.mxu0
    %v2633 = vadd.f32 %v2520, %v2632
    %v2634 = vpop.f32.mrf.mxu0
    %v2635 = vadd.f32 %v2522, %v2634
    %v2636 = vpop.f32.mrf.mxu0
    %v2637 = vadd.f32 %v2524, %v2636
    %v2638 = vpop.f32.mrf.mxu0
    %v2639 = vadd.f32 %v2526, %v2638
    %2640 = vmatprep.mubr.bf16.mxu0 %v1119
    %2641 = vmatmul.mubr.bf16.gmra.mxu0 %v1118
    %v2642 = vpop.f32.mrf.mxu0
    %v2643 = vadd.f32 %v2530, %v2642
    %v2644 = vpop.f32.mrf.mxu0
    %v2645 = vadd.f32 %v2532, %v2644
    %v2646 = vpop.f32.mrf.mxu0
    %v2647 = vadd.f32 %v2534, %v2646
    %v2648 = vpop.f32.mrf.mxu0
    %v2649 = vadd.f32 %v2536, %v2648
    %2650 = vmatprep.mubr.bf16.mxu0 %v1123
    %2651 = vmatmul.mubr.bf16.gmra.mxu0 %v1122
    %v2652 = vpop.f32.mrf.mxu0
    %v2653 = vadd.f32 %v2540, %v2652
    %v2654 = vpop.f32.mrf.mxu0
    %v2655 = vadd.f32 %v2542, %v2654
    %v2656 = vpop.f32.mrf.mxu0
    %v2657 = vadd.f32 %v2544, %v2656
    %v2658 = vpop.f32.mrf.mxu0
    %v2659 = vadd.f32 %v2546, %v2658
    %2660 = vmatprep.mubr.bf16.mxu0 %v1127
    %2661 = vmatmul.mubr.bf16.gmra.mxu0 %v1126
    %v2662 = vpop.f32.mrf.mxu0
    %v2663 = vadd.f32 %v2550, %v2662
    %v2664 = vpop.f32.mrf.mxu0
    %v2665 = vadd.f32 %v2552, %v2664
    %v2666 = vpop.f32.mrf.mxu0
    %v2667 = vadd.f32 %v2554, %v2666
    %v2668 = vpop.f32.mrf.mxu0
    %v2669 = vadd.f32 %v2556, %v2668
    %2670 = vmatprep.mubr.bf16.mxu0 %v1131
    %2671 = vmatmul.mubr.bf16.gmra.mxu0 %v1130
    %v2672 = vpop.f32.mrf.mxu0
    %v2673 = vadd.f32 %v2560, %v2672
    %v2674 = vpop.f32.mrf.mxu0
    %v2675 = vadd.f32 %v2562, %v2674
    %v2676 = vpop.f32.mrf.mxu0
    %v2677 = vadd.f32 %v2564, %v2676
    %v2678 = vpop.f32.mrf.mxu0
    %v2679 = vadd.f32 %v2566, %v2678
    %2680 = vdwg.mxu0
    %2681 = vmatprep.subr.bf16.mxu0 %v1891
    %2682 = vmatpush1.bf16.msra.mxu0 %v1890
    %2683 = vmatprep.subr.bf16.mxu0 %v1887
    %2684 = vmatpush1.bf16.msra.mxu0 %v1886
    %2685 = vmatprep.subr.bf16.mxu0 %v1883
    %2686 = vmatpush1.bf16.msra.mxu0 %v1882
    %2687 = vmatprep.subr.bf16.mxu0 %v1879
    %2688 = vmatpush1.bf16.msra.mxu0 %v1878
    %2689 = vmatprep.subr.bf16.mxu0 %v1875
    %2690 = vmatpush1.bf16.msra.mxu0 %v1874
    %2691 = vmatprep.subr.bf16.mxu0 %v1871
    %2692 = vmatpush1.bf16.msra.mxu0 %v1870
    %2693 = vmatprep.subr.bf16.mxu0 %v1867
    %2694 = vmatpush1.bf16.msra.mxu0 %v1866
    %2695 = vmatprep.subr.bf16.mxu0 %v1863
    %2696 = vmatpush1.bf16.msra.mxu0 %v1862
    %2697 = vmatprep.subr.bf16.mxu0 %v1923
    %2698 = vmatpush2.bf16.msra.mxu0 %v1922
    %2699 = vmatprep.subr.bf16.mxu0 %v1919
    %2700 = vmatpush2.bf16.msra.mxu0 %v1918
    %2701 = vmatprep.subr.bf16.mxu0 %v1915
    %2702 = vmatpush2.bf16.msra.mxu0 %v1914
    %2703 = vmatprep.subr.bf16.mxu0 %v1911
    %2704 = vmatpush2.bf16.msra.mxu0 %v1910
    %2705 = vmatprep.subr.bf16.mxu0 %v1907
    %2706 = vmatpush2.bf16.msra.mxu0 %v1906
    %2707 = vmatprep.subr.bf16.mxu0 %v1903
    %2708 = vmatpush2.bf16.msra.mxu0 %v1902
    %2709 = vmatprep.subr.bf16.mxu0 %v1899
    %2710 = vmatpush2.bf16.msra.mxu0 %v1898
    %2711 = vmatprep.subr.bf16.mxu0 %v1895
    %2712 = vmatpush2.bf16.msra.mxu0 %v1894
    %2713 = vmatprep.mubr.bf16.mxu0 %v1105
    %2714 = vmatmul.mubr.bf16.gmra.mxu0 %v1104
    %v2715 = vpop.f32.mrf.mxu0
    %v2716 = vadd.f32 %v2603, %v2715
    %v2717 = vpop.f32.mrf.mxu0
    %v2718 = vadd.f32 %v2605, %v2717
    %v2719 = vpop.f32.mrf.mxu0
    %v2720 = vadd.f32 %v2607, %v2719
    %v2721 = vpop.f32.mrf.mxu0
    %v2722 = vadd.f32 %v2609, %v2721
    %2723 = vmatprep.mubr.bf16.mxu0 %v1109
    %2724 = vmatmul.mubr.bf16.gmra.mxu0 %v1108
    %v2725 = vpop.f32.mrf.mxu0
    %v2726 = vadd.f32 %v2613, %v2725
    %v2727 = vpop.f32.mrf.mxu0
    %v2728 = vadd.f32 %v2615, %v2727
    %v2729 = vpop.f32.mrf.mxu0
    %v2730 = vadd.f32 %v2617, %v2729
    %v2731 = vpop.f32.mrf.mxu0
    %v2732 = vadd.f32 %v2619, %v2731
    %2733 = vmatprep.mubr.bf16.mxu0 %v1113
    %2734 = vmatmul.mubr.bf16.gmra.mxu0 %v1112
    %v2735 = vpop.f32.mrf.mxu0
    %v2736 = vadd.f32 %v2623, %v2735
    %v2737 = vpop.f32.mrf.mxu0
    %v2738 = vadd.f32 %v2625, %v2737
    %v2739 = vpop.f32.mrf.mxu0
    %v2740 = vadd.f32 %v2627, %v2739
    %v2741 = vpop.f32.mrf.mxu0
    %v2742 = vadd.f32 %v2629, %v2741
    %2743 = vmatprep.mubr.bf16.mxu0 %v1117
    %2744 = vmatmul.mubr.bf16.gmra.mxu0 %v1116
    %v2745 = vpop.f32.mrf.mxu0
    %v2746 = vadd.f32 %v2633, %v2745
    %v2747 = vpop.f32.mrf.mxu0
    %v2748 = vadd.f32 %v2635, %v2747
    %v2749 = vpop.f32.mrf.mxu0
    %v2750 = vadd.f32 %v2637, %v2749
    %v2751 = vpop.f32.mrf.mxu0
    %v2752 = vadd.f32 %v2639, %v2751
    %2753 = vmatprep.mubr.bf16.mxu0 %v1121
    %2754 = vmatmul.mubr.bf16.gmra.mxu0 %v1120
    %v2755 = vpop.f32.mrf.mxu0
    %v2756 = vadd.f32 %v2643, %v2755
    %v2757 = vpop.f32.mrf.mxu0
    %v2758 = vadd.f32 %v2645, %v2757
    %v2759 = vpop.f32.mrf.mxu0
    %v2760 = vadd.f32 %v2647, %v2759
    %v2761 = vpop.f32.mrf.mxu0
    %v2762 = vadd.f32 %v2649, %v2761
    %2763 = vmatprep.mubr.bf16.mxu0 %v1125
    %2764 = vmatmul.mubr.bf16.gmra.mxu0 %v1124
    %v2765 = vpop.f32.mrf.mxu0
    %v2766 = vadd.f32 %v2653, %v2765
    %v2767 = vpop.f32.mrf.mxu0
    %v2768 = vadd.f32 %v2655, %v2767
    %v2769 = vpop.f32.mrf.mxu0
    %v2770 = vadd.f32 %v2657, %v2769
    %v2771 = vpop.f32.mrf.mxu0
    %v2772 = vadd.f32 %v2659, %v2771
    %2773 = vmatprep.mubr.bf16.mxu0 %v1129
    %2774 = vmatmul.mubr.bf16.gmra.mxu0 %v1128
    %v2775 = vpop.f32.mrf.mxu0
    %v2776 = vadd.f32 %v2663, %v2775
    %v2777 = vpop.f32.mrf.mxu0
    %v2778 = vadd.f32 %v2665, %v2777
    %v2779 = vpop.f32.mrf.mxu0
    %v2780 = vadd.f32 %v2667, %v2779
    %v2781 = vpop.f32.mrf.mxu0
    %v2782 = vadd.f32 %v2669, %v2781
    %2783 = vmatprep.mubr.bf16.mxu0 %v1133
    %2784 = vmatmul.mubr.bf16.gmra.mxu0 %v1132
    %v2785 = vpop.f32.mrf.mxu0
    %v2786 = vadd.f32 %v2673, %v2785
    %v2787 = vpop.f32.mrf.mxu0
    %v2788 = vadd.f32 %v2675, %v2787
    %v2789 = vpop.f32.mrf.mxu0
    %v2790 = vadd.f32 %v2677, %v2789
    %v2791 = vpop.f32.mrf.mxu0
    %v2792 = vadd.f32 %v2679, %v2791
    %2793 = vdwg.mxu0
    %v2794 = vmax.f32 %v2377, 0.0
    %v2795 = vmax.f32 %v2379, 0.0
    %v2796 = vmax.f32 %v2716, 0.0
    %v2797 = vmax.f32 %v2718, 0.0
    %v2798 = vmax.f32 %v2381, 0.0
    %v2799 = vmax.f32 %v2383, 0.0
    %v2800 = vmax.f32 %v2720, 0.0
    %v2801 = vmax.f32 %v2722, 0.0
    %v2802 = vmax.f32 %v2387, 0.0
    %v2803 = vmax.f32 %v2389, 0.0
    %v2804 = vmax.f32 %v2726, 0.0
    %v2805 = vmax.f32 %v2728, 0.0
    %v2806 = vmax.f32 %v2391, 0.0
    %v2807 = vmax.f32 %v2393, 0.0
    %v2808 = vmax.f32 %v2730, 0.0
    %v2809 = vmax.f32 %v2732, 0.0
    %v2810 = vmax.f32 %v2397, 0.0
    %v2811 = vmax.f32 %v2399, 0.0
    %v2812 = vmax.f32 %v2736, 0.0
    %v2813 = vmax.f32 %v2738, 0.0
    %v2814 = vmax.f32 %v2401, 0.0
    %v2815 = vmax.f32 %v2403, 0.0
    %v2816 = vmax.f32 %v2740, 0.0
    %v2817 = vmax.f32 %v2742, 0.0
    %v2818 = vmax.f32 %v2407, 0.0
    %v2819 = vmax.f32 %v2409, 0.0
    %v2820 = vmax.f32 %v2746, 0.0
    %v2821 = vmax.f32 %v2748, 0.0
    %v2822 = vmax.f32 %v2411, 0.0
    %v2823 = vmax.f32 %v2413, 0.0
    %v2824 = vmax.f32 %v2750, 0.0
    %v2825 = vmax.f32 %v2752, 0.0
    %v2826 = vmax.f32 %v2417, 0.0
    %v2827 = vmax.f32 %v2419, 0.0
    %v2828 = vmax.f32 %v2756, 0.0
    %v2829 = vmax.f32 %v2758, 0.0
    %v2830 = vmax.f32 %v2421, 0.0
    %v2831 = vmax.f32 %v2423, 0.0
    %v2832 = vmax.f32 %v2760, 0.0
    %v2833 = vmax.f32 %v2762, 0.0
    %v2834 = vmax.f32 %v2427, 0.0
    %v2835 = vmax.f32 %v2429, 0.0
    %v2836 = vmax.f32 %v2766, 0.0
    %v2837 = vmax.f32 %v2768, 0.0
    %v2838 = vmax.f32 %v2431, 0.0
    %v2839 = vmax.f32 %v2433, 0.0
    %v2840 = vmax.f32 %v2770, 0.0
    %v2841 = vmax.f32 %v2772, 0.0
    %v2842 = vmax.f32 %v2437, 0.0
    %v2843 = vmax.f32 %v2439, 0.0
    %v2844 = vmax.f32 %v2776, 0.0
    %v2845 = vmax.f32 %v2778, 0.0
    %v2846 = vmax.f32 %v2441, 0.0
    %v2847 = vmax.f32 %v2443, 0.0
    %v2848 = vmax.f32 %v2780, 0.0
    %v2849 = vmax.f32 %v2782, 0.0
    %v2850 = vmax.f32 %v2447, 0.0
    %v2851 = vmax.f32 %v2449, 0.0
    %v2852 = vmax.f32 %v2786, 0.0
    %v2853 = vmax.f32 %v2788, 0.0
    %v2854 = vmax.f32 %v2451, 0.0
    %v2855 = vmax.f32 %v2453, 0.0
    %v2856 = vmax.f32 %v2790, 0.0
    %v2857 = vmax.f32 %v2792, 0.0
    %v2858 = vmax.f32 %v2794, %v2798
    %v2859 = vmax.f32 %v2795, %v2799
    %v2860 = vmax.f32 %v2796, %v2800
    %v2861 = vmax.f32 %v2797, %v2801
    %v2862 = vmax.f32 %v2802, %v2806
    %v2863 = vmax.f32 %v2803, %v2807
    %v2864 = vmax.f32 %v2804, %v2808
    %v2865 = vmax.f32 %v2805, %v2809
    %v2866 = vmax.f32 %v2810, %v2814
    %v2867 = vmax.f32 %v2811, %v2815
    %v2868 = vmax.f32 %v2812, %v2816
    %v2869 = vmax.f32 %v2813, %v2817
    %v2870 = vmax.f32 %v2818, %v2822
    %v2871 = vmax.f32 %v2819, %v2823
    %v2872 = vmax.f32 %v2820, %v2824
    %v2873 = vmax.f32 %v2821, %v2825
    %v2874 = vmax.f32 %v2826, %v2830
    %v2875 = vmax.f32 %v2827, %v2831
    %v2876 = vmax.f32 %v2828, %v2832
    %v2877 = vmax.f32 %v2829, %v2833
    %v2878 = vmax.f32 %v2834, %v2838
    %v2879 = vmax.f32 %v2835, %v2839
    %v2880 = vmax.f32 %v2836, %v2840
    %v2881 = vmax.f32 %v2837, %v2841
    %v2882 = vmax.f32 %v2842, %v2846
    %v2883 = vmax.f32 %v2843, %v2847
    %v2884 = vmax.f32 %v2844, %v2848
    %v2885 = vmax.f32 %v2845, %v2849
    %v2886 = vmax.f32 %v2850, %v2854
    %v2887 = vmax.f32 %v2851, %v2855
    %v2888 = vmax.f32 %v2852, %v2856
    %v2889 = vmax.f32 %v2853, %v2857
    %s2890 = smul.u32 4, 192
    %s2891 = smul.u32 %s2890, 1
    %s2892 = sshll.u32 %s2891, 4
    %2893 = dma.done %s43, %s2892
    %v2894 = vld [vmem:[#allocation3] sm:$0xf]
    %v2895 = vld [vmem:[#allocation3 + $0x4] sm:$0xf]
    %v2896 = vld [vmem:[#allocation3 + $0x8] sm:$0xf]
    %v2897 = vld [vmem:[#allocation3 + $0xc] sm:$0xf]
    %v2898 = vld [vmem:[#allocation3 + $0x10] sm:$0xf]
    %v2899 = vld [vmem:[#allocation3 + $0x14] sm:$0xf]
    %v2900 = vld [vmem:[#allocation3 + $0x18] sm:$0xf]
    %v2901 = vld [vmem:[#allocation3 + $0x1c] sm:$0xf]
    %v2902 = vld [vmem:[#allocation3 + $0x20] sm:$0xf]
    %v2903 = vld [vmem:[#allocation3 + $0x24] sm:$0xf]
    %v2904 = vld [vmem:[#allocation3 + $0x28] sm:$0xf]
    %v2905 = vld [vmem:[#allocation3 + $0x2c] sm:$0xf]
    %v2906 = vld [vmem:[#allocation3 + $0x30] sm:$0xf]
    %v2907 = vld [vmem:[#allocation3 + $0x34] sm:$0xf]
    %v2908 = vld [vmem:[#allocation3 + $0x38] sm:$0xf]
    %v2909 = vld [vmem:[#allocation3 + $0x3c] sm:$0xf]
    %v2910 = vld [vmem:[#allocation3 + $0x40] sm:$0xf]
    %v2911 = vld [vmem:[#allocation3 + $0x44] sm:$0xf]
    %v2912 = vld [vmem:[#allocation3 + $0x48] sm:$0xf]
    %v2913 = vld [vmem:[#allocation3 + $0x4c] sm:$0xf]
    %v2914 = vld [vmem:[#allocation3 + $0x50] sm:$0xf]
    %v2915 = vld [vmem:[#allocation3 + $0x54] sm:$0xf]
    %v2916 = vld [vmem:[#allocation3 + $0x58] sm:$0xf]
    %v2917 = vld [vmem:[#allocation3 + $0x5c] sm:$0xf]
    %v2918 = vld [vmem:[#allocation3 + $0x60] sm:$0xf]
    %v2919 = vld [vmem:[#allocation3 + $0x64] sm:$0xf]
    %v2920 = vld [vmem:[#allocation3 + $0x68] sm:$0xf]
    %v2921 = vld [vmem:[#allocation3 + $0x6c] sm:$0xf]
    %v2922 = vld [vmem:[#allocation3 + $0x70] sm:$0xf]
    %v2923 = vld [vmem:[#allocation3 + $0x74] sm:$0xf]
    %v2924 = vld [vmem:[#allocation3 + $0x78] sm:$0xf]
    %v2925 = vld [vmem:[#allocation3 + $0x7c] sm:$0xf]
    %v2926 = vld [vmem:[#allocation3 + $0x80] sm:$0xf]
    %v2927 = vld [vmem:[#allocation3 + $0x84] sm:$0xf]
    %v2928 = vld [vmem:[#allocation3 + $0x88] sm:$0xf]
    %v2929 = vld [vmem:[#allocation3 + $0x8c] sm:$0xf]
    %v2930 = vld [vmem:[#allocation3 + $0x90] sm:$0xf]
    %v2931 = vld [vmem:[#allocation3 + $0x94] sm:$0xf]
    %v2932 = vld [vmem:[#allocation3 + $0x98] sm:$0xf]
    %v2933 = vld [vmem:[#allocation3 + $0x9c] sm:$0xf]
    %v2934 = vld [vmem:[#allocation3 + $0xa0] sm:$0xf]
    %v2935 = vld [vmem:[#allocation3 + $0xa4] sm:$0xf]
    %v2936 = vld [vmem:[#allocation3 + $0xa8] sm:$0xf]
    %v2937 = vld [vmem:[#allocation3 + $0xac] sm:$0xf]
    %v2938 = vld [vmem:[#allocation3 + $0xb0] sm:$0xf]
    %v2939 = vld [vmem:[#allocation3 + $0xb4] sm:$0xf]
    %v2940 = vld [vmem:[#allocation3 + $0xb8] sm:$0xf]
    %v2941 = vld [vmem:[#allocation3 + $0xbc] sm:$0xf]
    %v2942 = vld [vmem:[#allocation3 + $0xc0] sm:$0xf]
    %v2943 = vld [vmem:[#allocation3 + $0xc4] sm:$0xf]
    %v2944 = vld [vmem:[#allocation3 + $0xc8] sm:$0xf]
    %v2945 = vld [vmem:[#allocation3 + $0xcc] sm:$0xf]
    %v2946 = vld [vmem:[#allocation3 + $0xd0] sm:$0xf]
    %v2947 = vld [vmem:[#allocation3 + $0xd4] sm:$0xf]
    %v2948 = vld [vmem:[#allocation3 + $0xd8] sm:$0xf]
    %v2949 = vld [vmem:[#allocation3 + $0xdc] sm:$0xf]
    %v2950 = vld [vmem:[#allocation3 + $0xe0] sm:$0xf]
    %v2951 = vld [vmem:[#allocation3 + $0xe4] sm:$0xf]
    %v2952 = vld [vmem:[#allocation3 + $0xe8] sm:$0xf]
    %v2953 = vld [vmem:[#allocation3 + $0xec] sm:$0xf]
    %v2954 = vld [vmem:[#allocation3 + $0xf0] sm:$0xf]
    %v2955 = vld [vmem:[#allocation3 + $0xf4] sm:$0xf]
    %v2956 = vld [vmem:[#allocation3 + $0xf8] sm:$0xf]
    %v2957 = vld [vmem:[#allocation3 + $0xfc] sm:$0xf]
    %v2958 = vld [vmem:[#allocation3 + $0x100] sm:$0xf]
    %v2959 = vld [vmem:[#allocation3 + $0x104] sm:$0xf]
    %v2960 = vld [vmem:[#allocation3 + $0x108] sm:$0xf]
    %v2961 = vld [vmem:[#allocation3 + $0x10c] sm:$0xf]
    %v2962 = vld [vmem:[#allocation3 + $0x110] sm:$0xf]
    %v2963 = vld [vmem:[#allocation3 + $0x114] sm:$0xf]
    %v2964 = vld [vmem:[#allocation3 + $0x118] sm:$0xf]
    %v2965 = vld [vmem:[#allocation3 + $0x11c] sm:$0xf]
    %v2966 = vld [vmem:[#allocation3 + $0x120] sm:$0xf]
    %v2967 = vld [vmem:[#allocation3 + $0x124] sm:$0xf]
    %v2968 = vld [vmem:[#allocation3 + $0x128] sm:$0xf]
    %v2969 = vld [vmem:[#allocation3 + $0x12c] sm:$0xf]
    %v2970 = vld [vmem:[#allocation3 + $0x130] sm:$0xf]
    %v2971 = vld [vmem:[#allocation3 + $0x134] sm:$0xf]
    %v2972 = vld [vmem:[#allocation3 + $0x138] sm:$0xf]
    %v2973 = vld [vmem:[#allocation3 + $0x13c] sm:$0xf]
    %v2974 = vld [vmem:[#allocation3 + $0x140] sm:$0xf]
    %v2975 = vld [vmem:[#allocation3 + $0x144] sm:$0xf]
    %v2976 = vld [vmem:[#allocation3 + $0x148] sm:$0xf]
    %v2977 = vld [vmem:[#allocation3 + $0x14c] sm:$0xf]
    %v2978 = vld [vmem:[#allocation3 + $0x150] sm:$0xf]
    %v2979 = vld [vmem:[#allocation3 + $0x154] sm:$0xf]
    %v2980 = vld [vmem:[#allocation3 + $0x158] sm:$0xf]
    %v2981 = vld [vmem:[#allocation3 + $0x15c] sm:$0xf]
    %v2982 = vld [vmem:[#allocation3 + $0x160] sm:$0xf]
    %v2983 = vld [vmem:[#allocation3 + $0x164] sm:$0xf]
    %v2984 = vld [vmem:[#allocation3 + $0x168] sm:$0xf]
    %v2985 = vld [vmem:[#allocation3 + $0x16c] sm:$0xf]
    %v2986 = vld [vmem:[#allocation3 + $0x170] sm:$0xf]
    %v2987 = vld [vmem:[#allocation3 + $0x174] sm:$0xf]
    %v2988 = vld [vmem:[#allocation3 + $0x178] sm:$0xf]
    %v2989 = vld [vmem:[#allocation3 + $0x17c] sm:$0xf]
    %v2990 = vld [vmem:[#allocation3 + $0x180] sm:$0xf]
    %v2991 = vld [vmem:[#allocation3 + $0x184] sm:$0xf]
    %v2992 = vld [vmem:[#allocation3 + $0x188] sm:$0xf]
    %v2993 = vld [vmem:[#allocation3 + $0x18c] sm:$0xf]
    %v2994 = vld [vmem:[#allocation3 + $0x190] sm:$0xf]
    %v2995 = vld [vmem:[#allocation3 + $0x194] sm:$0xf]
    %v2996 = vld [vmem:[#allocation3 + $0x198] sm:$0xf]
    %v2997 = vld [vmem:[#allocation3 + $0x19c] sm:$0xf]
    %v2998 = vld [vmem:[#allocation3 + $0x1a0] sm:$0xf]
    %v2999 = vld [vmem:[#allocation3 + $0x1a4] sm:$0xf]
    %v3000 = vld [vmem:[#allocation3 + $0x1a8] sm:$0xf]
    %v3001 = vld [vmem:[#allocation3 + $0x1ac] sm:$0xf]
    %v3002 = vld [vmem:[#allocation3 + $0x1b0] sm:$0xf]
    %v3003 = vld [vmem:[#allocation3 + $0x1b4] sm:$0xf]
    %v3004 = vld [vmem:[#allocation3 + $0x1b8] sm:$0xf]
    %v3005 = vld [vmem:[#allocation3 + $0x1bc] sm:$0xf]
    %v3006 = vld [vmem:[#allocation3 + $0x1c0] sm:$0xf]
    %v3007 = vld [vmem:[#allocation3 + $0x1c4] sm:$0xf]
    %v3008 = vld [vmem:[#allocation3 + $0x1c8] sm:$0xf]
    %v3009 = vld [vmem:[#allocation3 + $0x1cc] sm:$0xf]
    %v3010 = vld [vmem:[#allocation3 + $0x1d0] sm:$0xf]
    %v3011 = vld [vmem:[#allocation3 + $0x1d4] sm:$0xf]
    %v3012 = vld [vmem:[#allocation3 + $0x1d8] sm:$0xf]
    %v3013 = vld [vmem:[#allocation3 + $0x1dc] sm:$0xf]
    %v3014 = vld [vmem:[#allocation3 + $0x1e0] sm:$0xf]
    %v3015 = vld [vmem:[#allocation3 + $0x1e4] sm:$0xf]
    %v3016 = vld [vmem:[#allocation3 + $0x1e8] sm:$0xf]
    %v3017 = vld [vmem:[#allocation3 + $0x1ec] sm:$0xf]
    %v3018 = vld [vmem:[#allocation3 + $0x1f0] sm:$0xf]
    %v3019 = vld [vmem:[#allocation3 + $0x1f4] sm:$0xf]
    %v3020 = vld [vmem:[#allocation3 + $0x1f8] sm:$0xf]
    %v3021 = vld [vmem:[#allocation3 + $0x1fc] sm:$0xf]
    %v3022 = vld [vmem:[#allocation3 + $0x200] sm:$0xf]
    %v3023 = vld [vmem:[#allocation3 + $0x204] sm:$0xf]
    %v3024 = vld [vmem:[#allocation3 + $0x208] sm:$0xf]
    %v3025 = vld [vmem:[#allocation3 + $0x20c] sm:$0xf]
    %v3026 = vld [vmem:[#allocation3 + $0x210] sm:$0xf]
    %v3027 = vld [vmem:[#allocation3 + $0x214] sm:$0xf]
    %v3028 = vld [vmem:[#allocation3 + $0x218] sm:$0xf]
    %v3029 = vld [vmem:[#allocation3 + $0x21c] sm:$0xf]
    %v3030 = vld [vmem:[#allocation3 + $0x220] sm:$0xf]
    %v3031 = vld [vmem:[#allocation3 + $0x224] sm:$0xf]
    %v3032 = vld [vmem:[#allocation3 + $0x228] sm:$0xf]
    %v3033 = vld [vmem:[#allocation3 + $0x22c] sm:$0xf]
    %v3034 = vld [vmem:[#allocation3 + $0x230] sm:$0xf]
    %v3035 = vld [vmem:[#allocation3 + $0x234] sm:$0xf]
    %v3036 = vld [vmem:[#allocation3 + $0x238] sm:$0xf]
    %v3037 = vld [vmem:[#allocation3 + $0x23c] sm:$0xf]
    %v3038 = vld [vmem:[#allocation3 + $0x240] sm:$0xf]
    %v3039 = vld [vmem:[#allocation3 + $0x244] sm:$0xf]
    %v3040 = vld [vmem:[#allocation3 + $0x248] sm:$0xf]
    %v3041 = vld [vmem:[#allocation3 + $0x24c] sm:$0xf]
    %v3042 = vld [vmem:[#allocation3 + $0x250] sm:$0xf]
    %v3043 = vld [vmem:[#allocation3 + $0x254] sm:$0xf]
    %v3044 = vld [vmem:[#allocation3 + $0x258] sm:$0xf]
    %v3045 = vld [vmem:[#allocation3 + $0x25c] sm:$0xf]
    %v3046 = vld [vmem:[#allocation3 + $0x260] sm:$0xf]
    %v3047 = vld [vmem:[#allocation3 + $0x264] sm:$0xf]
    %v3048 = vld [vmem:[#allocation3 + $0x268] sm:$0xf]
    %v3049 = vld [vmem:[#allocation3 + $0x26c] sm:$0xf]
    %v3050 = vld [vmem:[#allocation3 + $0x270] sm:$0xf]
    %v3051 = vld [vmem:[#allocation3 + $0x274] sm:$0xf]
    %v3052 = vld [vmem:[#allocation3 + $0x278] sm:$0xf]
    %v3053 = vld [vmem:[#allocation3 + $0x27c] sm:$0xf]
    %v3054 = vld [vmem:[#allocation3 + $0x280] sm:$0xf]
    %v3055 = vld [vmem:[#allocation3 + $0x284] sm:$0xf]
    %v3056 = vld [vmem:[#allocation3 + $0x288] sm:$0xf]
    %v3057 = vld [vmem:[#allocation3 + $0x28c] sm:$0xf]
    %v3058 = vld [vmem:[#allocation3 + $0x290] sm:$0xf]
    %v3059 = vld [vmem:[#allocation3 + $0x294] sm:$0xf]
    %v3060 = vld [vmem:[#allocation3 + $0x298] sm:$0xf]
    %v3061 = vld [vmem:[#allocation3 + $0x29c] sm:$0xf]
    %v3062 = vld [vmem:[#allocation3 + $0x2a0] sm:$0xf]
    %v3063 = vld [vmem:[#allocation3 + $0x2a4] sm:$0xf]
    %v3064 = vld [vmem:[#allocation3 + $0x2a8] sm:$0xf]
    %v3065 = vld [vmem:[#allocation3 + $0x2ac] sm:$0xf]
    %v3066 = vld [vmem:[#allocation3 + $0x2b0] sm:$0xf]
    %v3067 = vld [vmem:[#allocation3 + $0x2b4] sm:$0xf]
    %v3068 = vld [vmem:[#allocation3 + $0x2b8] sm:$0xf]
    %v3069 = vld [vmem:[#allocation3 + $0x2bc] sm:$0xf]
    %v3070 = vld [vmem:[#allocation3 + $0x2c0] sm:$0xf]
    %v3071 = vld [vmem:[#allocation3 + $0x2c4] sm:$0xf]
    %v3072 = vld [vmem:[#allocation3 + $0x2c8] sm:$0xf]
    %v3073 = vld [vmem:[#allocation3 + $0x2cc] sm:$0xf]
    %v3074 = vld [vmem:[#allocation3 + $0x2d0] sm:$0xf]
    %v3075 = vld [vmem:[#allocation3 + $0x2d4] sm:$0xf]
    %v3076 = vld [vmem:[#allocation3 + $0x2d8] sm:$0xf]
    %v3077 = vld [vmem:[#allocation3 + $0x2dc] sm:$0xf]
    %v3078 = vld [vmem:[#allocation3 + $0x2e0] sm:$0xf]
    %v3079 = vld [vmem:[#allocation3 + $0x2e4] sm:$0xf]
    %v3080 = vld [vmem:[#allocation3 + $0x2e8] sm:$0xf]
    %v3081 = vld [vmem:[#allocation3 + $0x2ec] sm:$0xf]
    %v3082 = vld [vmem:[#allocation3 + $0x2f0] sm:$0xf]
    %v3083 = vld [vmem:[#allocation3 + $0x2f4] sm:$0xf]
    %v3084 = vld [vmem:[#allocation3 + $0x2f8] sm:$0xf]
    %v3085 = vld [vmem:[#allocation3 + $0x2fc] sm:$0xf]
    %v3086 = vpack.c.bf16 %v2858, 0.0
    %v3087 = vpack.c.bf16 %v2859, 0.0
    %v3088 = vpack.c.bf16 %v2860, 0.0
    %v3089 = vpack.c.bf16 %v2861, 0.0
    %v3090 = vpack.c.bf16 %v2862, %v2858
    %v3091 = vpack.c.bf16 %v2863, %v2859
    %v3092 = vpack.c.bf16 %v2864, %v2860
    %v3093 = vpack.c.bf16 %v2865, %v2861
    %v3094 = vpack.c.bf16 %v2866, %v2862
    %v3095 = vpack.c.bf16 %v2867, %v2863
    %v3096 = vpack.c.bf16 %v2868, %v2864
    %v3097 = vpack.c.bf16 %v2869, %v2865
    %v3098 = vpack.c.bf16 %v2870, %v2866
    %v3099 = vpack.c.bf16 %v2871, %v2867
    %v3100 = vpack.c.bf16 %v2872, %v2868
    %v3101 = vpack.c.bf16 %v2873, %v2869
    %v3102 = vpack.c.bf16 %v2874, %v2870
    %v3103 = vpack.c.bf16 %v2875, %v2871
    %v3104 = vpack.c.bf16 %v2876, %v2872
    %v3105 = vpack.c.bf16 %v2877, %v2873
    %v3106 = vpack.c.bf16 %v2878, %v2874
    %v3107 = vpack.c.bf16 %v2879, %v2875
    %v3108 = vpack.c.bf16 %v2880, %v2876
    %v3109 = vpack.c.bf16 %v2881, %v2877
    %v3110 = vpack.c.bf16 %v2882, %v2878
    %v3111 = vpack.c.bf16 %v2883, %v2879
    %v3112 = vpack.c.bf16 %v2884, %v2880
    %v3113 = vpack.c.bf16 %v2885, %v2881
    %v3114 = vpack.c.bf16 %v2886, %v2882
    %v3115 = vpack.c.bf16 %v2887, %v2883
    %v3116 = vpack.c.bf16 %v2888, %v2884
    %v3117 = vpack.c.bf16 %v2889, %v2885
    %v3118 = vpack.c.bf16 0.0, %v2886
    %v3119 = vpack.c.bf16 0.0, %v2887
    %v3120 = vpack.c.bf16 0.0, %v2888
    %v3121 = vpack.c.bf16 0.0, %v2889
    %v3122 = vld [vmem:[%s4] sm:$0x1]
    %v3124 = vlaneseq
    %v3125 = vshrl.u32 %v3124, 7
    %v3126 = vsub.s32 0, %v3125
    %v3127 = vrot.slane %v3122, %v3126
    %v3321 = vunpack.c.l.b16 %v2894
    %v3322 = vunpack.c.l.b16 %v2895
    %v3323 = vunpack.c.l.b16 %v2896
    %v3324 = vunpack.c.l.b16 %v2897
    %v3325 = vunpack.c.l.b16 %v2898
    %v3326 = vunpack.c.l.b16 %v2899
    %v3327 = vunpack.c.l.b16 %v2900
    %v3328 = vunpack.c.l.b16 %v2901
    %v3329 = vunpack.c.l.b16 %v2902
    %v3330 = vunpack.c.l.b16 %v2903
    %v3331 = vunpack.c.l.b16 %v2904
    %v3332 = vunpack.c.l.b16 %v2905
    %v3333 = vunpack.c.l.b16 %v2906
    %v3334 = vunpack.c.l.b16 %v2907
    %v3335 = vunpack.c.l.b16 %v2908
    %v3336 = vunpack.c.l.b16 %v2909
    %v3337 = vunpack.c.l.b16 %v2910
    %v3338 = vunpack.c.l.b16 %v2911
    %v3339 = vunpack.c.l.b16 %v2912
    %v3340 = vunpack.c.l.b16 %v2913
    %v3341 = vunpack.c.l.b16 %v2914
    %v3342 = vunpack.c.l.b16 %v2915
    %v3343 = vunpack.c.l.b16 %v2916
    %v3344 = vunpack.c.l.b16 %v2917
    %v3345 = vunpack.c.l.b16 %v2918
    %v3346 = vunpack.c.l.b16 %v2919
    %v3347 = vunpack.c.l.b16 %v2920
    %v3348 = vunpack.c.l.b16 %v2921
    %v3349 = vunpack.c.l.b16 %v2922
    %v3350 = vunpack.c.l.b16 %v2923
    %v3351 = vunpack.c.l.b16 %v2924
    %v3352 = vunpack.c.l.b16 %v2925
    %v3353 = vunpack.c.l.b16 %v2926
    %v3354 = vunpack.c.l.b16 %v2927
    %v3355 = vunpack.c.l.b16 %v2928
    %v3356 = vunpack.c.l.b16 %v2929
    %v3357 = vunpack.c.l.b16 %v2930
    %v3358 = vunpack.c.l.b16 %v2931
    %v3359 = vunpack.c.l.b16 %v2932
    %v3360 = vunpack.c.l.b16 %v2933
    %v3361 = vunpack.c.l.b16 %v2934
    %v3362 = vunpack.c.l.b16 %v2935
    %v3363 = vunpack.c.l.b16 %v2936
    %v3364 = vunpack.c.l.b16 %v2937
    %v3365 = vunpack.c.l.b16 %v2938
    %v3366 = vunpack.c.l.b16 %v2939
    %v3367 = vunpack.c.l.b16 %v2940
    %v3368 = vunpack.c.l.b16 %v2941
    %v3369 = vunpack.c.l.b16 %v2942
    %v3370 = vunpack.c.l.b16 %v2943
    %v3371 = vunpack.c.l.b16 %v2944
    %v3372 = vunpack.c.l.b16 %v2945
    %v3373 = vunpack.c.l.b16 %v2946
    %v3374 = vunpack.c.l.b16 %v2947
    %v3375 = vunpack.c.l.b16 %v2948
    %v3376 = vunpack.c.l.b16 %v2949
    %v3377 = vunpack.c.l.b16 %v2950
    %v3378 = vunpack.c.l.b16 %v2951
    %v3379 = vunpack.c.l.b16 %v2952
    %v3380 = vunpack.c.l.b16 %v2953
    %v3381 = vunpack.c.l.b16 %v2954
    %v3382 = vunpack.c.l.b16 %v2955
    %v3383 = vunpack.c.l.b16 %v2956
    %v3384 = vunpack.c.l.b16 %v2957
    %v3385 = vunpack.c.l.b16 %v2958
    %v3386 = vunpack.c.l.b16 %v2959
    %v3387 = vunpack.c.l.b16 %v2960
    %v3388 = vunpack.c.l.b16 %v2961
    %v3389 = vunpack.c.l.b16 %v2962
    %v3390 = vunpack.c.l.b16 %v2963
    %v3391 = vunpack.c.l.b16 %v2964
    %v3392 = vunpack.c.l.b16 %v2965
    %v3393 = vunpack.c.l.b16 %v2966
    %v3394 = vunpack.c.l.b16 %v2967
    %v3395 = vunpack.c.l.b16 %v2968
    %v3396 = vunpack.c.l.b16 %v2969
    %v3397 = vunpack.c.l.b16 %v2970
    %v3398 = vunpack.c.l.b16 %v2971
    %v3399 = vunpack.c.l.b16 %v2972
    %v3400 = vunpack.c.l.b16 %v2973
    %v3401 = vunpack.c.l.b16 %v2974
    %v3402 = vunpack.c.l.b16 %v2975
    %v3403 = vunpack.c.l.b16 %v2976
    %v3404 = vunpack.c.l.b16 %v2977
    %v3405 = vunpack.c.l.b16 %v2978
    %v3406 = vunpack.c.l.b16 %v2979
    %v3407 = vunpack.c.l.b16 %v2980
    %v3408 = vunpack.c.l.b16 %v2981
    %v3409 = vunpack.c.l.b16 %v2982
    %v3410 = vunpack.c.l.b16 %v2983
    %v3411 = vunpack.c.l.b16 %v2984
    %v3412 = vunpack.c.l.b16 %v2985
    %v3413 = vunpack.c.l.b16 %v2986
    %v3414 = vunpack.c.l.b16 %v2987
    %v3415 = vunpack.c.l.b16 %v2988
    %v3416 = vunpack.c.l.b16 %v2989
    %v3417 = vunpack.c.l.b16 %v2990
    %v3418 = vunpack.c.l.b16 %v2991
    %v3419 = vunpack.c.l.b16 %v2992
    %v3420 = vunpack.c.l.b16 %v2993
    %v3421 = vunpack.c.l.b16 %v2994
    %v3422 = vunpack.c.l.b16 %v2995
    %v3423 = vunpack.c.l.b16 %v2996
    %v3424 = vunpack.c.l.b16 %v2997
    %v3425 = vunpack.c.l.b16 %v2998
    %v3426 = vunpack.c.l.b16 %v2999
    %v3427 = vunpack.c.l.b16 %v3000
    %v3428 = vunpack.c.l.b16 %v3001
    %v3429 = vunpack.c.l.b16 %v3002
    %v3430 = vunpack.c.l.b16 %v3003
    %v3431 = vunpack.c.l.b16 %v3004
    %v3432 = vunpack.c.l.b16 %v3005
    %v3433 = vunpack.c.l.b16 %v3006
    %v3434 = vunpack.c.l.b16 %v3007
    %v3435 = vunpack.c.l.b16 %v3008
    %v3436 = vunpack.c.l.b16 %v3009
    %v3437 = vunpack.c.l.b16 %v3010
    %v3438 = vunpack.c.l.b16 %v3011
    %v3439 = vunpack.c.l.b16 %v3012
    %v3440 = vunpack.c.l.b16 %v3013
    %v3441 = vunpack.c.l.b16 %v3014
    %v3442 = vunpack.c.l.b16 %v3015
    %v3443 = vunpack.c.l.b16 %v3016
    %v3444 = vunpack.c.l.b16 %v3017
    %v3445 = vunpack.c.l.b16 %v3018
    %v3446 = vunpack.c.l.b16 %v3019
    %v3447 = vunpack.c.l.b16 %v3020
    %v3448 = vunpack.c.l.b16 %v3021
    %v3449 = vunpack.c.l.b16 %v3022
    %v3450 = vunpack.c.l.b16 %v3023
    %v3451 = vunpack.c.l.b16 %v3024
    %v3452 = vunpack.c.l.b16 %v3025
    %v3453 = vunpack.c.l.b16 %v3026
    %v3454 = vunpack.c.l.b16 %v3027
    %v3455 = vunpack.c.l.b16 %v3028
    %v3456 = vunpack.c.l.b16 %v3029
    %v3457 = vunpack.c.l.b16 %v3030
    %v3458 = vunpack.c.l.b16 %v3031
    %v3459 = vunpack.c.l.b16 %v3032
    %v3460 = vunpack.c.l.b16 %v3033
    %v3461 = vunpack.c.l.b16 %v3034
    %v3462 = vunpack.c.l.b16 %v3035
    %v3463 = vunpack.c.l.b16 %v3036
    %v3464 = vunpack.c.l.b16 %v3037
    %v3465 = vunpack.c.l.b16 %v3038
    %v3466 = vunpack.c.l.b16 %v3039
    %v3467 = vunpack.c.l.b16 %v3040
    %v3468 = vunpack.c.l.b16 %v3041
    %v3469 = vunpack.c.l.b16 %v3042
    %v3470 = vunpack.c.l.b16 %v3043
    %v3471 = vunpack.c.l.b16 %v3044
    %v3472 = vunpack.c.l.b16 %v3045
    %v3473 = vunpack.c.l.b16 %v3046
    %v3474 = vunpack.c.l.b16 %v3047
    %v3475 = vunpack.c.l.b16 %v3048
    %v3476 = vunpack.c.l.b16 %v3049
    %v3477 = vunpack.c.l.b16 %v3050
    %v3478 = vunpack.c.l.b16 %v3051
    %v3479 = vunpack.c.l.b16 %v3052
    %v3480 = vunpack.c.l.b16 %v3053
    %v3481 = vunpack.c.l.b16 %v3054
    %v3482 = vunpack.c.l.b16 %v3055
    %v3483 = vunpack.c.l.b16 %v3056
    %v3484 = vunpack.c.l.b16 %v3057
    %v3485 = vunpack.c.l.b16 %v3058
    %v3486 = vunpack.c.l.b16 %v3059
    %v3487 = vunpack.c.l.b16 %v3060
    %v3488 = vunpack.c.l.b16 %v3061
    %v3489 = vunpack.c.l.b16 %v3062
    %v3490 = vunpack.c.l.b16 %v3063
    %v3491 = vunpack.c.l.b16 %v3064
    %v3492 = vunpack.c.l.b16 %v3065
    %v3493 = vunpack.c.l.b16 %v3066
    %v3494 = vunpack.c.l.b16 %v3067
    %v3495 = vunpack.c.l.b16 %v3068
    %v3496 = vunpack.c.l.b16 %v3069
    %v3497 = vunpack.c.l.b16 %v3070
    %v3498 = vunpack.c.l.b16 %v3071
    %v3499 = vunpack.c.l.b16 %v3072
    %v3500 = vunpack.c.l.b16 %v3073
    %v3501 = vunpack.c.l.b16 %v3074
    %v3502 = vunpack.c.l.b16 %v3075
    %v3503 = vunpack.c.l.b16 %v3076
    %v3504 = vunpack.c.l.b16 %v3077
    %v3505 = vunpack.c.l.b16 %v3078
    %v3506 = vunpack.c.l.b16 %v3079
    %v3507 = vunpack.c.l.b16 %v3080
    %v3508 = vunpack.c.l.b16 %v3081
    %v3509 = vunpack.c.l.b16 %v3082
    %v3510 = vunpack.c.l.b16 %v3083
    %v3511 = vunpack.c.l.b16 %v3084
    %v3512 = vunpack.c.l.b16 %v3085
    %v3513 = vpack.c.b16 %v3322, %v3321
    %v3514 = vpack.c.b16 %v3324, %v3323
    %v3515 = vpack.c.b16 %v3326, %v3325
    %v3516 = vpack.c.b16 %v3328, %v3327
    %v3517 = vpack.c.b16 %v3330, %v3329
    %v3518 = vpack.c.b16 %v3332, %v3331
    %v3519 = vpack.c.b16 %v3334, %v3333
    %v3520 = vpack.c.b16 %v3336, %v3335
    %v3521 = vpack.c.b16 %v3338, %v3337
    %v3522 = vpack.c.b16 %v3340, %v3339
    %v3523 = vpack.c.b16 %v3342, %v3341
    %v3524 = vpack.c.b16 %v3344, %v3343
    %v3525 = vpack.c.b16 %v3346, %v3345
    %v3526 = vpack.c.b16 %v3348, %v3347
    %v3527 = vpack.c.b16 %v3350, %v3349
    %v3528 = vpack.c.b16 %v3352, %v3351
    %v3529 = vpack.c.b16 %v3354, %v3353
    %v3530 = vpack.c.b16 %v3356, %v3355
    %v3531 = vpack.c.b16 %v3358, %v3357
    %v3532 = vpack.c.b16 %v3360, %v3359
    %v3533 = vpack.c.b16 %v3362, %v3361
    %v3534 = vpack.c.b16 %v3364, %v3363
    %v3535 = vpack.c.b16 %v3366, %v3365
    %v3536 = vpack.c.b16 %v3368, %v3367
    %v3537 = vpack.c.b16 %v3370, %v3369
    %v3538 = vpack.c.b16 %v3372, %v3371
    %v3539 = vpack.c.b16 %v3374, %v3373
    %v3540 = vpack.c.b16 %v3376, %v3375
    %v3541 = vpack.c.b16 %v3378, %v3377
    %v3542 = vpack.c.b16 %v3380, %v3379
    %v3543 = vpack.c.b16 %v3382, %v3381
    %v3544 = vpack.c.b16 %v3384, %v3383
    %v3545 = vpack.c.b16 %v3386, %v3385
    %v3546 = vpack.c.b16 %v3388, %v3387
    %v3547 = vpack.c.b16 %v3390, %v3389
    %v3548 = vpack.c.b16 %v3392, %v3391
    %v3549 = vpack.c.b16 %v3394, %v3393
    %v3550 = vpack.c.b16 %v3396, %v3395
    %v3551 = vpack.c.b16 %v3398, %v3397
    %v3552 = vpack.c.b16 %v3400, %v3399
    %v3553 = vpack.c.b16 %v3402, %v3401
    %v3554 = vpack.c.b16 %v3404, %v3403
    %v3555 = vpack.c.b16 %v3406, %v3405
    %v3556 = vpack.c.b16 %v3408, %v3407
    %v3557 = vpack.c.b16 %v3410, %v3409
    %v3558 = vpack.c.b16 %v3412, %v3411
    %v3559 = vpack.c.b16 %v3414, %v3413
    %v3560 = vpack.c.b16 %v3416, %v3415
    %v3561 = vpack.c.b16 %v3418, %v3417
    %v3562 = vpack.c.b16 %v3420, %v3419
    %v3563 = vpack.c.b16 %v3422, %v3421
    %v3564 = vpack.c.b16 %v3424, %v3423
    %v3565 = vpack.c.b16 %v3426, %v3425
    %v3566 = vpack.c.b16 %v3428, %v3427
    %v3567 = vpack.c.b16 %v3430, %v3429
    %v3568 = vpack.c.b16 %v3432, %v3431
    %v3569 = vpack.c.b16 %v3434, %v3433
    %v3570 = vpack.c.b16 %v3436, %v3435
    %v3571 = vpack.c.b16 %v3438, %v3437
    %v3572 = vpack.c.b16 %v3440, %v3439
    %v3573 = vpack.c.b16 %v3442, %v3441
    %v3574 = vpack.c.b16 %v3444, %v3443
    %v3575 = vpack.c.b16 %v3446, %v3445
    %v3576 = vpack.c.b16 %v3448, %v3447
    %v3577 = vpack.c.b16 %v3450, %v3449
    %v3578 = vpack.c.b16 %v3452, %v3451
    %v3579 = vpack.c.b16 %v3454, %v3453
    %v3580 = vpack.c.b16 %v3456, %v3455
    %v3581 = vpack.c.b16 %v3458, %v3457
    %v3582 = vpack.c.b16 %v3460, %v3459
    %v3583 = vpack.c.b16 %v3462, %v3461
    %v3584 = vpack.c.b16 %v3464, %v3463
    %v3585 = vpack.c.b16 %v3466, %v3465
    %v3586 = vpack.c.b16 %v3468, %v3467
    %v3587 = vpack.c.b16 %v3470, %v3469
    %v3588 = vpack.c.b16 %v3472, %v3471
    %v3589 = vpack.c.b16 %v3474, %v3473
    %v3590 = vpack.c.b16 %v3476, %v3475
    %v3591 = vpack.c.b16 %v3478, %v3477
    %v3592 = vpack.c.b16 %v3480, %v3479
    %v3593 = vpack.c.b16 %v3482, %v3481
    %v3594 = vpack.c.b16 %v3484, %v3483
    %v3595 = vpack.c.b16 %v3486, %v3485
    %v3596 = vpack.c.b16 %v3488, %v3487
    %v3597 = vpack.c.b16 %v3490, %v3489
    %v3598 = vpack.c.b16 %v3492, %v3491
    %v3599 = vpack.c.b16 %v3494, %v3493
    %v3600 = vpack.c.b16 %v3496, %v3495
    %v3601 = vpack.c.b16 %v3498, %v3497
    %v3602 = vpack.c.b16 %v3500, %v3499
    %v3603 = vpack.c.b16 %v3502, %v3501
    %v3604 = vpack.c.b16 %v3504, %v3503
    %v3605 = vpack.c.b16 %v3506, %v3505
    %v3606 = vpack.c.b16 %v3508, %v3507
    %v3607 = vpack.c.b16 %v3510, %v3509
    %v3608 = vpack.c.b16 %v3512, %v3511
    %3705 = vmatprep.subr.bf16.mxu0 0
    %3706 = vmatpush1.bf16.msra.mxu0 %v3520
    %3707 = vmatprep.subr.bf16.mxu0 0
    %3708 = vmatpush1.bf16.msra.mxu0 %v3519
    %3709 = vmatprep.subr.bf16.mxu0 0
    %3710 = vmatpush1.bf16.msra.mxu0 %v3518
    %3711 = vmatprep.subr.bf16.mxu0 0
    %3712 = vmatpush1.bf16.msra.mxu0 %v3517
    %3713 = vmatprep.subr.bf16.mxu0 0
    %3714 = vmatpush1.bf16.msra.mxu0 %v3516
    %3715 = vmatprep.subr.bf16.mxu0 0
    %3716 = vmatpush1.bf16.msra.mxu0 %v3515
    %3717 = vmatprep.subr.bf16.mxu0 0
    %3718 = vmatpush1.bf16.msra.mxu0 %v3514
    %3719 = vmatprep.subr.bf16.mxu0 0
    %3720 = vmatpush1.bf16.msra.mxu0 %v3513
    %3721 = vmatprep.subr.bf16.mxu0 0
    %3722 = vmatpush2.bf16.msra.mxu0 %v3528
    %3723 = vmatprep.subr.bf16.mxu0 0
    %3724 = vmatpush2.bf16.msra.mxu0 %v3527
    %3725 = vmatprep.subr.bf16.mxu0 0
    %3726 = vmatpush2.bf16.msra.mxu0 %v3526
    %3727 = vmatprep.subr.bf16.mxu0 0
    %3728 = vmatpush2.bf16.msra.mxu0 %v3525
    %3729 = vmatprep.subr.bf16.mxu0 0
    %3730 = vmatpush2.bf16.msra.mxu0 %v3524
    %3731 = vmatprep.subr.bf16.mxu0 0
    %3732 = vmatpush2.bf16.msra.mxu0 %v3523
    %3733 = vmatprep.subr.bf16.mxu0 0
    %3734 = vmatpush2.bf16.msra.mxu0 %v3522
    %3735 = vmatprep.subr.bf16.mxu0 0
    %3736 = vmatpush2.bf16.msra.mxu0 %v3521
    %3737 = vmatprep.mubr.bf16.mxu0 %v3087
    %3738 = vmatmul.mubr.bf16.gmra.mxu0 %v3086
    %v3739 = vpop.f32.mrf.mxu0
    %v3740 = vadd.f32 %v3127, %v3739
    %v3741 = vpop.f32.mrf.mxu0
    %v3742 = vpop.f32.mrf.mxu0
    %v3743 = vadd.f32 %v3127, %v3742
    %v3744 = vpop.f32.mrf.mxu0
    %3745 = vmatprep.mubr.bf16.mxu0 %v3095
    %3746 = vmatmul.mubr.bf16.gmra.mxu0 %v3094
    %v3747 = vpop.f32.mrf.mxu0
    %v3748 = vadd.f32 %v3127, %v3747
    %v3749 = vpop.f32.mrf.mxu0
    %v3750 = vpop.f32.mrf.mxu0
    %v3751 = vadd.f32 %v3127, %v3750
    %v3752 = vpop.f32.mrf.mxu0
    %3753 = vmatprep.mubr.bf16.mxu0 %v3103
    %3754 = vmatmul.mubr.bf16.gmra.mxu0 %v3102
    %v3755 = vpop.f32.mrf.mxu0
    %v3756 = vadd.f32 %v3127, %v3755
    %v3757 = vpop.f32.mrf.mxu0
    %v3758 = vpop.f32.mrf.mxu0
    %v3759 = vadd.f32 %v3127, %v3758
    %v3760 = vpop.f32.mrf.mxu0
    %3761 = vmatprep.mubr.bf16.mxu0 %v3111
    %3762 = vmatmul.mubr.bf16.gmra.mxu0 %v3110
    %v3763 = vpop.f32.mrf.mxu0
    %v3764 = vadd.f32 %v3127, %v3763
    %v3765 = vpop.f32.mrf.mxu0
    %v3766 = vpop.f32.mrf.mxu0
    %v3767 = vadd.f32 %v3127, %v3766
    %v3768 = vpop.f32.mrf.mxu0
    %3769 = vdwg.mxu0
    %3770 = vmatprep.subr.bf16.mxu0 0
    %3771 = vmatpush1.bf16.msra.mxu0 %v3536
    %3772 = vmatprep.subr.bf16.mxu0 0
    %3773 = vmatpush1.bf16.msra.mxu0 %v3535
    %3774 = vmatprep.subr.bf16.mxu0 0
    %3775 = vmatpush1.bf16.msra.mxu0 %v3534
    %3776 = vmatprep.subr.bf16.mxu0 0
    %3777 = vmatpush1.bf16.msra.mxu0 %v3533
    %3778 = vmatprep.subr.bf16.mxu0 0
    %3779 = vmatpush1.bf16.msra.mxu0 %v3532
    %3780 = vmatprep.subr.bf16.mxu0 0
    %3781 = vmatpush1.bf16.msra.mxu0 %v3531
    %3782 = vmatprep.subr.bf16.mxu0 0
    %3783 = vmatpush1.bf16.msra.mxu0 %v3530
    %3784 = vmatprep.subr.bf16.mxu0 0
    %3785 = vmatpush1.bf16.msra.mxu0 %v3529
    %3786 = vmatprep.subr.bf16.mxu0 0
    %3787 = vmatpush2.bf16.msra.mxu0 %v3544
    %3788 = vmatprep.subr.bf16.mxu0 0
    %3789 = vmatpush2.bf16.msra.mxu0 %v3543
    %3790 = vmatprep.subr.bf16.mxu0 0
    %3791 = vmatpush2.bf16.msra.mxu0 %v3542
    %3792 = vmatprep.subr.bf16.mxu0 0
    %3793 = vmatpush2.bf16.msra.mxu0 %v3541
    %3794 = vmatprep.subr.bf16.mxu0 0
    %3795 = vmatpush2.bf16.msra.mxu0 %v3540
    %3796 = vmatprep.subr.bf16.mxu0 0
    %3797 = vmatpush2.bf16.msra.mxu0 %v3539
    %3798 = vmatprep.subr.bf16.mxu0 0
    %3799 = vmatpush2.bf16.msra.mxu0 %v3538
    %3800 = vmatprep.subr.bf16.mxu0 0
    %3801 = vmatpush2.bf16.msra.mxu0 %v3537
    %3802 = vmatprep.mubr.bf16.mxu0 %v3089
    %3803 = vmatmul.mubr.bf16.gmra.mxu0 %v3088
    %v3804 = vpop.f32.mrf.mxu0
    %v3805 = vadd.f32 %v3740, %v3804
    %v3806 = vpop.f32.mrf.mxu0
    %v3807 = vpop.f32.mrf.mxu0
    %v3808 = vadd.f32 %v3743, %v3807
    %v3809 = vpop.f32.mrf.mxu0
    %3810 = vmatprep.mubr.bf16.mxu0 %v3097
    %3811 = vmatmul.mubr.bf16.gmra.mxu0 %v3096
    %v3812 = vpop.f32.mrf.mxu0
    %v3813 = vadd.f32 %v3748, %v3812
    %v3814 = vpop.f32.mrf.mxu0
    %v3815 = vpop.f32.mrf.mxu0
    %v3816 = vadd.f32 %v3751, %v3815
    %v3817 = vpop.f32.mrf.mxu0
    %3818 = vmatprep.mubr.bf16.mxu0 %v3105
    %3819 = vmatmul.mubr.bf16.gmra.mxu0 %v3104
    %v3820 = vpop.f32.mrf.mxu0
    %v3821 = vadd.f32 %v3756, %v3820
    %v3822 = vpop.f32.mrf.mxu0
    %v3823 = vpop.f32.mrf.mxu0
    %v3824 = vadd.f32 %v3759, %v3823
    %v3825 = vpop.f32.mrf.mxu0
    %3826 = vmatprep.mubr.bf16.mxu0 %v3113
    %3827 = vmatmul.mubr.bf16.gmra.mxu0 %v3112
    %v3828 = vpop.f32.mrf.mxu0
    %v3829 = vadd.f32 %v3764, %v3828
    %v3830 = vpop.f32.mrf.mxu0
    %v3831 = vpop.f32.mrf.mxu0
    %v3832 = vadd.f32 %v3767, %v3831
    %v3833 = vpop.f32.mrf.mxu0
    %3834 = vdwg.mxu0
    %3835 = vmatprep.subr.bf16.mxu0 0
    %3836 = vmatpush1.bf16.msra.mxu0 %v3552
    %3837 = vmatprep.subr.bf16.mxu0 0
    %3838 = vmatpush1.bf16.msra.mxu0 %v3551
    %3839 = vmatprep.subr.bf16.mxu0 0
    %3840 = vmatpush1.bf16.msra.mxu0 %v3550
    %3841 = vmatprep.subr.bf16.mxu0 0
    %3842 = vmatpush1.bf16.msra.mxu0 %v3549
    %3843 = vmatprep.subr.bf16.mxu0 0
    %3844 = vmatpush1.bf16.msra.mxu0 %v3548
    %3845 = vmatprep.subr.bf16.mxu0 0
    %3846 = vmatpush1.bf16.msra.mxu0 %v3547
    %3847 = vmatprep.subr.bf16.mxu0 0
    %3848 = vmatpush1.bf16.msra.mxu0 %v3546
    %3849 = vmatprep.subr.bf16.mxu0 0
    %3850 = vmatpush1.bf16.msra.mxu0 %v3545
    %3851 = vmatprep.subr.bf16.mxu0 0
    %3852 = vmatpush2.bf16.msra.mxu0 %v3560
    %3853 = vmatprep.subr.bf16.mxu0 0
    %3854 = vmatpush2.bf16.msra.mxu0 %v3559
    %3855 = vmatprep.subr.bf16.mxu0 0
    %3856 = vmatpush2.bf16.msra.mxu0 %v3558
    %3857 = vmatprep.subr.bf16.mxu0 0
    %3858 = vmatpush2.bf16.msra.mxu0 %v3557
    %3859 = vmatprep.subr.bf16.mxu0 0
    %3860 = vmatpush2.bf16.msra.mxu0 %v3556
    %3861 = vmatprep.subr.bf16.mxu0 0
    %3862 = vmatpush2.bf16.msra.mxu0 %v3555
    %3863 = vmatprep.subr.bf16.mxu0 0
    %3864 = vmatpush2.bf16.msra.mxu0 %v3554
    %3865 = vmatprep.subr.bf16.mxu0 0
    %3866 = vmatpush2.bf16.msra.mxu0 %v3553
    %3867 = vmatprep.mubr.bf16.mxu0 %v3091
    %3868 = vmatmul.mubr.bf16.gmra.mxu0 %v3090
    %v3869 = vpop.f32.mrf.mxu0
    %v3870 = vadd.f32 %v3805, %v3869
    %v3871 = vpop.f32.mrf.mxu0
    %v3872 = vpop.f32.mrf.mxu0
    %v3873 = vadd.f32 %v3808, %v3872
    %v3874 = vpop.f32.mrf.mxu0
    %3875 = vmatprep.mubr.bf16.mxu0 %v3099
    %3876 = vmatmul.mubr.bf16.gmra.mxu0 %v3098
    %v3877 = vpop.f32.mrf.mxu0
    %v3878 = vadd.f32 %v3813, %v3877
    %v3879 = vpop.f32.mrf.mxu0
    %v3880 = vpop.f32.mrf.mxu0
    %v3881 = vadd.f32 %v3816, %v3880
    %v3882 = vpop.f32.mrf.mxu0
    %3883 = vmatprep.mubr.bf16.mxu0 %v3107
    %3884 = vmatmul.mubr.bf16.gmra.mxu0 %v3106
    %v3885 = vpop.f32.mrf.mxu0
    %v3886 = vadd.f32 %v3821, %v3885
    %v3887 = vpop.f32.mrf.mxu0
    %v3888 = vpop.f32.mrf.mxu0
    %v3889 = vadd.f32 %v3824, %v3888
    %v3890 = vpop.f32.mrf.mxu0
    %3891 = vmatprep.mubr.bf16.mxu0 %v3115
    %3892 = vmatmul.mubr.bf16.gmra.mxu0 %v3114
    %v3893 = vpop.f32.mrf.mxu0
    %v3894 = vadd.f32 %v3829, %v3893
    %v3895 = vpop.f32.mrf.mxu0
    %v3896 = vpop.f32.mrf.mxu0
    %v3897 = vadd.f32 %v3832, %v3896
    %v3898 = vpop.f32.mrf.mxu0
    %3899 = vdwg.mxu0
    %3900 = vmatprep.subr.bf16.mxu0 0
    %3901 = vmatpush1.bf16.msra.mxu0 %v3568
    %3902 = vmatprep.subr.bf16.mxu0 0
    %3903 = vmatpush1.bf16.msra.mxu0 %v3567
    %3904 = vmatprep.subr.bf16.mxu0 0
    %3905 = vmatpush1.bf16.msra.mxu0 %v3566
    %3906 = vmatprep.subr.bf16.mxu0 0
    %3907 = vmatpush1.bf16.msra.mxu0 %v3565
    %3908 = vmatprep.subr.bf16.mxu0 0
    %3909 = vmatpush1.bf16.msra.mxu0 %v3564
    %3910 = vmatprep.subr.bf16.mxu0 0
    %3911 = vmatpush1.bf16.msra.mxu0 %v3563
    %3912 = vmatprep.subr.bf16.mxu0 0
    %3913 = vmatpush1.bf16.msra.mxu0 %v3562
    %3914 = vmatprep.subr.bf16.mxu0 0
    %3915 = vmatpush1.bf16.msra.mxu0 %v3561
    %3916 = vmatprep.subr.bf16.mxu0 0
    %3917 = vmatpush2.bf16.msra.mxu0 %v3576
    %3918 = vmatprep.subr.bf16.mxu0 0
    %3919 = vmatpush2.bf16.msra.mxu0 %v3575
    %3920 = vmatprep.subr.bf16.mxu0 0
    %3921 = vmatpush2.bf16.msra.mxu0 %v3574
    %3922 = vmatprep.subr.bf16.mxu0 0
    %3923 = vmatpush2.bf16.msra.mxu0 %v3573
    %3924 = vmatprep.subr.bf16.mxu0 0
    %3925 = vmatpush2.bf16.msra.mxu0 %v3572
    %3926 = vmatprep.subr.bf16.mxu0 0
    %3927 = vmatpush2.bf16.msra.mxu0 %v3571
    %3928 = vmatprep.subr.bf16.mxu0 0
    %3929 = vmatpush2.bf16.msra.mxu0 %v3570
    %3930 = vmatprep.subr.bf16.mxu0 0
    %3931 = vmatpush2.bf16.msra.mxu0 %v3569
    %3932 = vmatprep.mubr.bf16.mxu0 %v3093
    %3933 = vmatmul.mubr.bf16.gmra.mxu0 %v3092
    %v3934 = vpop.f32.mrf.mxu0
    %v3935 = vadd.f32 %v3870, %v3934
    %v3936 = vpop.f32.mrf.mxu0
    %v3937 = vpop.f32.mrf.mxu0
    %v3938 = vadd.f32 %v3873, %v3937
    %v3939 = vpop.f32.mrf.mxu0
    %3940 = vmatprep.mubr.bf16.mxu0 %v3101
    %3941 = vmatmul.mubr.bf16.gmra.mxu0 %v3100
    %v3942 = vpop.f32.mrf.mxu0
    %v3943 = vadd.f32 %v3878, %v3942
    %v3944 = vpop.f32.mrf.mxu0
    %v3945 = vpop.f32.mrf.mxu0
    %v3946 = vadd.f32 %v3881, %v3945
    %v3947 = vpop.f32.mrf.mxu0
    %3948 = vmatprep.mubr.bf16.mxu0 %v3109
    %3949 = vmatmul.mubr.bf16.gmra.mxu0 %v3108
    %v3950 = vpop.f32.mrf.mxu0
    %v3951 = vadd.f32 %v3886, %v3950
    %v3952 = vpop.f32.mrf.mxu0
    %v3953 = vpop.f32.mrf.mxu0
    %v3954 = vadd.f32 %v3889, %v3953
    %v3955 = vpop.f32.mrf.mxu0
    %3956 = vmatprep.mubr.bf16.mxu0 %v3117
    %3957 = vmatmul.mubr.bf16.gmra.mxu0 %v3116
    %v3958 = vpop.f32.mrf.mxu0
    %v3959 = vadd.f32 %v3894, %v3958
    %v3960 = vpop.f32.mrf.mxu0
    %v3961 = vpop.f32.mrf.mxu0
    %v3962 = vadd.f32 %v3897, %v3961
    %v3963 = vpop.f32.mrf.mxu0
    %3964 = vdwg.mxu0
    %3965 = vmatprep.subr.bf16.mxu0 0
    %3966 = vmatpush1.bf16.msra.mxu0 %v3584
    %3967 = vmatprep.subr.bf16.mxu0 0
    %3968 = vmatpush1.bf16.msra.mxu0 %v3583
    %3969 = vmatprep.subr.bf16.mxu0 0
    %3970 = vmatpush1.bf16.msra.mxu0 %v3582
    %3971 = vmatprep.subr.bf16.mxu0 0
    %3972 = vmatpush1.bf16.msra.mxu0 %v3581
    %3973 = vmatprep.subr.bf16.mxu0 0
    %3974 = vmatpush1.bf16.msra.mxu0 %v3580
    %3975 = vmatprep.subr.bf16.mxu0 0
    %3976 = vmatpush1.bf16.msra.mxu0 %v3579
    %3977 = vmatprep.subr.bf16.mxu0 0
    %3978 = vmatpush1.bf16.msra.mxu0 %v3578
    %3979 = vmatprep.subr.bf16.mxu0 0
    %3980 = vmatpush1.bf16.msra.mxu0 %v3577
    %3981 = vmatprep.subr.bf16.mxu0 0
    %3982 = vmatpush2.bf16.msra.mxu0 %v3592
    %3983 = vmatprep.subr.bf16.mxu0 0
    %3984 = vmatpush2.bf16.msra.mxu0 %v3591
    %3985 = vmatprep.subr.bf16.mxu0 0
    %3986 = vmatpush2.bf16.msra.mxu0 %v3590
    %3987 = vmatprep.subr.bf16.mxu0 0
    %3988 = vmatpush2.bf16.msra.mxu0 %v3589
    %3989 = vmatprep.subr.bf16.mxu0 0
    %3990 = vmatpush2.bf16.msra.mxu0 %v3588
    %3991 = vmatprep.subr.bf16.mxu0 0
    %3992 = vmatpush2.bf16.msra.mxu0 %v3587
    %3993 = vmatprep.subr.bf16.mxu0 0
    %3994 = vmatpush2.bf16.msra.mxu0 %v3586
    %3995 = vmatprep.subr.bf16.mxu0 0
    %3996 = vmatpush2.bf16.msra.mxu0 %v3585
    %3997 = vmatprep.mubr.bf16.mxu0 %v3095
    %3998 = vmatmul.mubr.bf16.gmra.mxu0 %v3094
    %v3999 = vpop.f32.mrf.mxu0
    %v4000 = vadd.f32 %v3935, %v3999
    %v4001 = vpop.f32.mrf.mxu0
    %v4002 = vpop.f32.mrf.mxu0
    %v4003 = vadd.f32 %v3938, %v4002
    %v4004 = vpop.f32.mrf.mxu0
    %4005 = vmatprep.mubr.bf16.mxu0 %v3103
    %4006 = vmatmul.mubr.bf16.gmra.mxu0 %v3102
    %v4007 = vpop.f32.mrf.mxu0
    %v4008 = vadd.f32 %v3943, %v4007
    %v4009 = vpop.f32.mrf.mxu0
    %v4010 = vpop.f32.mrf.mxu0
    %v4011 = vadd.f32 %v3946, %v4010
    %v4012 = vpop.f32.mrf.mxu0
    %4013 = vmatprep.mubr.bf16.mxu0 %v3111
    %4014 = vmatmul.mubr.bf16.gmra.mxu0 %v3110
    %v4015 = vpop.f32.mrf.mxu0
    %v4016 = vadd.f32 %v3951, %v4015
    %v4017 = vpop.f32.mrf.mxu0
    %v4018 = vpop.f32.mrf.mxu0
    %v4019 = vadd.f32 %v3954, %v4018
    %v4020 = vpop.f32.mrf.mxu0
    %4021 = vmatprep.mubr.bf16.mxu0 %v3119
    %4022 = vmatmul.mubr.bf16.gmra.mxu0 %v3118
    %v4023 = vpop.f32.mrf.mxu0
    %v4024 = vadd.f32 %v3959, %v4023
    %v4025 = vpop.f32.mrf.mxu0
    %v4026 = vpop.f32.mrf.mxu0
    %v4027 = vadd.f32 %v3962, %v4026
    %v4028 = vpop.f32.mrf.mxu0
    %4029 = vdwg.mxu0
    %4030 = vmatprep.subr.bf16.mxu0 0
    %4031 = vmatpush1.bf16.msra.mxu0 %v3600
    %4032 = vmatprep.subr.bf16.mxu0 0
    %4033 = vmatpush1.bf16.msra.mxu0 %v3599
    %4034 = vmatprep.subr.bf16.mxu0 0
    %4035 = vmatpush1.bf16.msra.mxu0 %v3598
    %4036 = vmatprep.subr.bf16.mxu0 0
    %4037 = vmatpush1.bf16.msra.mxu0 %v3597
    %4038 = vmatprep.subr.bf16.mxu0 0
    %4039 = vmatpush1.bf16.msra.mxu0 %v3596
    %4040 = vmatprep.subr.bf16.mxu0 0
    %4041 = vmatpush1.bf16.msra.mxu0 %v3595
    %4042 = vmatprep.subr.bf16.mxu0 0
    %4043 = vmatpush1.bf16.msra.mxu0 %v3594
    %4044 = vmatprep.subr.bf16.mxu0 0
    %4045 = vmatpush1.bf16.msra.mxu0 %v3593
    %4046 = vmatprep.subr.bf16.mxu0 0
    %4047 = vmatpush2.bf16.msra.mxu0 %v3608
    %4048 = vmatprep.subr.bf16.mxu0 0
    %4049 = vmatpush2.bf16.msra.mxu0 %v3607
    %4050 = vmatprep.subr.bf16.mxu0 0
    %4051 = vmatpush2.bf16.msra.mxu0 %v3606
    %4052 = vmatprep.subr.bf16.mxu0 0
    %4053 = vmatpush2.bf16.msra.mxu0 %v3605
    %4054 = vmatprep.subr.bf16.mxu0 0
    %4055 = vmatpush2.bf16.msra.mxu0 %v3604
    %4056 = vmatprep.subr.bf16.mxu0 0
    %4057 = vmatpush2.bf16.msra.mxu0 %v3603
    %4058 = vmatprep.subr.bf16.mxu0 0
    %4059 = vmatpush2.bf16.msra.mxu0 %v3602
    %4060 = vmatprep.subr.bf16.mxu0 0
    %4061 = vmatpush2.bf16.msra.mxu0 %v3601
    %4062 = vmatprep.mubr.bf16.mxu0 %v3097
    %4063 = vmatmul.mubr.bf16.gmra.mxu0 %v3096
    %v4064 = vpop.f32.mrf.mxu0
    %v4065 = vadd.f32 %v4000, %v4064
    %v4066 = vpop.f32.mrf.mxu0
    %v4067 = vpop.f32.mrf.mxu0
    %v4068 = vadd.f32 %v4003, %v4067
    %v4069 = vpop.f32.mrf.mxu0
    %4070 = vmatprep.mubr.bf16.mxu0 %v3105
    %4071 = vmatmul.mubr.bf16.gmra.mxu0 %v3104
    %v4072 = vpop.f32.mrf.mxu0
    %v4073 = vadd.f32 %v4008, %v4072
    %v4074 = vpop.f32.mrf.mxu0
    %v4075 = vpop.f32.mrf.mxu0
    %v4076 = vadd.f32 %v4011, %v4075
    %v4077 = vpop.f32.mrf.mxu0
    %4078 = vmatprep.mubr.bf16.mxu0 %v3113
    %4079 = vmatmul.mubr.bf16.gmra.mxu0 %v3112
    %v4080 = vpop.f32.mrf.mxu0
    %v4081 = vadd.f32 %v4016, %v4080
    %v4082 = vpop.f32.mrf.mxu0
    %v4083 = vpop.f32.mrf.mxu0
    %v4084 = vadd.f32 %v4019, %v4083
    %v4085 = vpop.f32.mrf.mxu0
    %4086 = vmatprep.mubr.bf16.mxu0 %v3121
    %4087 = vmatmul.mubr.bf16.gmra.mxu0 %v3120
    %v4088 = vpop.f32.mrf.mxu0
    %v4089 = vadd.f32 %v4024, %v4088
    %v4090 = vpop.f32.mrf.mxu0
    %v4091 = vpop.f32.mrf.mxu0
    %v4092 = vadd.f32 %v4027, %v4091
    %v4093 = vpop.f32.mrf.mxu0
    %4094 = vdwg.mxu0
    %v4095 = vmax.f32 %v4065, 0.0
    %v4096 = vmax.f32 %v4068, 0.0
    %v4097 = vmax.f32 %v4073, 0.0
    %v4098 = vmax.f32 %v4076, 0.0
    %v4099 = vmax.f32 %v4081, 0.0
    %v4100 = vmax.f32 %v4084, 0.0
    %v4101 = vmax.f32 %v4089, 0.0
    %v4102 = vmax.f32 %v4092, 0.0
    %v4103 = vmax.f32 %v4095, %v4096
    %v4104 = vmax.f32 %v4097, %v4098
    %v4105 = vmax.f32 %v4099, %v4100
    %v4106 = vmax.f32 %v4101, %v4102
    %4108 = vrot.lane.b32.xlu0 %v4104, 32
    %v4109 = vpop.permute.xlu0 %4108
    %4112 = vrot.lane.b32.xlu0 %v4105, 64
    %v4113 = vpop.permute.xlu0 %4112
    %4116 = vrot.lane.b32.xlu0 %v4106, 96
    %v4117 = vpop.permute.xlu0 %4116
    %vm4119 = vcmask 261120
    %v4120 = vsel %vm4119, %v4103, %v4109
    %vm4121 = vcmask 523264
    %v4122 = vsel %vm4121, %v4120, %v4113
    %vm4123 = vcmask 785408
    %v4124 = vsel %vm4123, %v4122, %v4117
    %s4125 = smul.u32 4, 16
    %s4126 = smul.u32 %s4125, 4
    %s4127 = sshll.u32 %s4126, 4
    %4128 = dma.done %s277, %s4127
    %v4129 = vld [vmem:[#allocation4] sm:$0xff]
    %v4130 = vld [vmem:[#allocation4 + $0x8] sm:$0xff]
    %v4131 = vld [vmem:[#allocation4 + $0x10] sm:$0xff]
    %v4132 = vld [vmem:[#allocation4 + $0x18] sm:$0xff]
    %v4133 = vld [vmem:[#allocation4 + $0x20] sm:$0xff]
    %v4134 = vld [vmem:[#allocation4 + $0x28] sm:$0xff]
    %v4135 = vld [vmem:[#allocation4 + $0x30] sm:$0xff]
    %v4136 = vld [vmem:[#allocation4 + $0x38] sm:$0xff]
    %v4137 = vld [vmem:[#allocation4 + $0x40] sm:$0xff]
    %v4138 = vld [vmem:[#allocation4 + $0x48] sm:$0xff]
    %v4139 = vld [vmem:[#allocation4 + $0x50] sm:$0xff]
    %v4140 = vld [vmem:[#allocation4 + $0x58] sm:$0xff]
    %v4141 = vld [vmem:[#allocation4 + $0x60] sm:$0xff]
    %v4142 = vld [vmem:[#allocation4 + $0x68] sm:$0xff]
    %v4143 = vld [vmem:[#allocation4 + $0x70] sm:$0xff]
    %v4144 = vld [vmem:[#allocation4 + $0x78] sm:$0xff]
    %v4145 = vld [vmem:[#allocation4 + $0x80] sm:$0xff]
    %v4146 = vld [vmem:[#allocation4 + $0x88] sm:$0xff]
    %v4147 = vld [vmem:[#allocation4 + $0x90] sm:$0xff]
    %v4148 = vld [vmem:[#allocation4 + $0x98] sm:$0xff]
    %v4149 = vld [vmem:[#allocation4 + $0xa0] sm:$0xff]
    %v4150 = vld [vmem:[#allocation4 + $0xa8] sm:$0xff]
    %v4151 = vld [vmem:[#allocation4 + $0xb0] sm:$0xff]
    %v4152 = vld [vmem:[#allocation4 + $0xb8] sm:$0xff]
    %v4153 = vld [vmem:[#allocation4 + $0xc0] sm:$0xff]
    %v4154 = vld [vmem:[#allocation4 + $0xc8] sm:$0xff]
    %v4155 = vld [vmem:[#allocation4 + $0xd0] sm:$0xff]
    %v4156 = vld [vmem:[#allocation4 + $0xd8] sm:$0xff]
    %v4157 = vld [vmem:[#allocation4 + $0xe0] sm:$0xff]
    %v4158 = vld [vmem:[#allocation4 + $0xe8] sm:$0xff]
    %v4159 = vld [vmem:[#allocation4 + $0xf0] sm:$0xff]
    %v4160 = vld [vmem:[#allocation4 + $0xf8] sm:$0xff]
    %v4161 = vpack.c.bf16 %v4124, %v4124
    %v4162 = vld [vmem:[%s5] sm:$0xf]
    %v4164 = vlaneseq
    %v4165 = vshrl.u32 %v4164, 7
    %v4166 = vsub.s32 0, %v4165
    %v4167 = vrot.slane %v4162, %v4166
    %v4168 = vlaneseq
    %v4169 = vshrl.u32 %v4168, 7
    %v4170 = vsub.s32 1, %v4169
    %v4171 = vrot.slane %v4162, %v4170
    %v4172 = vlaneseq
    %v4173 = vshrl.u32 %v4172, 7
    %v4174 = vsub.s32 2, %v4173
    %v4175 = vrot.slane %v4162, %v4174
    %v4176 = vlaneseq
    %v4177 = vshrl.u32 %v4176, 7
    %v4178 = vsub.s32 3, %v4177
    %v4179 = vrot.slane %v4162, %v4178
    %v4216 = vunpack.c.l.b16 %v4129
    %v4217 = vunpack.c.h.b16 %v4129
    %v4218 = vunpack.c.l.b16 %v4130
    %v4219 = vunpack.c.h.b16 %v4130
    %v4220 = vunpack.c.l.b16 %v4131
    %v4221 = vunpack.c.h.b16 %v4131
    %v4222 = vunpack.c.l.b16 %v4132
    %v4223 = vunpack.c.h.b16 %v4132
    %v4224 = vunpack.c.l.b16 %v4133
    %v4225 = vunpack.c.h.b16 %v4133
    %v4226 = vunpack.c.l.b16 %v4134
    %v4227 = vunpack.c.h.b16 %v4134
    %v4228 = vunpack.c.l.b16 %v4135
    %v4229 = vunpack.c.h.b16 %v4135
    %v4230 = vunpack.c.l.b16 %v4136
    %v4231 = vunpack.c.h.b16 %v4136
    %v4232 = vunpack.c.l.b16 %v4137
    %v4233 = vunpack.c.h.b16 %v4137
    %v4234 = vunpack.c.l.b16 %v4138
    %v4235 = vunpack.c.h.b16 %v4138
    %v4236 = vunpack.c.l.b16 %v4139
    %v4237 = vunpack.c.h.b16 %v4139
    %v4238 = vunpack.c.l.b16 %v4140
    %v4239 = vunpack.c.h.b16 %v4140
    %v4240 = vunpack.c.l.b16 %v4141
    %v4241 = vunpack.c.h.b16 %v4141
    %v4242 = vunpack.c.l.b16 %v4142
    %v4243 = vunpack.c.h.b16 %v4142
    %v4244 = vunpack.c.l.b16 %v4143
    %v4245 = vunpack.c.h.b16 %v4143
    %v4246 = vunpack.c.l.b16 %v4144
    %v4247 = vunpack.c.h.b16 %v4144
    %v4248 = vunpack.c.l.b16 %v4145
    %v4249 = vunpack.c.h.b16 %v4145
    %v4250 = vunpack.c.l.b16 %v4146
    %v4251 = vunpack.c.h.b16 %v4146
    %v4252 = vunpack.c.l.b16 %v4147
    %v4253 = vunpack.c.h.b16 %v4147
    %v4254 = vunpack.c.l.b16 %v4148
    %v4255 = vunpack.c.h.b16 %v4148
    %v4256 = vunpack.c.l.b16 %v4149
    %v4257 = vunpack.c.h.b16 %v4149
    %v4258 = vunpack.c.l.b16 %v4150
    %v4259 = vunpack.c.h.b16 %v4150
    %v4260 = vunpack.c.l.b16 %v4151
    %v4261 = vunpack.c.h.b16 %v4151
    %v4262 = vunpack.c.l.b16 %v4152
    %v4263 = vunpack.c.h.b16 %v4152
    %v4264 = vunpack.c.l.b16 %v4153
    %v4265 = vunpack.c.h.b16 %v4153
    %v4266 = vunpack.c.l.b16 %v4154
    %v4267 = vunpack.c.h.b16 %v4154
    %v4268 = vunpack.c.l.b16 %v4155
    %v4269 = vunpack.c.h.b16 %v4155
    %v4270 = vunpack.c.l.b16 %v4156
    %v4271 = vunpack.c.h.b16 %v4156
    %v4272 = vunpack.c.l.b16 %v4157
    %v4273 = vunpack.c.h.b16 %v4157
    %v4274 = vunpack.c.l.b16 %v4158
    %v4275 = vunpack.c.h.b16 %v4158
    %v4276 = vunpack.c.l.b16 %v4159
    %v4277 = vunpack.c.h.b16 %v4159
    %v4278 = vunpack.c.l.b16 %v4160
    %v4279 = vunpack.c.h.b16 %v4160
    %v4280 = vpack.c.b16 %v4220, %v4216
    %v4281 = vpack.c.b16 %v4221, %v4217
    %v4282 = vpack.c.b16 %v4222, %v4218
    %v4283 = vpack.c.b16 %v4223, %v4219
    %v4284 = vpack.c.b16 %v4228, %v4224
    %v4285 = vpack.c.b16 %v4229, %v4225
    %v4286 = vpack.c.b16 %v4230, %v4226
    %v4287 = vpack.c.b16 %v4231, %v4227
    %v4288 = vpack.c.b16 %v4236, %v4232
    %v4289 = vpack.c.b16 %v4237, %v4233
    %v4290 = vpack.c.b16 %v4238, %v4234
    %v4291 = vpack.c.b16 %v4239, %v4235
    %v4292 = vpack.c.b16 %v4244, %v4240
    %v4293 = vpack.c.b16 %v4245, %v4241
    %v4294 = vpack.c.b16 %v4246, %v4242
    %v4295 = vpack.c.b16 %v4247, %v4243
    %v4296 = vpack.c.b16 %v4252, %v4248
    %v4297 = vpack.c.b16 %v4253, %v4249
    %v4298 = vpack.c.b16 %v4254, %v4250
    %v4299 = vpack.c.b16 %v4255, %v4251
    %v4300 = vpack.c.b16 %v4260, %v4256
    %v4301 = vpack.c.b16 %v4261, %v4257
    %v4302 = vpack.c.b16 %v4262, %v4258
    %v4303 = vpack.c.b16 %v4263, %v4259
    %v4304 = vpack.c.b16 %v4268, %v4264
    %v4305 = vpack.c.b16 %v4269, %v4265
    %v4306 = vpack.c.b16 %v4270, %v4266
    %v4307 = vpack.c.b16 %v4271, %v4267
    %v4308 = vpack.c.b16 %v4276, %v4272
    %v4309 = vpack.c.b16 %v4277, %v4273
    %v4310 = vpack.c.b16 %v4278, %v4274
    %v4311 = vpack.c.b16 %v4279, %v4275
    %4344 = vmatprep.subr.bf16.mxu0 %v4309
    %4345 = vmatpush1.bf16.msra.mxu0 %v4308
    %4346 = vmatprep.subr.bf16.mxu0 %v4305
    %4347 = vmatpush1.bf16.msra.mxu0 %v4304
    %4348 = vmatprep.subr.bf16.mxu0 %v4301
    %4349 = vmatpush1.bf16.msra.mxu0 %v4300
    %4350 = vmatprep.subr.bf16.mxu0 %v4297
    %4351 = vmatpush1.bf16.msra.mxu0 %v4296
    %4352 = vmatprep.subr.bf16.mxu0 %v4293
    %4353 = vmatpush1.bf16.msra.mxu0 %v4292
    %4354 = vmatprep.subr.bf16.mxu0 %v4289
    %4355 = vmatpush1.bf16.msra.mxu0 %v4288
    %4356 = vmatprep.subr.bf16.mxu0 %v4285
    %4357 = vmatpush1.bf16.msra.mxu0 %v4284
    %4358 = vmatprep.subr.bf16.mxu0 %v4281
    %4359 = vmatpush1.bf16.msra.mxu0 %v4280
    %4360 = vmatprep.subr.bf16.mxu0 0
    %4361 = vmatpush2.bf16.msra.mxu0 0
    %4362 = vmatprep.subr.bf16.mxu0 0
    %4363 = vmatpush2.bf16.msra.mxu0 0
    %4364 = vmatprep.subr.bf16.mxu0 0
    %4365 = vmatpush2.bf16.msra.mxu0 0
    %4366 = vmatprep.subr.bf16.mxu0 0
    %4367 = vmatpush2.bf16.msra.mxu0 0
    %4368 = vmatprep.subr.bf16.mxu0 0
    %4369 = vmatpush2.bf16.msra.mxu0 0
    %4370 = vmatprep.subr.bf16.mxu0 0
    %4371 = vmatpush2.bf16.msra.mxu0 0
    %4372 = vmatprep.subr.bf16.mxu0 0
    %4373 = vmatpush2.bf16.msra.mxu0 0
    %4374 = vmatprep.subr.bf16.mxu0 0
    %4375 = vmatpush2.bf16.msra.mxu0 0
    %4376 = vmatprep.mubr.bf16.mxu0 0
    %4377 = vmatmul.mubr.bf16.gmra.mxu0 %v4161
    %v4378 = vpop.f32.mrf.mxu0
    %v4379 = vadd.f32 %v4167, %v4378
    %v4380 = vpop.f32.mrf.mxu0
    %v4381 = vadd.f32 %v4171, %v4380
    %v4382 = vpop.f32.mrf.mxu0
    %v4383 = vpop.f32.mrf.mxu0
    %4384 = vdwg.mxu0
    %4385 = vmatprep.subr.bf16.mxu0 %v4311
    %4386 = vmatpush1.bf16.msra.mxu0 %v4310
    %4387 = vmatprep.subr.bf16.mxu0 %v4307
    %4388 = vmatpush1.bf16.msra.mxu0 %v4306
    %4389 = vmatprep.subr.bf16.mxu0 %v4303
    %4390 = vmatpush1.bf16.msra.mxu0 %v4302
    %4391 = vmatprep.subr.bf16.mxu0 %v4299
    %4392 = vmatpush1.bf16.msra.mxu0 %v4298
    %4393 = vmatprep.subr.bf16.mxu0 %v4295
    %4394 = vmatpush1.bf16.msra.mxu0 %v4294
    %4395 = vmatprep.subr.bf16.mxu0 %v4291
    %4396 = vmatpush1.bf16.msra.mxu0 %v4290
    %4397 = vmatprep.subr.bf16.mxu0 %v4287
    %4398 = vmatpush1.bf16.msra.mxu0 %v4286
    %4399 = vmatprep.subr.bf16.mxu0 %v4283
    %4400 = vmatpush1.bf16.msra.mxu0 %v4282
    %4401 = vmatprep.subr.bf16.mxu0 0
    %4402 = vmatpush2.bf16.msra.mxu0 0
    %4403 = vmatprep.subr.bf16.mxu0 0
    %4404 = vmatpush2.bf16.msra.mxu0 0
    %4405 = vmatprep.subr.bf16.mxu0 0
    %4406 = vmatpush2.bf16.msra.mxu0 0
    %4407 = vmatprep.subr.bf16.mxu0 0
    %4408 = vmatpush2.bf16.msra.mxu0 0
    %4409 = vmatprep.subr.bf16.mxu0 0
    %4410 = vmatpush2.bf16.msra.mxu0 0
    %4411 = vmatprep.subr.bf16.mxu0 0
    %4412 = vmatpush2.bf16.msra.mxu0 0
    %4413 = vmatprep.subr.bf16.mxu0 0
    %4414 = vmatpush2.bf16.msra.mxu0 0
    %4415 = vmatprep.subr.bf16.mxu0 0
    %4416 = vmatpush2.bf16.msra.mxu0 0
    %4417 = vmatprep.mubr.bf16.mxu0 0
    %4418 = vmatmul.mubr.bf16.gmra.mxu0 %v4161
    %v4419 = vpop.f32.mrf.mxu0
    %v4420 = vadd.f32 %v4175, %v4419
    %v4421 = vpop.f32.mrf.mxu0
    %v4422 = vadd.f32 %v4179, %v4421
    %v4423 = vpop.f32.mrf.mxu0
    %v4424 = vpop.f32.mrf.mxu0
    %4425 = vdwg.mxu0
    %v4426 = vmax.f32 %v4379, 0.0
    %v4427 = vmax.f32 %v4381, 0.0
    %v4428 = vmax.f32 %v4420, 0.0
    %v4429 = vmax.f32 %v4422, 0.0
    %s4430 = smul.u32 4, 64
    %s4431 = smul.u32 %s4430, 1
    %s4432 = sshll.u32 %s4431, 4
    %4433 = dma.done %s383, %s4432
    %v4434 = vld [vmem:[#allocation5] sm:$0xf]
    %v4435 = vld [vmem:[#allocation5 + $0x4] sm:$0xf]
    %v4436 = vld [vmem:[#allocation5 + $0x8] sm:$0xf]
    %v4437 = vld [vmem:[#allocation5 + $0xc] sm:$0xf]
    %v4438 = vld [vmem:[#allocation5 + $0x10] sm:$0xf]
    %v4439 = vld [vmem:[#allocation5 + $0x14] sm:$0xf]
    %v4440 = vld [vmem:[#allocation5 + $0x18] sm:$0xf]
    %v4441 = vld [vmem:[#allocation5 + $0x1c] sm:$0xf]
    %v4442 = vld [vmem:[#allocation5 + $0x20] sm:$0xf]
    %v4443 = vld [vmem:[#allocation5 + $0x24] sm:$0xf]
    %v4444 = vld [vmem:[#allocation5 + $0x28] sm:$0xf]
    %v4445 = vld [vmem:[#allocation5 + $0x2c] sm:$0xf]
    %v4446 = vld [vmem:[#allocation5 + $0x30] sm:$0xf]
    %v4447 = vld [vmem:[#allocation5 + $0x34] sm:$0xf]
    %v4448 = vld [vmem:[#allocation5 + $0x38] sm:$0xf]
    %v4449 = vld [vmem:[#allocation5 + $0x3c] sm:$0xf]
    %v4450 = vld [vmem:[#allocation5 + $0x40] sm:$0xf]
    %v4451 = vld [vmem:[#allocation5 + $0x44] sm:$0xf]
    %v4452 = vld [vmem:[#allocation5 + $0x48] sm:$0xf]
    %v4453 = vld [vmem:[#allocation5 + $0x4c] sm:$0xf]
    %v4454 = vld [vmem:[#allocation5 + $0x50] sm:$0xf]
    %v4455 = vld [vmem:[#allocation5 + $0x54] sm:$0xf]
    %v4456 = vld [vmem:[#allocation5 + $0x58] sm:$0xf]
    %v4457 = vld [vmem:[#allocation5 + $0x5c] sm:$0xf]
    %v4458 = vld [vmem:[#allocation5 + $0x60] sm:$0xf]
    %v4459 = vld [vmem:[#allocation5 + $0x64] sm:$0xf]
    %v4460 = vld [vmem:[#allocation5 + $0x68] sm:$0xf]
    %v4461 = vld [vmem:[#allocation5 + $0x6c] sm:$0xf]
    %v4462 = vld [vmem:[#allocation5 + $0x70] sm:$0xf]
    %v4463 = vld [vmem:[#allocation5 + $0x74] sm:$0xf]
    %v4464 = vld [vmem:[#allocation5 + $0x78] sm:$0xf]
    %v4465 = vld [vmem:[#allocation5 + $0x7c] sm:$0xf]
    %v4466 = vld [vmem:[#allocation5 + $0x80] sm:$0xf]
    %v4467 = vld [vmem:[#allocation5 + $0x84] sm:$0xf]
    %v4468 = vld [vmem:[#allocation5 + $0x88] sm:$0xf]
    %v4469 = vld [vmem:[#allocation5 + $0x8c] sm:$0xf]
    %v4470 = vld [vmem:[#allocation5 + $0x90] sm:$0xf]
    %v4471 = vld [vmem:[#allocation5 + $0x94] sm:$0xf]
    %v4472 = vld [vmem:[#allocation5 + $0x98] sm:$0xf]
    %v4473 = vld [vmem:[#allocation5 + $0x9c] sm:$0xf]
    %v4474 = vld [vmem:[#allocation5 + $0xa0] sm:$0xf]
    %v4475 = vld [vmem:[#allocation5 + $0xa4] sm:$0xf]
    %v4476 = vld [vmem:[#allocation5 + $0xa8] sm:$0xf]
    %v4477 = vld [vmem:[#allocation5 + $0xac] sm:$0xf]
    %v4478 = vld [vmem:[#allocation5 + $0xb0] sm:$0xf]
    %v4479 = vld [vmem:[#allocation5 + $0xb4] sm:$0xf]
    %v4480 = vld [vmem:[#allocation5 + $0xb8] sm:$0xf]
    %v4481 = vld [vmem:[#allocation5 + $0xbc] sm:$0xf]
    %v4482 = vld [vmem:[#allocation5 + $0xc0] sm:$0xf]
    %v4483 = vld [vmem:[#allocation5 + $0xc4] sm:$0xf]
    %v4484 = vld [vmem:[#allocation5 + $0xc8] sm:$0xf]
    %v4485 = vld [vmem:[#allocation5 + $0xcc] sm:$0xf]
    %v4486 = vld [vmem:[#allocation5 + $0xd0] sm:$0xf]
    %v4487 = vld [vmem:[#allocation5 + $0xd4] sm:$0xf]
    %v4488 = vld [vmem:[#allocation5 + $0xd8] sm:$0xf]
    %v4489 = vld [vmem:[#allocation5 + $0xdc] sm:$0xf]
    %v4490 = vld [vmem:[#allocation5 + $0xe0] sm:$0xf]
    %v4491 = vld [vmem:[#allocation5 + $0xe4] sm:$0xf]
    %v4492 = vld [vmem:[#allocation5 + $0xe8] sm:$0xf]
    %v4493 = vld [vmem:[#allocation5 + $0xec] sm:$0xf]
    %v4494 = vld [vmem:[#allocation5 + $0xf0] sm:$0xf]
    %v4495 = vld [vmem:[#allocation5 + $0xf4] sm:$0xf]
    %v4496 = vld [vmem:[#allocation5 + $0xf8] sm:$0xf]
    %v4497 = vld [vmem:[#allocation5 + $0xfc] sm:$0xf]
    %v4498 = vpack.c.bf16 %v4426, %v4426
    %v4499 = vpack.c.bf16 %v4427, %v4427
    %v4500 = vpack.c.bf16 %v4428, %v4428
    %v4501 = vpack.c.bf16 %v4429, %v4429
    %v4502 = vld [vmem:[%s6] sm:$0x1]
    %v4504 = vlaneseq
    %v4505 = vshrl.u32 %v4504, 7
    %v4506 = vsub.s32 0, %v4505
    %v4507 = vrot.slane %v4502, %v4506
    %v4573 = vunpack.c.l.b16 %v4434
    %v4574 = vunpack.c.l.b16 %v4435
    %v4575 = vunpack.c.l.b16 %v4436
    %v4576 = vunpack.c.l.b16 %v4437
    %v4577 = vunpack.c.l.b16 %v4438
    %v4578 = vunpack.c.l.b16 %v4439
    %v4579 = vunpack.c.l.b16 %v4440
    %v4580 = vunpack.c.l.b16 %v4441
    %v4581 = vunpack.c.l.b16 %v4442
    %v4582 = vunpack.c.l.b16 %v4443
    %v4583 = vunpack.c.l.b16 %v4444
    %v4584 = vunpack.c.l.b16 %v4445
    %v4585 = vunpack.c.l.b16 %v4446
    %v4586 = vunpack.c.l.b16 %v4447
    %v4587 = vunpack.c.l.b16 %v4448
    %v4588 = vunpack.c.l.b16 %v4449
    %v4589 = vunpack.c.l.b16 %v4450
    %v4590 = vunpack.c.l.b16 %v4451
    %v4591 = vunpack.c.l.b16 %v4452
    %v4592 = vunpack.c.l.b16 %v4453
    %v4593 = vunpack.c.l.b16 %v4454
    %v4594 = vunpack.c.l.b16 %v4455
    %v4595 = vunpack.c.l.b16 %v4456
    %v4596 = vunpack.c.l.b16 %v4457
    %v4597 = vunpack.c.l.b16 %v4458
    %v4598 = vunpack.c.l.b16 %v4459
    %v4599 = vunpack.c.l.b16 %v4460
    %v4600 = vunpack.c.l.b16 %v4461
    %v4601 = vunpack.c.l.b16 %v4462
    %v4602 = vunpack.c.l.b16 %v4463
    %v4603 = vunpack.c.l.b16 %v4464
    %v4604 = vunpack.c.l.b16 %v4465
    %v4605 = vunpack.c.l.b16 %v4466
    %v4606 = vunpack.c.l.b16 %v4467
    %v4607 = vunpack.c.l.b16 %v4468
    %v4608 = vunpack.c.l.b16 %v4469
    %v4609 = vunpack.c.l.b16 %v4470
    %v4610 = vunpack.c.l.b16 %v4471
    %v4611 = vunpack.c.l.b16 %v4472
    %v4612 = vunpack.c.l.b16 %v4473
    %v4613 = vunpack.c.l.b16 %v4474
    %v4614 = vunpack.c.l.b16 %v4475
    %v4615 = vunpack.c.l.b16 %v4476
    %v4616 = vunpack.c.l.b16 %v4477
    %v4617 = vunpack.c.l.b16 %v4478
    %v4618 = vunpack.c.l.b16 %v4479
    %v4619 = vunpack.c.l.b16 %v4480
    %v4620 = vunpack.c.l.b16 %v4481
    %v4621 = vunpack.c.l.b16 %v4482
    %v4622 = vunpack.c.l.b16 %v4483
    %v4623 = vunpack.c.l.b16 %v4484
    %v4624 = vunpack.c.l.b16 %v4485
    %v4625 = vunpack.c.l.b16 %v4486
    %v4626 = vunpack.c.l.b16 %v4487
    %v4627 = vunpack.c.l.b16 %v4488
    %v4628 = vunpack.c.l.b16 %v4489
    %v4629 = vunpack.c.l.b16 %v4490
    %v4630 = vunpack.c.l.b16 %v4491
    %v4631 = vunpack.c.l.b16 %v4492
    %v4632 = vunpack.c.l.b16 %v4493
    %v4633 = vunpack.c.l.b16 %v4494
    %v4634 = vunpack.c.l.b16 %v4495
    %v4635 = vunpack.c.l.b16 %v4496
    %v4636 = vunpack.c.l.b16 %v4497
    %v4637 = vpack.c.b16 %v4574, %v4573
    %v4638 = vpack.c.b16 %v4576, %v4575
    %v4639 = vpack.c.b16 %v4578, %v4577
    %v4640 = vpack.c.b16 %v4580, %v4579
    %v4641 = vpack.c.b16 %v4582, %v4581
    %v4642 = vpack.c.b16 %v4584, %v4583
    %v4643 = vpack.c.b16 %v4586, %v4585
    %v4644 = vpack.c.b16 %v4588, %v4587
    %v4645 = vpack.c.b16 %v4590, %v4589
    %v4646 = vpack.c.b16 %v4592, %v4591
    %v4647 = vpack.c.b16 %v4594, %v4593
    %v4648 = vpack.c.b16 %v4596, %v4595
    %v4649 = vpack.c.b16 %v4598, %v4597
    %v4650 = vpack.c.b16 %v4600, %v4599
    %v4651 = vpack.c.b16 %v4602, %v4601
    %v4652 = vpack.c.b16 %v4604, %v4603
    %v4653 = vpack.c.b16 %v4606, %v4605
    %v4654 = vpack.c.b16 %v4608, %v4607
    %v4655 = vpack.c.b16 %v4610, %v4609
    %v4656 = vpack.c.b16 %v4612, %v4611
    %v4657 = vpack.c.b16 %v4614, %v4613
    %v4658 = vpack.c.b16 %v4616, %v4615
    %v4659 = vpack.c.b16 %v4618, %v4617
    %v4660 = vpack.c.b16 %v4620, %v4619
    %v4661 = vpack.c.b16 %v4622, %v4621
    %v4662 = vpack.c.b16 %v4624, %v4623
    %v4663 = vpack.c.b16 %v4626, %v4625
    %v4664 = vpack.c.b16 %v4628, %v4627
    %v4665 = vpack.c.b16 %v4630, %v4629
    %v4666 = vpack.c.b16 %v4632, %v4631
    %v4667 = vpack.c.b16 %v4634, %v4633
    %v4668 = vpack.c.b16 %v4636, %v4635
    %4701 = vmatprep.subr.bf16.mxu0 0
    %4702 = vmatpush1.bf16.msra.mxu0 %v4644
    %4703 = vmatprep.subr.bf16.mxu0 0
    %4704 = vmatpush1.bf16.msra.mxu0 %v4643
    %4705 = vmatprep.subr.bf16.mxu0 0
    %4706 = vmatpush1.bf16.msra.mxu0 %v4642
    %4707 = vmatprep.subr.bf16.mxu0 0
    %4708 = vmatpush1.bf16.msra.mxu0 %v4641
    %4709 = vmatprep.subr.bf16.mxu0 0
    %4710 = vmatpush1.bf16.msra.mxu0 %v4640
    %4711 = vmatprep.subr.bf16.mxu0 0
    %4712 = vmatpush1.bf16.msra.mxu0 %v4639
    %4713 = vmatprep.subr.bf16.mxu0 0
    %4714 = vmatpush1.bf16.msra.mxu0 %v4638
    %4715 = vmatprep.subr.bf16.mxu0 0
    %4716 = vmatpush1.bf16.msra.mxu0 %v4637
    %4717 = vmatprep.subr.bf16.mxu0 0
    %4718 = vmatpush2.bf16.msra.mxu0 %v4652
    %4719 = vmatprep.subr.bf16.mxu0 0
    %4720 = vmatpush2.bf16.msra.mxu0 %v4651
    %4721 = vmatprep.subr.bf16.mxu0 0
    %4722 = vmatpush2.bf16.msra.mxu0 %v4650
    %4723 = vmatprep.subr.bf16.mxu0 0
    %4724 = vmatpush2.bf16.msra.mxu0 %v4649
    %4725 = vmatprep.subr.bf16.mxu0 0
    %4726 = vmatpush2.bf16.msra.mxu0 %v4648
    %4727 = vmatprep.subr.bf16.mxu0 0
    %4728 = vmatpush2.bf16.msra.mxu0 %v4647
    %4729 = vmatprep.subr.bf16.mxu0 0
    %4730 = vmatpush2.bf16.msra.mxu0 %v4646
    %4731 = vmatprep.subr.bf16.mxu0 0
    %4732 = vmatpush2.bf16.msra.mxu0 %v4645
    %4733 = vmatprep.mubr.bf16.mxu0 %v4499
    %4734 = vmatmul.mubr.bf16.gmra.mxu0 %v4498
    %v4735 = vpop.f32.mrf.mxu0
    %v4736 = vadd.f32 %v4507, %v4735
    %v4737 = vpop.f32.mrf.mxu0
    %v4738 = vpop.f32.mrf.mxu0
    %v4739 = vpop.f32.mrf.mxu0
    %4740 = vdwg.mxu0
    %4741 = vmatprep.subr.bf16.mxu0 0
    %4742 = vmatpush1.bf16.msra.mxu0 %v4660
    %4743 = vmatprep.subr.bf16.mxu0 0
    %4744 = vmatpush1.bf16.msra.mxu0 %v4659
    %4745 = vmatprep.subr.bf16.mxu0 0
    %4746 = vmatpush1.bf16.msra.mxu0 %v4658
    %4747 = vmatprep.subr.bf16.mxu0 0
    %4748 = vmatpush1.bf16.msra.mxu0 %v4657
    %4749 = vmatprep.subr.bf16.mxu0 0
    %4750 = vmatpush1.bf16.msra.mxu0 %v4656
    %4751 = vmatprep.subr.bf16.mxu0 0
    %4752 = vmatpush1.bf16.msra.mxu0 %v4655
    %4753 = vmatprep.subr.bf16.mxu0 0
    %4754 = vmatpush1.bf16.msra.mxu0 %v4654
    %4755 = vmatprep.subr.bf16.mxu0 0
    %4756 = vmatpush1.bf16.msra.mxu0 %v4653
    %4757 = vmatprep.subr.bf16.mxu0 0
    %4758 = vmatpush2.bf16.msra.mxu0 %v4668
    %4759 = vmatprep.subr.bf16.mxu0 0
    %4760 = vmatpush2.bf16.msra.mxu0 %v4667
    %4761 = vmatprep.subr.bf16.mxu0 0
    %4762 = vmatpush2.bf16.msra.mxu0 %v4666
    %4763 = vmatprep.subr.bf16.mxu0 0
    %4764 = vmatpush2.bf16.msra.mxu0 %v4665
    %4765 = vmatprep.subr.bf16.mxu0 0
    %4766 = vmatpush2.bf16.msra.mxu0 %v4664
    %4767 = vmatprep.subr.bf16.mxu0 0
    %4768 = vmatpush2.bf16.msra.mxu0 %v4663
    %4769 = vmatprep.subr.bf16.mxu0 0
    %4770 = vmatpush2.bf16.msra.mxu0 %v4662
    %4771 = vmatprep.subr.bf16.mxu0 0
    %4772 = vmatpush2.bf16.msra.mxu0 %v4661
    %4773 = vmatprep.mubr.bf16.mxu0 %v4501
    %4774 = vmatmul.mubr.bf16.gmra.mxu0 %v4500
    %v4775 = vpop.f32.mrf.mxu0
    %v4776 = vadd.f32 %v4736, %v4775
    %v4777 = vpop.f32.mrf.mxu0
    %v4778 = vpop.f32.mrf.mxu0
    %v4779 = vpop.f32.mrf.mxu0
    %4780 = vdwg.mxu0
    %4781 = vst [vmem:[#allocation7] sm:$0xff] %v4776
    // Predicated region
    $region136: #{tpu_custom_call.1} parent=1 // pred_check
      _
    $region137: #{tpu_custom_call.1} parent=1 // pred_check_branch
      %4783 = sbr.rel (0) target = $region139
    $region138: #{tpu_custom_call.1} parent=1 // pred_region
      %s4785 = ssub.s32 128, 128
      %4786 = vsyncadd [#allocation8], %s4785
      %s4788 = sshll.u32 [#allocation7], 4
      %s4789 = int_to_ptr.vmem [resolvable:$true] %s4788
      %4791 = dma.vmem_to_hbm [thread:$0]  %s4789, 128, %s11, [#allocation8]
    $region139: #{tpu_custom_call.1} parent=1 // pred_fallthru
      _
    // Predicated region
    $region140: #{tpu_custom_call.1} parent=1 // pred_check
      _
    $region141: #{tpu_custom_call.1} parent=1 // pred_check_branch
      %4793 = sbr.rel (0) target = $region143
    $region142: #{tpu_custom_call.1} parent=1 // pred_region
      %4794 = dma.done [#allocation8], 128
    $region143: #{tpu_custom_call.1} parent=1 // pred_fallthru
      _
    %4795 = vsyncpa [#allocation8], 1
  %4796 = vsyncmov [#allocation6]
  %s4797 = vpop.sfrf %4796
  %p4798 = scmp.eq.s32.totalorder %s4797, 0
  %p4799 = pneg %p4798
  %4801 = shalt.err (%p4799)
  %s4802 = scalar_lea.sflag [#allocation6], 1
  %4803 = vsyncmov %s4802
  %s4804 = vpop.sfrf %4803
  %p4805 = scmp.eq.s32.totalorder %s4804, 0
  %p4806 = pneg %p4805
  %4808 = shalt.err (%p4806)
  %s4809 = scalar_lea.sflag [#allocation6], 2
  %4810 = vsyncmov %s4809
  %s4811 = vpop.sfrf %4810
  %p4812 = scmp.eq.s32.totalorder %s4811, 0
  %p4813 = pneg %p4812
  %4815 = shalt.err (%p4813)
  %s4816 = scalar_lea.sflag [#allocation6], 3
  %4817 = vsyncmov %s4816
  %s4818 = vpop.sfrf %4817
  %p4819 = scmp.eq.s32.totalorder %s4818, 0
  %p4820 = pneg %p4819
  %4822 = shalt.err (%p4820)

</llo_original>
